<compile_context>
chip_gen: v7x
topology: tpu7x:2x2x1
jax: 0.10.0
libtpu: 0.0.40
codegen_flags: <defaults>
</compile_context>

<pallas_src>
import math
import functools

import jax
import jax.numpy as jnp
from jax.experimental import pallas as pl
from jax.experimental.pallas import tpu as pltpu


# ------------------------------- the kernel -------------------------------

def resa_kernel(n_heads, bt, seq_len,
                x_ref,
                wqkv_ref, bqkv_ref,
                wm_ref, bm_ref,
                a1w_ref, a1b_ref, a2w_ref, a2b_ref,
                tap0_w_ref, tapm1_w_ref, tapp1_w_ref, tapm2_w_ref, tapp2_w_ref,
                c1b_ref, c3b_ref, c5b_ref,
                fc3w_ref, fc5w_ref, fc1w_ref, fcb_ref,
                ln_g_ref, ln_b_ref,
                o_ref):
    bf16 = jnp.bfloat16
    f32 = jnp.float32

    x = x_ref[...]                           # (N, H) f32, N = bt * seq_len
    N, H = x.shape
    L = seq_len
    hd = H // n_heads
    scale = 1.0 / math.sqrt(hd)

    x_bf = x.astype(bf16)

    # Fused QKV projection: one (N, 3H) matmul; cast to bf16 right after the bias add.
    qkv = (jnp.dot(x_bf, wqkv_ref[...], preferred_element_type=f32)
           + bqkv_ref[...]).astype(bf16)
    q = qkv[:, 0 * H:1 * H]
    k = qkv[:, 1 * H:2 * H]
    v = qkv[:, 2 * H:3 * H]

    # Per-batch-element multi-head attention.  Head outputs are concatenated into a
    # single register value (lane-dense, no VMEM scratch round trip).
    atted_parts = []
    mean_parts = []
    for b in range(bt):
        rs = slice(b * L, (b + 1) * L)
        qb, kb, vb = q[rs], k[rs], v[rs]
        head_outs = []
        for h in range(n_heads):
            cs = slice(h * hd, (h + 1) * hd)
            # q @ k^T without materializing a transpose.
            s = jax.lax.dot_general(qb[:, cs], kb[:, cs],
                                    (((1,), (1,)), ((), ())),
                                    preferred_element_type=f32) * scale
            s = s - jnp.max(s, axis=-1, keepdims=True)
            p = jnp.exp(s)                                     # one exp per score
            p = p * pl.reciprocal(jnp.sum(p, axis=-1, keepdims=True), approx=True)
            head_outs.append(jnp.dot(p.astype(bf16), vb[:, cs],
                                     preferred_element_type=f32))
        atted_b = (head_outs[0] if n_heads == 1
                   else jnp.concatenate(head_outs, axis=-1))    # (L, H) f32
        atted_parts.append(atted_b)
        mean_parts.append(jnp.mean(atted_b, axis=0, keepdims=True))
    atted = atted_parts[0] if bt == 1 else jnp.concatenate(atted_parts, axis=0)  # (N,H)
    mean_l = mean_parts[0] if bt == 1 else jnp.concatenate(mean_parts, axis=0)   # (bt,H)
    atted_bf = atted.astype(bf16)

    # ---- Multi-scale conv branch: 5 grouped tap matmuls. ----
    # shifted(d)[row] = atted[row + d] within the same batch element, else 0.
    pos1 = jax.lax.broadcasted_iota(jnp.int32, (L, 1), 0)
    pos = pos1 if bt == 1 else jnp.concatenate([pos1] * bt, axis=0)   # (N, 1)

    def shifted(d):
        r = pltpu.roll(atted, shift=(-d) % N, axis=0)    # XLU sublane rotate (f32)
        valid = (pos < (L - d)) if d > 0 else (pos >= (-d))
        return jnp.where(valid, r, 0.0).astype(bf16)

    # tap 0 feeds conv3, conv5 and conv1 at once: RHS = [c3w[1] | c5w[2] | c1w[0]].
    t0 = jnp.dot(atted_bf, tap0_w_ref[...], preferred_element_type=f32)    # (N, 3H)
    acc3 = t0[:, 0 * H:1 * H]
    acc5 = t0[:, 1 * H:2 * H]
    ms1 = jax.nn.relu(t0[:, 2 * H:3 * H] + c1b_ref[...])
    # taps -1 / +1 feed conv3 and conv5: RHS = [c3w[0]|c5w[1]] and [c3w[2]|c5w[3]].
    tm1 = jnp.dot(shifted(-1), tapm1_w_ref[...], preferred_element_type=f32)  # (N, 2H)
    tp1 = jnp.dot(shifted(1), tapp1_w_ref[...], preferred_element_type=f32)   # (N, 2H)
    acc3 = acc3 + tm1[:, :H] + tp1[:, :H]
    acc5 = acc5 + tm1[:, H:] + tp1[:, H:]
    # taps -2 / +2 feed conv5 only.
    acc5 = acc5 + jnp.dot(shifted(-2), tapm2_w_ref[...], preferred_element_type=f32)
    acc5 = acc5 + jnp.dot(shifted(2), tapp2_w_ref[...], preferred_element_type=f32)
    ms3 = jax.nn.relu(acc3 + c3b_ref[...])
    ms5 = jax.nn.relu(acc5 + c5b_ref[...])

    # fc (1x1 conv over [ms3, ms5, ms1]) without materializing an (N, 3H) concat.
    ms_acc = jnp.dot(ms3.astype(bf16), fc3w_ref[...], preferred_element_type=f32)
    ms_acc += jnp.dot(ms5.astype(bf16), fc5w_ref[...], preferred_element_type=f32)
    ms_acc += jnp.dot(ms1.astype(bf16), fc1w_ref[...], preferred_element_type=f32)
    ms_out = jax.nn.relu(ms_acc + fcb_ref[...])

    # Dynamic gating: alpha = sigmoid(MLP(mean over each element's sequence)), f32 math.
    h1 = jax.nn.relu(jnp.dot(mean_l.astype(bf16), a1w_ref[...],
                             preferred_element_type=f32) + a1b_ref[...])
    alpha = jax.nn.sigmoid(jnp.dot(h1.astype(bf16), a2w_ref[...],
                                   preferred_element_type=f32) + a2b_ref[...])  # (bt, 1)
    if bt == 1:
        alpha_rows = jnp.broadcast_to(alpha, (L, 1))
    else:
        alpha_rows = jnp.concatenate(
            [jnp.broadcast_to(alpha[b:b + 1, :], (L, 1)) for b in range(bt)], axis=0)

    gated = alpha_rows * ms_out + (1.0 - alpha_rows) * atted
    merged = jnp.dot(gated.astype(bf16), wm_ref[...],
                     preferred_element_type=f32) + bm_ref[...]

    # RESA: residual = x; y = LayerNorm(x + merged); out = y + residual  (all f32).
    y = x + merged
    mu = jnp.mean(y, axis=-1, keepdims=True)
    var = jnp.mean((y - mu) ** 2, axis=-1, keepdims=True)
    ln = (y - mu) * jax.lax.rsqrt(var + 1e-5) * ln_g_ref[...] + ln_b_ref[...]
    o_ref[...] = (ln + x).astype(o_ref.dtype)


# ------------------------------- wrapper -----------------------------------

def _pick_block_batch(B, L):
    """Pack several batch elements per grid step to fill the MXU M dimension."""
    target_rows = max(256, L)
    candidates = [bt for bt in range(1, B + 1)
                  if B % bt == 0 and (bt == B or (bt * L) % 8 == 0)]
    fitting = [bt for bt in candidates if bt * L <= target_rows]
    if fitting:
        return max(fitting)
    return min(candidates)


def resa_forward(x, params, n_heads):
    B, L, H = x.shape
    bf16, f32 = jnp.bfloat16, jnp.float32
    p = params

    Bt = _pick_block_batch(B, L)
    N = Bt * L
    G = B // Bt

    # Fused / grouped matmul weights in bf16; biases / LN params stay f32.
    wqkv = jnp.concatenate([p["wq"], p["wk"], p["wv"]], axis=1).astype(bf16)   # (H,3H)
    bqkv = jnp.concatenate([p["bq"], p["bk"], p["bv"]], axis=1).astype(f32)    # (1,3H)
    tap0_w = jnp.concatenate([p["c3w"][1], p["c5w"][2], p["c1w"][0]],
                             axis=1).astype(bf16)                               # (H,3H)
    tapm1_w = jnp.concatenate([p["c3w"][0], p["c5w"][1]], axis=1).astype(bf16)  # (H,2H)
    tapp1_w = jnp.concatenate([p["c3w"][2], p["c5w"][3]], axis=1).astype(bf16)  # (H,2H)
    tapm2_w = p["c5w"][0].astype(bf16)
    tapp2_w = p["c5w"][4].astype(bf16)

    weights = [
        wqkv, bqkv,
        p["wm"].astype(bf16), p["bm"].astype(f32),
        p["a1w"].astype(bf16), p["a1b"].astype(f32),
        p["a2w"].astype(bf16), p["a2b"].astype(f32),
        tap0_w, tapm1_w, tapp1_w, tapm2_w, tapp2_w,
        p["c1b"].astype(f32), p["c3b"].astype(f32), p["c5b"].astype(f32),
        p["fcw"][0 * H:1 * H].astype(bf16),   # multiplies ms3
        p["fcw"][1 * H:2 * H].astype(bf16),   # multiplies ms5
        p["fcw"][2 * H:3 * H].astype(bf16),   # multiplies ms1
        p["fcb"].astype(f32),
        p["ln_g"].astype(f32), p["ln_b"].astype(f32),
    ]

    x2 = x.reshape(B * L, H)

    weight_bytes = sum(int(w.size) * w.dtype.itemsize for w in weights)
    blk_bytes = N * H * 4
    inter_bytes = 28 * blk_bytes + Bt * n_heads * L * L * 4

    # Generation-aware VMEM budget (~0.8x physical capacity as the ceiling).
    try:
        info = pltpu.get_tpu_info()
        vmem_cap = int(getattr(info, "vmem_capacity_bytes", 0) or 0)
        if vmem_cap <= 0:
            vmem_cap = 64 << 20
    except Exception:
        vmem_cap = 64 << 20

    def build(single_buffer_weights):
        w_buf = 1 if single_buffer_weights else 2
        est = w_buf * weight_bytes + 4 * blk_bytes + inter_bytes
        vmem_limit = int(min(max(est, 4 << 20), int(0.8 * vmem_cap)))

        def wspec(a):
            n = a.ndim
            idx = lambda i, n=n: (0,) * n
            if single_buffer_weights:
                # Weights are grid-invariant: a single pipeline buffer suffices.
                return pl.BlockSpec(a.shape, idx, pipeline_mode=pl.Buffered(1))
            return pl.BlockSpec(a.shape, idx)

        return pl.pallas_call(
            functools.partial(resa_kernel, n_heads, Bt, L),
            out_shape=jax.ShapeDtypeStruct((B * L, H), x.dtype),
            grid=(G,),
            in_specs=[pl.BlockSpec((N, H), lambda i: (i, 0))]
                     + [wspec(w) for w in weights],
            out_specs=pl.BlockSpec((N, H), lambda i: (i, 0)),
            compiler_params=pltpu.CompilerParams(
                dimension_semantics=("parallel",),
                vmem_limit_bytes=vmem_limit),
        )

    try:
        out2 = build(True)(x2, *weights)
    except Exception:
        # pipeline_mode / Buffered(1) unsupported on this build: fall back to the
        # default double-buffered constant weights (correctness identical).
        out2 = build(False)(x2, *weights)

    return out2.reshape(B, L, H)


# --------------------------- parameter init ---------------------------------

def init_params(key, H, n_heads):
    ks = jax.random.split(key, 24)
    s = 0.1
    f32 = jnp.float32
    p = {
        "wq": jax.random.normal(ks[0], (H, H), f32) * s,
        "bq": jax.random.normal(ks[1], (1, H), f32) * s,
        "wk": jax.random.normal(ks[2], (H, H), f32) * s,
        "bk": jax.random.normal(ks[3], (1, H), f32) * s,
        "wv": jax.random.normal(ks[4], (H, H), f32) * s,
        "bv": jax.random.normal(ks[5], (1, H), f32) * s,
        "wm": jax.random.normal(ks[6], (H, H), f32) * s,
        "bm": jax.random.normal(ks[7], (1, H), f32) * s,
        "a1w": jax.random.normal(ks[8], (H, H // 2), f32) * s,
        "a1b": jax.random.normal(ks[9], (1, H // 2), f32) * s,
        "a2w": jax.random.normal(ks[10], (H // 2, 1), f32) * s,
        "a2b": jax.random.normal(ks[11], (1, 1), f32) * s,
        # conv weights stored as per-tap matmul matrices: (k, C_in, C_out)
        "c1w": jax.random.normal(ks[12], (1, H, H), f32) * s,
        "c1b": jax.random.normal(ks[13], (1, H), f32) * s,
        "c3w": jax.random.normal(ks[14], (3, H, H), f32) * s,
        "c3b": jax.random.normal(ks[15], (1, H), f32) * s,
        "c5w": jax.random.normal(ks[16], (5, H, H), f32) * s,
        "c5b": jax.random.normal(ks[17], (1, H), f32) * s,
        "fcw": jax.random.normal(ks[18], (3 * H, H), f32) * s,
        "fcb": jax.random.normal(ks[19], (1, H), f32) * s,
        "ln_g": jnp.ones((1, H), f32),
        "ln_b": jnp.zeros((1, H), f32),
    }
    return p


# ------------------------- pure-JAX reference --------------------------------

def resa_reference(x, p, n_heads):
    B, L, H = x.shape
    hd = H // n_heads
    q = x @ p["wq"] + p["bq"]
    k = x @ p["wk"] + p["bk"]
    v = x @ p["wv"] + p["bv"]
    qh = q.reshape(B, L, n_heads, hd).transpose(0, 2, 1, 3)
    kh = k.reshape(B, L, n_heads, hd).transpose(0, 2, 1, 3)
    vh = v.reshape(B, L, n_heads, hd).transpose(0, 2, 1, 3)
    s = jnp.einsum("bhqd,bhkd->bhqk", qh, kh) / math.sqrt(hd)
    att = jax.nn.softmax(s, axis=-1)
    atted = jnp.einsum("bhqk,bhkd->bhqd", att, vh).transpose(0, 2, 1, 3).reshape(B, L, H)

    def conv1d(xlc, w_taps, b, pad):
        w = jnp.transpose(w_taps, (2, 1, 0))          # (Cout, Cin, k) torch layout
        xn = jnp.transpose(xlc, (0, 2, 1))            # (B, Cin, L)
        y = jax.lax.conv_general_dilated(
            xn, w, window_strides=(1,), padding=[(pad, pad)],
            dimension_numbers=("NCH", "OIH", "NCH"))
        y = y + b.reshape(1, -1, 1)
        return jnp.transpose(y, (0, 2, 1))

    ms1 = jax.nn.relu(conv1d(atted, p["c1w"], p["c1b"], 0))
    ms3 = jax.nn.relu(conv1d(atted, p["c3w"], p["c3b"], 1))
    ms5 = jax.nn.relu(conv1d(atted, p["c5w"], p["c5b"], 2))
    cat = jnp.concatenate([ms3, ms5, ms1], axis=-1)
    ms_out = jax.nn.relu(cat @ p["fcw"] + p["fcb"])

    mean_l = atted.mean(axis=1)                        # (B, H)
    h1 = jax.nn.relu(mean_l @ p["a1w"] + p["a1b"])
    alpha = jax.nn.sigmoid(h1 @ p["a2w"] + p["a2b"]).reshape(B, 1, 1)

    gated = alpha * ms_out + (1.0 - alpha) * atted
    merged = gated @ p["wm"] + p["bm"]

    y = x + merged
    mu = y.mean(axis=-1, keepdims=True)
    var = ((y - mu) ** 2).mean(axis=-1, keepdims=True)
    ln = (y - mu) * jax.lax.rsqrt(var + 1e-5) * p["ln_g"] + p["ln_b"]
    return ln + x


# --------------------------------- main --------------------------------------

if __name__ == "__main__":
    B, L, H, NH = 2, 8, 32, 4
    key = jax.random.PRNGKey(0)
    kx, kp = jax.random.split(key)
    x = jax.random.normal(kx, (B, L, H), jnp.float32)
    params = init_params(kp, H, NH)

    out = jax.block_until_ready(resa_forward(x, params, NH))
    ref = jax.block_until_ready(resa_reference(x, params, NH))

    assert out.shape == (B, L, H)
    # Kernel runs matmuls with bf16 operands (f32 accumulation) and an approx
    # reciprocal in the softmax; the reference is pure f32, hence the tolerance.
    err = float(jnp.max(jnp.abs(out - ref)))
    assert jnp.allclose(out, ref, rtol=3e-2, atol=3e-2), err
    print("KERNEL_OK")
</pallas_src>

<mosaic_0001>
module attributes {stable_mosaic.version = 11 : i64} {
  func.func @resa_kernel(%arg0: i32, %arg1: memref<16x32xf32, #tpu.memory_space<vmem>>, %arg2: memref<32x96xbf16, #tpu.memory_space<vmem>>, %arg3: memref<1x96xf32, #tpu.memory_space<vmem>>, %arg4: memref<32x32xbf16, #tpu.memory_space<vmem>>, %arg5: memref<1x32xf32, #tpu.memory_space<vmem>>, %arg6: memref<32x16xbf16, #tpu.memory_space<vmem>>, %arg7: memref<1x16xf32, #tpu.memory_space<vmem>>, %arg8: memref<16x1xbf16, #tpu.memory_space<vmem>>, %arg9: memref<1x1xf32, #tpu.memory_space<vmem>>, %arg10: memref<32x96xbf16, #tpu.memory_space<vmem>>, %arg11: memref<32x64xbf16, #tpu.memory_space<vmem>>, %arg12: memref<32x64xbf16, #tpu.memory_space<vmem>>, %arg13: memref<32x32xbf16, #tpu.memory_space<vmem>>, %arg14: memref<32x32xbf16, #tpu.memory_space<vmem>>, %arg15: memref<1x32xf32, #tpu.memory_space<vmem>>, %arg16: memref<1x32xf32, #tpu.memory_space<vmem>>, %arg17: memref<1x32xf32, #tpu.memory_space<vmem>>, %arg18: memref<32x32xbf16, #tpu.memory_space<vmem>>, %arg19: memref<32x32xbf16, #tpu.memory_space<vmem>>, %arg20: memref<32x32xbf16, #tpu.memory_space<vmem>>, %arg21: memref<1x32xf32, #tpu.memory_space<vmem>>, %arg22: memref<1x32xf32, #tpu.memory_space<vmem>>, %arg23: memref<1x32xf32, #tpu.memory_space<vmem>>, %arg24: memref<16x32xf32, #tpu.memory_space<vmem>>) attributes {dimension_semantics = [#tpu.dimension_semantics<parallel>], iteration_bounds = array<i64: 1>, scalar_prefetch = 0 : i64, scratch_operands = 0 : i64, tpu.core_type = #tpu.core_type<tc>, window_params = [{transform_indices = @transform_0, window_bounds = array<i64: 16, 32>}, {pipeline_mode = #tpu.pipeline_mode<synchronous>, transform_indices = @transform_1, window_bounds = array<i64: 32, 96>}, {pipeline_mode = #tpu.pipeline_mode<synchronous>, transform_indices = @transform_2, window_bounds = array<i64: 1, 96>}, {pipeline_mode = #tpu.pipeline_mode<synchronous>, transform_indices = @transform_3, window_bounds = array<i64: 32, 32>}, {pipeline_mode = #tpu.pipeline_mode<synchronous>, transform_indices = @transform_4, window_bounds = array<i64: 1, 32>}, {pipeline_mode = #tpu.pipeline_mode<synchronous>, transform_indices = @transform_5, window_bounds = array<i64: 32, 16>}, {pipeline_mode = #tpu.pipeline_mode<synchronous>, transform_indices = @transform_6, window_bounds = array<i64: 1, 16>}, {pipeline_mode = #tpu.pipeline_mode<synchronous>, transform_indices = @transform_7, window_bounds = array<i64: 16, 1>}, {pipeline_mode = #tpu.pipeline_mode<synchronous>, transform_indices = @transform_8, window_bounds = array<i64: 1, 1>}, {pipeline_mode = #tpu.pipeline_mode<synchronous>, transform_indices = @transform_9, window_bounds = array<i64: 32, 96>}, {pipeline_mode = #tpu.pipeline_mode<synchronous>, transform_indices = @transform_10, window_bounds = array<i64: 32, 64>}, {pipeline_mode = #tpu.pipeline_mode<synchronous>, transform_indices = @transform_11, window_bounds = array<i64: 32, 64>}, {pipeline_mode = #tpu.pipeline_mode<synchronous>, transform_indices = @transform_12, window_bounds = array<i64: 32, 32>}, {pipeline_mode = #tpu.pipeline_mode<synchronous>, transform_indices = @transform_13, window_bounds = array<i64: 32, 32>}, {pipeline_mode = #tpu.pipeline_mode<synchronous>, transform_indices = @transform_14, window_bounds = array<i64: 1, 32>}, {pipeline_mode = #tpu.pipeline_mode<synchronous>, transform_indices = @transform_15, window_bounds = array<i64: 1, 32>}, {pipeline_mode = #tpu.pipeline_mode<synchronous>, transform_indices = @transform_16, window_bounds = array<i64: 1, 32>}, {pipeline_mode = #tpu.pipeline_mode<synchronous>, transform_indices = @transform_17, window_bounds = array<i64: 32, 32>}, {pipeline_mode = #tpu.pipeline_mode<synchronous>, transform_indices = @transform_18, window_bounds = array<i64: 32, 32>}, {pipeline_mode = #tpu.pipeline_mode<synchronous>, transform_indices = @transform_19, window_bounds = array<i64: 32, 32>}, {pipeline_mode = #tpu.pipeline_mode<synchronous>, transform_indices = @transform_20, window_bounds = array<i64: 1, 32>}, {pipeline_mode = #tpu.pipeline_mode<synchronous>, transform_indices = @transform_21, window_bounds = array<i64: 1, 32>}, {pipeline_mode = #tpu.pipeline_mode<synchronous>, transform_indices = @transform_22, window_bounds = array<i64: 1, 32>}, {transform_indices = @transform_23, window_bounds = array<i64: 16, 32>}]} {
    %c0 = arith.constant 0 : index
    %c0_0 = arith.constant 0 : index
    %0 = vector.load %arg1[%c0, %c0_0] : memref<16x32xf32, #tpu.memory_space<vmem>>, vector<16x32xf32>
    %1 = arith.truncf %0 : vector<16x32xf32> to vector<16x32xbf16>
    %c0_1 = arith.constant 0 : index
    %c0_2 = arith.constant 0 : index
    %2 = vector.load %arg2[%c0_1, %c0_2] : memref<32x96xbf16, #tpu.memory_space<vmem>>, vector<32x96xbf16>
    %cst = arith.constant dense<0.000000e+00> : vector<16x96xf32>
    %3 = tpu.matmul %1, %2, %cst {dimension_numbers = #tpu.dot_dimension_numbers<[1], [0], [0], [1], [0, 0, 1, 1], [], []>} : vector<16x32xbf16>, vector<32x96xbf16>, vector<16x96xf32> -> vector<16x96xf32>
    %c0_3 = arith.constant 0 : index
    %c0_4 = arith.constant 0 : index
    %4 = vector.load %arg3[%c0_3, %c0_4] : memref<1x96xf32, #tpu.memory_space<vmem>>, vector<1x96xf32>
    %5 = vector.broadcast %4 : vector<1x96xf32> to vector<16x96xf32>
    %6 = arith.addf %3, %5 : vector<16x96xf32>
    %7 = arith.truncf %6 : vector<16x96xf32> to vector<16x96xbf16>
    %8 = vector.extract_strided_slice %7 {offsets = [0, 0], sizes = [16, 32], strides = [1, 1]} : vector<16x96xbf16> to vector<16x32xbf16>
    %9 = vector.extract_strided_slice %7 {offsets = [0, 32], sizes = [16, 32], strides = [1, 1]} : vector<16x96xbf16> to vector<16x32xbf16>
    %10 = vector.extract_strided_slice %7 {offsets = [0, 64], sizes = [16, 32], strides = [1, 1]} : vector<16x96xbf16> to vector<16x32xbf16>
    %11 = vector.extract_strided_slice %8 {offsets = [0, 0], sizes = [8, 32], strides = [1, 1]} : vector<16x32xbf16> to vector<8x32xbf16>
    %12 = vector.extract_strided_slice %9 {offsets = [0, 0], sizes = [8, 32], strides = [1, 1]} : vector<16x32xbf16> to vector<8x32xbf16>
    %13 = vector.extract_strided_slice %10 {offsets = [0, 0], sizes = [8, 32], strides = [1, 1]} : vector<16x32xbf16> to vector<8x32xbf16>
    %14 = vector.extract_strided_slice %11 {offsets = [0, 0], sizes = [8, 8], strides = [1, 1]} : vector<8x32xbf16> to vector<8x8xbf16>
    %15 = vector.extract_strided_slice %12 {offsets = [0, 0], sizes = [8, 8], strides = [1, 1]} : vector<8x32xbf16> to vector<8x8xbf16>
    %cst_5 = arith.constant dense<0.000000e+00> : vector<8x8xf32>
    %16 = tpu.matmul %14, %15, %cst_5 {dimension_numbers = #tpu.dot_dimension_numbers<[1], [1], [0], [0], [0, 0, 1, 0], [], []>} : vector<8x8xbf16>, vector<8x8xbf16>, vector<8x8xf32> -> vector<8x8xf32>
    %cst_6 = arith.constant 0.353553385 : f32
    %17 = vector.broadcast %cst_6 : f32 to vector<8x8xf32>
    %18 = arith.mulf %16, %17 : vector<8x8xf32>
    %cst_7 = arith.constant dense<0xFF800000> : vector<8xf32>
    %19 = vector.multi_reduction <maximumf>, %18, %cst_7 [1] : vector<8x8xf32> to vector<8xf32>
    %20 = vector.shape_cast %19 : vector<8xf32> to vector<8x1xf32>
    %21 = vector.broadcast %20 : vector<8x1xf32> to vector<8x8xf32>
    %22 = arith.subf %18, %21 : vector<8x8xf32>
    %23 = math.exp %22 : vector<8x8xf32>
    %cst_8 = arith.constant dense<0.000000e+00> : vector<8xf32>
    %24 = vector.multi_reduction <add>, %23, %cst_8 [1] : vector<8x8xf32> to vector<8xf32>
    %25 = vector.shape_cast %24 : vector<8xf32> to vector<8x1xf32>
    %26 = tpu.reciprocal %25 {approx = true} : vector<8x1xf32> -> vector<8x1xf32>
    %27 = vector.broadcast %26 : vector<8x1xf32> to vector<8x8xf32>
    %28 = arith.mulf %23, %27 : vector<8x8xf32>
    %29 = arith.truncf %28 : vector<8x8xf32> to vector<8x8xbf16>
    %30 = vector.extract_strided_slice %13 {offsets = [0, 0], sizes = [8, 8], strides = [1, 1]} : vector<8x32xbf16> to vector<8x8xbf16>
    %cst_9 = arith.constant dense<0.000000e+00> : vector<8x8xf32>
    %31 = tpu.matmul %29, %30, %cst_9 {dimension_numbers = #tpu.dot_dimension_numbers<[1], [0], [0], [1], [0, 0, 1, 1], [], []>} : vector<8x8xbf16>, vector<8x8xbf16>, vector<8x8xf32> -> vector<8x8xf32>
    %32 = vector.extract_strided_slice %11 {offsets = [0, 8], sizes = [8, 8], strides = [1, 1]} : vector<8x32xbf16> to vector<8x8xbf16>
    %33 = vector.extract_strided_slice %12 {offsets = [0, 8], sizes = [8, 8], strides = [1, 1]} : vector<8x32xbf16> to vector<8x8xbf16>
    %cst_10 = arith.constant dense<0.000000e+00> : vector<8x8xf32>
    %34 = tpu.matmul %32, %33, %cst_10 {dimension_numbers = #tpu.dot_dimension_numbers<[1], [1], [0], [0], [0, 0, 1, 0], [], []>} : vector<8x8xbf16>, vector<8x8xbf16>, vector<8x8xf32> -> vector<8x8xf32>
    %cst_11 = arith.constant 0.353553385 : f32
    %35 = vector.broadcast %cst_11 : f32 to vector<8x8xf32>
    %36 = arith.mulf %34, %35 : vector<8x8xf32>
    %cst_12 = arith.constant dense<0xFF800000> : vector<8xf32>
    %37 = vector.multi_reduction <maximumf>, %36, %cst_12 [1] : vector<8x8xf32> to vector<8xf32>
    %38 = vector.shape_cast %37 : vector<8xf32> to vector<8x1xf32>
    %39 = vector.broadcast %38 : vector<8x1xf32> to vector<8x8xf32>
    %40 = arith.subf %36, %39 : vector<8x8xf32>
    %41 = math.exp %40 : vector<8x8xf32>
    %cst_13 = arith.constant dense<0.000000e+00> : vector<8xf32>
    %42 = vector.multi_reduction <add>, %41, %cst_13 [1] : vector<8x8xf32> to vector<8xf32>
    %43 = vector.shape_cast %42 : vector<8xf32> to vector<8x1xf32>
    %44 = tpu.reciprocal %43 {approx = true} : vector<8x1xf32> -> vector<8x1xf32>
    %45 = vector.broadcast %44 : vector<8x1xf32> to vector<8x8xf32>
    %46 = arith.mulf %41, %45 : vector<8x8xf32>
    %47 = arith.truncf %46 : vector<8x8xf32> to vector<8x8xbf16>
    %48 = vector.extract_strided_slice %13 {offsets = [0, 8], sizes = [8, 8], strides = [1, 1]} : vector<8x32xbf16> to vector<8x8xbf16>
    %cst_14 = arith.constant dense<0.000000e+00> : vector<8x8xf32>
    %49 = tpu.matmul %47, %48, %cst_14 {dimension_numbers = #tpu.dot_dimension_numbers<[1], [0], [0], [1], [0, 0, 1, 1], [], []>} : vector<8x8xbf16>, vector<8x8xbf16>, vector<8x8xf32> -> vector<8x8xf32>
    %50 = vector.extract_strided_slice %11 {offsets = [0, 16], sizes = [8, 8], strides = [1, 1]} : vector<8x32xbf16> to vector<8x8xbf16>
    %51 = vector.extract_strided_slice %12 {offsets = [0, 16], sizes = [8, 8], strides = [1, 1]} : vector<8x32xbf16> to vector<8x8xbf16>
    %cst_15 = arith.constant dense<0.000000e+00> : vector<8x8xf32>
    %52 = tpu.matmul %50, %51, %cst_15 {dimension_numbers = #tpu.dot_dimension_numbers<[1], [1], [0], [0], [0, 0, 1, 0], [], []>} : vector<8x8xbf16>, vector<8x8xbf16>, vector<8x8xf32> -> vector<8x8xf32>
    %cst_16 = arith.constant 0.353553385 : f32
    %53 = vector.broadcast %cst_16 : f32 to vector<8x8xf32>
    %54 = arith.mulf %52, %53 : vector<8x8xf32>
    %cst_17 = arith.constant dense<0xFF800000> : vector<8xf32>
    %55 = vector.multi_reduction <maximumf>, %54, %cst_17 [1] : vector<8x8xf32> to vector<8xf32>
    %56 = vector.shape_cast %55 : vector<8xf32> to vector<8x1xf32>
    %57 = vector.broadcast %56 : vector<8x1xf32> to vector<8x8xf32>
    %58 = arith.subf %54, %57 : vector<8x8xf32>
    %59 = math.exp %58 : vector<8x8xf32>
    %cst_18 = arith.constant dense<0.000000e+00> : vector<8xf32>
    %60 = vector.multi_reduction <add>, %59, %cst_18 [1] : vector<8x8xf32> to vector<8xf32>
    %61 = vector.shape_cast %60 : vector<8xf32> to vector<8x1xf32>
    %62 = tpu.reciprocal %61 {approx = true} : vector<8x1xf32> -> vector<8x1xf32>
    %63 = vector.broadcast %62 : vector<8x1xf32> to vector<8x8xf32>
    %64 = arith.mulf %59, %63 : vector<8x8xf32>
    %65 = arith.truncf %64 : vector<8x8xf32> to vector<8x8xbf16>
    %66 = vector.extract_strided_slice %13 {offsets = [0, 16], sizes = [8, 8], strides = [1, 1]} : vector<8x32xbf16> to vector<8x8xbf16>
    %cst_19 = arith.constant dense<0.000000e+00> : vector<8x8xf32>
    %67 = tpu.matmul %65, %66, %cst_19 {dimension_numbers = #tpu.dot_dimension_numbers<[1], [0], [0], [1], [0, 0, 1, 1], [], []>} : vector<8x8xbf16>, vector<8x8xbf16>, vector<8x8xf32> -> vector<8x8xf32>
    %68 = vector.extract_strided_slice %11 {offsets = [0, 24], sizes = [8, 8], strides = [1, 1]} : vector<8x32xbf16> to vector<8x8xbf16>
    %69 = vector.extract_strided_slice %12 {offsets = [0, 24], sizes = [8, 8], strides = [1, 1]} : vector<8x32xbf16> to vector<8x8xbf16>
    %cst_20 = arith.constant dense<0.000000e+00> : vector<8x8xf32>
    %70 = tpu.matmul %68, %69, %cst_20 {dimension_numbers = #tpu.dot_dimension_numbers<[1], [1], [0], [0], [0, 0, 1, 0], [], []>} : vector<8x8xbf16>, vector<8x8xbf16>, vector<8x8xf32> -> vector<8x8xf32>
    %cst_21 = arith.constant 0.353553385 : f32
    %71 = vector.broadcast %cst_21 : f32 to vector<8x8xf32>
    %72 = arith.mulf %70, %71 : vector<8x8xf32>
    %cst_22 = arith.constant dense<0xFF800000> : vector<8xf32>
    %73 = vector.multi_reduction <maximumf>, %72, %cst_22 [1] : vector<8x8xf32> to vector<8xf32>
    %74 = vector.shape_cast %73 : vector<8xf32> to vector<8x1xf32>
    %75 = vector.broadcast %74 : vector<8x1xf32> to vector<8x8xf32>
    %76 = arith.subf %72, %75 : vector<8x8xf32>
    %77 = math.exp %76 : vector<8x8xf32>
    %cst_23 = arith.constant dense<0.000000e+00> : vector<8xf32>
    %78 = vector.multi_reduction <add>, %77, %cst_23 [1] : vector<8x8xf32> to vector<8xf32>
    %79 = vector.shape_cast %78 : vector<8xf32> to vector<8x1xf32>
    %80 = tpu.reciprocal %79 {approx = true} : vector<8x1xf32> -> vector<8x1xf32>
    %81 = vector.broadcast %80 : vector<8x1xf32> to vector<8x8xf32>
    %82 = arith.mulf %77, %81 : vector<8x8xf32>
    %83 = arith.truncf %82 : vector<8x8xf32> to vector<8x8xbf16>
    %84 = vector.extract_strided_slice %13 {offsets = [0, 24], sizes = [8, 8], strides = [1, 1]} : vector<8x32xbf16> to vector<8x8xbf16>
    %cst_24 = arith.constant dense<0.000000e+00> : vector<8x8xf32>
    %85 = tpu.matmul %83, %84, %cst_24 {dimension_numbers = #tpu.dot_dimension_numbers<[1], [0], [0], [1], [0, 0, 1, 1], [], []>} : vector<8x8xbf16>, vector<8x8xbf16>, vector<8x8xf32> -> vector<8x8xf32>
    %86 = tpu.concatenate %31, %49, %67, %85 in 1 : vector<8x8xf32>, vector<8x8xf32>, vector<8x8xf32>, vector<8x8xf32> -> vector<8x32xf32>
    %cst_25 = arith.constant dense<0.000000e+00> : vector<32xf32>
    %87 = vector.multi_reduction <add>, %86, %cst_25 [0] : vector<8x32xf32> to vector<32xf32>
    %88 = vector.shape_cast %87 : vector<32xf32> to vector<1x32xf32>
    %cst_26 = arith.constant 8.000000e+00 : f32
    %89 = vector.broadcast %cst_26 : f32 to vector<1x32xf32>
    %90 = arith.divf %88, %89 : vector<1x32xf32>
    %91 = vector.extract_strided_slice %8 {offsets = [8, 0], sizes = [8, 32], strides = [1, 1]} : vector<16x32xbf16> to vector<8x32xbf16>
    %92 = vector.extract_strided_slice %9 {offsets = [8, 0], sizes = [8, 32], strides = [1, 1]} : vector<16x32xbf16> to vector<8x32xbf16>
    %93 = vector.extract_strided_slice %10 {offsets = [8, 0], sizes = [8, 32], strides = [1, 1]} : vector<16x32xbf16> to vector<8x32xbf16>
    %94 = vector.extract_strided_slice %91 {offsets = [0, 0], sizes = [8, 8], strides = [1, 1]} : vector<8x32xbf16> to vector<8x8xbf16>
    %95 = vector.extract_strided_slice %92 {offsets = [0, 0], sizes = [8, 8], strides = [1, 1]} : vector<8x32xbf16> to vector<8x8xbf16>
    %cst_27 = arith.constant dense<0.000000e+00> : vector<8x8xf32>
    %96 = tpu.matmul %94, %95, %cst_27 {dimension_numbers = #tpu.dot_dimension_numbers<[1], [1], [0], [0], [0, 0, 1, 0], [], []>} : vector<8x8xbf16>, vector<8x8xbf16>, vector<8x8xf32> -> vector<8x8xf32>
    %cst_28 = arith.constant 0.353553385 : f32
    %97 = vector.broadcast %cst_28 : f32 to vector<8x8xf32>
    %98 = arith.mulf %96, %97 : vector<8x8xf32>
    %cst_29 = arith.constant dense<0xFF800000> : vector<8xf32>
    %99 = vector.multi_reduction <maximumf>, %98, %cst_29 [1] : vector<8x8xf32> to vector<8xf32>
    %100 = vector.shape_cast %99 : vector<8xf32> to vector<8x1xf32>
    %101 = vector.broadcast %100 : vector<8x1xf32> to vector<8x8xf32>
    %102 = arith.subf %98, %101 : vector<8x8xf32>
    %103 = math.exp %102 : vector<8x8xf32>
    %cst_30 = arith.constant dense<0.000000e+00> : vector<8xf32>
    %104 = vector.multi_reduction <add>, %103, %cst_30 [1] : vector<8x8xf32> to vector<8xf32>
    %105 = vector.shape_cast %104 : vector<8xf32> to vector<8x1xf32>
    %106 = tpu.reciprocal %105 {approx = true} : vector<8x1xf32> -> vector<8x1xf32>
    %107 = vector.broadcast %106 : vector<8x1xf32> to vector<8x8xf32>
    %108 = arith.mulf %103, %107 : vector<8x8xf32>
    %109 = arith.truncf %108 : vector<8x8xf32> to vector<8x8xbf16>
    %110 = vector.extract_strided_slice %93 {offsets = [0, 0], sizes = [8, 8], strides = [1, 1]} : vector<8x32xbf16> to vector<8x8xbf16>
    %cst_31 = arith.constant dense<0.000000e+00> : vector<8x8xf32>
    %111 = tpu.matmul %109, %110, %cst_31 {dimension_numbers = #tpu.dot_dimension_numbers<[1], [0], [0], [1], [0, 0, 1, 1], [], []>} : vector<8x8xbf16>, vector<8x8xbf16>, vector<8x8xf32> -> vector<8x8xf32>
    %112 = vector.extract_strided_slice %91 {offsets = [0, 8], sizes = [8, 8], strides = [1, 1]} : vector<8x32xbf16> to vector<8x8xbf16>
    %113 = vector.extract_strided_slice %92 {offsets = [0, 8], sizes = [8, 8], strides = [1, 1]} : vector<8x32xbf16> to vector<8x8xbf16>
    %cst_32 = arith.constant dense<0.000000e+00> : vector<8x8xf32>
    %114 = tpu.matmul %112, %113, %cst_32 {dimension_numbers = #tpu.dot_dimension_numbers<[1], [1], [0], [0], [0, 0, 1, 0], [], []>} : vector<8x8xbf16>, vector<8x8xbf16>, vector<8x8xf32> -> vector<8x8xf32>
    %cst_33 = arith.constant 0.353553385 : f32
    %115 = vector.broadcast %cst_33 : f32 to vector<8x8xf32>
    %116 = arith.mulf %114, %115 : vector<8x8xf32>
    %cst_34 = arith.constant dense<0xFF800000> : vector<8xf32>
    %117 = vector.multi_reduction <maximumf>, %116, %cst_34 [1] : vector<8x8xf32> to vector<8xf32>
    %118 = vector.shape_cast %117 : vector<8xf32> to vector<8x1xf32>
    %119 = vector.broadcast %118 : vector<8x1xf32> to vector<8x8xf32>
    %120 = arith.subf %116, %119 : vector<8x8xf32>
    %121 = math.exp %120 : vector<8x8xf32>
    %cst_35 = arith.constant dense<0.000000e+00> : vector<8xf32>
    %122 = vector.multi_reduction <add>, %121, %cst_35 [1] : vector<8x8xf32> to vector<8xf32>
    %123 = vector.shape_cast %122 : vector<8xf32> to vector<8x1xf32>
    %124 = tpu.reciprocal %123 {approx = true} : vector<8x1xf32> -> vector<8x1xf32>
    %125 = vector.broadcast %124 : vector<8x1xf32> to vector<8x8xf32>
    %126 = arith.mulf %121, %125 : vector<8x8xf32>
    %127 = arith.truncf %126 : vector<8x8xf32> to vector<8x8xbf16>
    %128 = vector.extract_strided_slice %93 {offsets = [0, 8], sizes = [8, 8], strides = [1, 1]} : vector<8x32xbf16> to vector<8x8xbf16>
    %cst_36 = arith.constant dense<0.000000e+00> : vector<8x8xf32>
    %129 = tpu.matmul %127, %128, %cst_36 {dimension_numbers = #tpu.dot_dimension_numbers<[1], [0], [0], [1], [0, 0, 1, 1], [], []>} : vector<8x8xbf16>, vector<8x8xbf16>, vector<8x8xf32> -> vector<8x8xf32>
    %130 = vector.extract_strided_slice %91 {offsets = [0, 16], sizes = [8, 8], strides = [1, 1]} : vector<8x32xbf16> to vector<8x8xbf16>
    %131 = vector.extract_strided_slice %92 {offsets = [0, 16], sizes = [8, 8], strides = [1, 1]} : vector<8x32xbf16> to vector<8x8xbf16>
    %cst_37 = arith.constant dense<0.000000e+00> : vector<8x8xf32>
    %132 = tpu.matmul %130, %131, %cst_37 {dimension_numbers = #tpu.dot_dimension_numbers<[1], [1], [0], [0], [0, 0, 1, 0], [], []>} : vector<8x8xbf16>, vector<8x8xbf16>, vector<8x8xf32> -> vector<8x8xf32>
    %cst_38 = arith.constant 0.353553385 : f32
    %133 = vector.broadcast %cst_38 : f32 to vector<8x8xf32>
    %134 = arith.mulf %132, %133 : vector<8x8xf32>
    %cst_39 = arith.constant dense<0xFF800000> : vector<8xf32>
    %135 = vector.multi_reduction <maximumf>, %134, %cst_39 [1] : vector<8x8xf32> to vector<8xf32>
    %136 = vector.shape_cast %135 : vector<8xf32> to vector<8x1xf32>
    %137 = vector.broadcast %136 : vector<8x1xf32> to vector<8x8xf32>
    %138 = arith.subf %134, %137 : vector<8x8xf32>
    %139 = math.exp %138 : vector<8x8xf32>
    %cst_40 = arith.constant dense<0.000000e+00> : vector<8xf32>
    %140 = vector.multi_reduction <add>, %139, %cst_40 [1] : vector<8x8xf32> to vector<8xf32>
    %141 = vector.shape_cast %140 : vector<8xf32> to vector<8x1xf32>
    %142 = tpu.reciprocal %141 {approx = true} : vector<8x1xf32> -> vector<8x1xf32>
    %143 = vector.broadcast %142 : vector<8x1xf32> to vector<8x8xf32>
    %144 = arith.mulf %139, %143 : vector<8x8xf32>
    %145 = arith.truncf %144 : vector<8x8xf32> to vector<8x8xbf16>
    %146 = vector.extract_strided_slice %93 {offsets = [0, 16], sizes = [8, 8], strides = [1, 1]} : vector<8x32xbf16> to vector<8x8xbf16>
    %cst_41 = arith.constant dense<0.000000e+00> : vector<8x8xf32>
    %147 = tpu.matmul %145, %146, %cst_41 {dimension_numbers = #tpu.dot_dimension_numbers<[1], [0], [0], [1], [0, 0, 1, 1], [], []>} : vector<8x8xbf16>, vector<8x8xbf16>, vector<8x8xf32> -> vector<8x8xf32>
    %148 = vector.extract_strided_slice %91 {offsets = [0, 24], sizes = [8, 8], strides = [1, 1]} : vector<8x32xbf16> to vector<8x8xbf16>
    %149 = vector.extract_strided_slice %92 {offsets = [0, 24], sizes = [8, 8], strides = [1, 1]} : vector<8x32xbf16> to vector<8x8xbf16>
    %cst_42 = arith.constant dense<0.000000e+00> : vector<8x8xf32>
    %150 = tpu.matmul %148, %149, %cst_42 {dimension_numbers = #tpu.dot_dimension_numbers<[1], [1], [0], [0], [0, 0, 1, 0], [], []>} : vector<8x8xbf16>, vector<8x8xbf16>, vector<8x8xf32> -> vector<8x8xf32>
    %cst_43 = arith.constant 0.353553385 : f32
    %151 = vector.broadcast %cst_43 : f32 to vector<8x8xf32>
    %152 = arith.mulf %150, %151 : vector<8x8xf32>
    %cst_44 = arith.constant dense<0xFF800000> : vector<8xf32>
    %153 = vector.multi_reduction <maximumf>, %152, %cst_44 [1] : vector<8x8xf32> to vector<8xf32>
    %154 = vector.shape_cast %153 : vector<8xf32> to vector<8x1xf32>
    %155 = vector.broadcast %154 : vector<8x1xf32> to vector<8x8xf32>
    %156 = arith.subf %152, %155 : vector<8x8xf32>
    %157 = math.exp %156 : vector<8x8xf32>
    %cst_45 = arith.constant dense<0.000000e+00> : vector<8xf32>
    %158 = vector.multi_reduction <add>, %157, %cst_45 [1] : vector<8x8xf32> to vector<8xf32>
    %159 = vector.shape_cast %158 : vector<8xf32> to vector<8x1xf32>
    %160 = tpu.reciprocal %159 {approx = true} : vector<8x1xf32> -> vector<8x1xf32>
    %161 = vector.broadcast %160 : vector<8x1xf32> to vector<8x8xf32>
    %162 = arith.mulf %157, %161 : vector<8x8xf32>
    %163 = arith.truncf %162 : vector<8x8xf32> to vector<8x8xbf16>
    %164 = vector.extract_strided_slice %93 {offsets = [0, 24], sizes = [8, 8], strides = [1, 1]} : vector<8x32xbf16> to vector<8x8xbf16>
    %cst_46 = arith.constant dense<0.000000e+00> : vector<8x8xf32>
    %165 = tpu.matmul %163, %164, %cst_46 {dimension_numbers = #tpu.dot_dimension_numbers<[1], [0], [0], [1], [0, 0, 1, 1], [], []>} : vector<8x8xbf16>, vector<8x8xbf16>, vector<8x8xf32> -> vector<8x8xf32>
    %166 = tpu.concatenate %111, %129, %147, %165 in 1 : vector<8x8xf32>, vector<8x8xf32>, vector<8x8xf32>, vector<8x8xf32> -> vector<8x32xf32>
    %cst_47 = arith.constant dense<0.000000e+00> : vector<32xf32>
    %167 = vector.multi_reduction <add>, %166, %cst_47 [0] : vector<8x32xf32> to vector<32xf32>
    %168 = vector.shape_cast %167 : vector<32xf32> to vector<1x32xf32>
    %cst_48 = arith.constant 8.000000e+00 : f32
    %169 = vector.broadcast %cst_48 : f32 to vector<1x32xf32>
    %170 = arith.divf %168, %169 : vector<1x32xf32>
    %171 = tpu.concatenate %86, %166 in 0 : vector<8x32xf32>, vector<8x32xf32> -> vector<16x32xf32>
    %172 = tpu.concatenate %90, %170 in 0 : vector<1x32xf32>, vector<1x32xf32> -> vector<2x32xf32>
    %173 = arith.truncf %171 : vector<16x32xf32> to vector<16x32xbf16>
    %174 = tpu.iota {dimensions = array<i32: 0>} : vector<8x1xi32>
    %175 = tpu.concatenate %174, %174 in 0 : vector<8x1xi32>, vector<8x1xi32> -> vector<16x1xi32>
    %c0_49 = arith.constant 0 : index
    %c0_50 = arith.constant 0 : index
    %176 = vector.load %arg10[%c0_49, %c0_50] : memref<32x96xbf16, #tpu.memory_space<vmem>>, vector<32x96xbf16>
    %cst_51 = arith.constant dense<0.000000e+00> : vector<16x96xf32>
    %177 = tpu.matmul %173, %176, %cst_51 {dimension_numbers = #tpu.dot_dimension_numbers<[1], [0], [0], [1], [0, 0, 1, 1], [], []>} : vector<16x32xbf16>, vector<32x96xbf16>, vector<16x96xf32> -> vector<16x96xf32>
    %178 = vector.extract_strided_slice %177 {offsets = [0, 0], sizes = [16, 32], strides = [1, 1]} : vector<16x96xf32> to vector<16x32xf32>
    %179 = vector.extract_strided_slice %177 {offsets = [0, 32], sizes = [16, 32], strides = [1, 1]} : vector<16x96xf32> to vector<16x32xf32>
    %180 = vector.extract_strided_slice %177 {offsets = [0, 64], sizes = [16, 32], strides = [1, 1]} : vector<16x96xf32> to vector<16x32xf32>
    %c0_52 = arith.constant 0 : index
    %c0_53 = arith.constant 0 : index
    %181 = vector.load %arg15[%c0_52, %c0_53] : memref<1x32xf32, #tpu.memory_space<vmem>>, vector<1x32xf32>
    %182 = vector.broadcast %181 : vector<1x32xf32> to vector<16x32xf32>
    %183 = arith.addf %180, %182 : vector<16x32xf32>
    %cst_54 = arith.constant 0.000000e+00 : f32
    %184 = vector.broadcast %cst_54 : f32 to vector<16x32xf32>
    %185 = arith.maximumf %183, %184 : vector<16x32xf32>
    %c1_i32 = arith.constant 1 : i32
    %186 = tpu.dynamic_rotate %171 by %c1_i32 dim 0 : vector<16x32xf32>, i32 -> vector<16x32xf32>
    %c1_i32_55 = arith.constant 1 : i32
    %187 = vector.broadcast %c1_i32_55 : i32 to vector<16x1xi32>
    %188 = arith.cmpi sge, %175, %187 : vector<16x1xi32>
    %cst_56 = arith.constant 0.000000e+00 : f32
    %189 = vector.shape_cast %188 : vector<16x1xi1> to vector<16x1xi1>
    %190 = vector.broadcast %189 : vector<16x1xi1> to vector<16x32xi1>
    %191 = vector.broadcast %cst_56 : f32 to vector<16x32xf32>
    %192 = arith.select %190, %186, %191 : vector<16x32xi1>, vector<16x32xf32>
    %193 = arith.truncf %192 : vector<16x32xf32> to vector<16x32xbf16>
    %c0_57 = arith.constant 0 : index
    %c0_58 = arith.constant 0 : index
    %194 = vector.load %arg11[%c0_57, %c0_58] : memref<32x64xbf16, #tpu.memory_space<vmem>>, vector<32x64xbf16>
    %cst_59 = arith.constant dense<0.000000e+00> : vector<16x64xf32>
    %195 = tpu.matmul %193, %194, %cst_59 {dimension_numbers = #tpu.dot_dimension_numbers<[1], [0], [0], [1], [0, 0, 1, 1], [], []>} : vector<16x32xbf16>, vector<32x64xbf16>, vector<16x64xf32> -> vector<16x64xf32>
    %c15_i32 = arith.constant 15 : i32
    %196 = tpu.dynamic_rotate %171 by %c15_i32 dim 0 : vector<16x32xf32>, i32 -> vector<16x32xf32>
    %c7_i32 = arith.constant 7 : i32
    %197 = vector.broadcast %c7_i32 : i32 to vector<16x1xi32>
    %198 = arith.cmpi slt, %175, %197 : vector<16x1xi32>
    %cst_60 = arith.constant 0.000000e+00 : f32
    %199 = vector.shape_cast %198 : vector<16x1xi1> to vector<16x1xi1>
    %200 = vector.broadcast %199 : vector<16x1xi1> to vector<16x32xi1>
    %201 = vector.broadcast %cst_60 : f32 to vector<16x32xf32>
    %202 = arith.select %200, %196, %201 : vector<16x32xi1>, vector<16x32xf32>
    %203 = arith.truncf %202 : vector<16x32xf32> to vector<16x32xbf16>
    %c0_61 = arith.constant 0 : index
    %c0_62 = arith.constant 0 : index
    %204 = vector.load %arg12[%c0_61, %c0_62] : memref<32x64xbf16, #tpu.memory_space<vmem>>, vector<32x64xbf16>
    %cst_63 = arith.constant dense<0.000000e+00> : vector<16x64xf32>
    %205 = tpu.matmul %203, %204, %cst_63 {dimension_numbers = #tpu.dot_dimension_numbers<[1], [0], [0], [1], [0, 0, 1, 1], [], []>} : vector<16x32xbf16>, vector<32x64xbf16>, vector<16x64xf32> -> vector<16x64xf32>
    %206 = vector.extract_strided_slice %195 {offsets = [0, 0], sizes = [16, 32], strides = [1, 1]} : vector<16x64xf32> to vector<16x32xf32>
    %207 = arith.addf %178, %206 : vector<16x32xf32>
    %208 = vector.extract_strided_slice %205 {offsets = [0, 0], sizes = [16, 32], strides = [1, 1]} : vector<16x64xf32> to vector<16x32xf32>
    %209 = arith.addf %207, %208 : vector<16x32xf32>
    %210 = vector.extract_strided_slice %195 {offsets = [0, 32], sizes = [16, 32], strides = [1, 1]} : vector<16x64xf32> to vector<16x32xf32>
    %211 = arith.addf %179, %210 : vector<16x32xf32>
    %212 = vector.extract_strided_slice %205 {offsets = [0, 32], sizes = [16, 32], strides = [1, 1]} : vector<16x64xf32> to vector<16x32xf32>
    %213 = arith.addf %211, %212 : vector<16x32xf32>
    %c2_i32 = arith.constant 2 : i32
    %214 = tpu.dynamic_rotate %171 by %c2_i32 dim 0 : vector<16x32xf32>, i32 -> vector<16x32xf32>
    %c2_i32_64 = arith.constant 2 : i32
    %215 = vector.broadcast %c2_i32_64 : i32 to vector<16x1xi32>
    %216 = arith.cmpi sge, %175, %215 : vector<16x1xi32>
    %cst_65 = arith.constant 0.000000e+00 : f32
    %217 = vector.shape_cast %216 : vector<16x1xi1> to vector<16x1xi1>
    %218 = vector.broadcast %217 : vector<16x1xi1> to vector<16x32xi1>
    %219 = vector.broadcast %cst_65 : f32 to vector<16x32xf32>
    %220 = arith.select %218, %214, %219 : vector<16x32xi1>, vector<16x32xf32>
    %221 = arith.truncf %220 : vector<16x32xf32> to vector<16x32xbf16>
    %c0_66 = arith.constant 0 : index
    %c0_67 = arith.constant 0 : index
    %222 = vector.load %arg13[%c0_66, %c0_67] : memref<32x32xbf16, #tpu.memory_space<vmem>>, vector<32x32xbf16>
    %cst_68 = arith.constant dense<0.000000e+00> : vector<16x32xf32>
    %223 = tpu.matmul %221, %222, %cst_68 {dimension_numbers = #tpu.dot_dimension_numbers<[1], [0], [0], [1], [0, 0, 1, 1], [], []>} : vector<16x32xbf16>, vector<32x32xbf16>, vector<16x32xf32> -> vector<16x32xf32>
    %224 = arith.addf %213, %223 : vector<16x32xf32>
    %c14_i32 = arith.constant 14 : i32
    %225 = tpu.dynamic_rotate %171 by %c14_i32 dim 0 : vector<16x32xf32>, i32 -> vector<16x32xf32>
    %c6_i32 = arith.constant 6 : i32
    %226 = vector.broadcast %c6_i32 : i32 to vector<16x1xi32>
    %227 = arith.cmpi slt, %175, %226 : vector<16x1xi32>
    %cst_69 = arith.constant 0.000000e+00 : f32
    %228 = vector.shape_cast %227 : vector<16x1xi1> to vector<16x1xi1>
    %229 = vector.broadcast %228 : vector<16x1xi1> to vector<16x32xi1>
    %230 = vector.broadcast %cst_69 : f32 to vector<16x32xf32>
    %231 = arith.select %229, %225, %230 : vector<16x32xi1>, vector<16x32xf32>
    %232 = arith.truncf %231 : vector<16x32xf32> to vector<16x32xbf16>
    %c0_70 = arith.constant 0 : index
    %c0_71 = arith.constant 0 : index
    %233 = vector.load %arg14[%c0_70, %c0_71] : memref<32x32xbf16, #tpu.memory_space<vmem>>, vector<32x32xbf16>
    %cst_72 = arith.constant dense<0.000000e+00> : vector<16x32xf32>
    %234 = tpu.matmul %232, %233, %cst_72 {dimension_numbers = #tpu.dot_dimension_numbers<[1], [0], [0], [1], [0, 0, 1, 1], [], []>} : vector<16x32xbf16>, vector<32x32xbf16>, vector<16x32xf32> -> vector<16x32xf32>
    %235 = arith.addf %224, %234 : vector<16x32xf32>
    %c0_73 = arith.constant 0 : index
    %c0_74 = arith.constant 0 : index
    %236 = vector.load %arg16[%c0_73, %c0_74] : memref<1x32xf32, #tpu.memory_space<vmem>>, vector<1x32xf32>
    %237 = vector.broadcast %236 : vector<1x32xf32> to vector<16x32xf32>
    %238 = arith.addf %209, %237 : vector<16x32xf32>
    %cst_75 = arith.constant 0.000000e+00 : f32
    %239 = vector.broadcast %cst_75 : f32 to vector<16x32xf32>
    %240 = arith.maximumf %238, %239 : vector<16x32xf32>
    %c0_76 = arith.constant 0 : index
    %c0_77 = arith.constant 0 : index
    %241 = vector.load %arg17[%c0_76, %c0_77] : memref<1x32xf32, #tpu.memory_space<vmem>>, vector<1x32xf32>
    %242 = vector.broadcast %241 : vector<1x32xf32> to vector<16x32xf32>
    %243 = arith.addf %235, %242 : vector<16x32xf32>
    %cst_78 = arith.constant 0.000000e+00 : f32
    %244 = vector.broadcast %cst_78 : f32 to vector<16x32xf32>
    %245 = arith.maximumf %243, %244 : vector<16x32xf32>
    %246 = arith.truncf %240 : vector<16x32xf32> to vector<16x32xbf16>
    %c0_79 = arith.constant 0 : index
    %c0_80 = arith.constant 0 : index
    %247 = vector.load %arg18[%c0_79, %c0_80] : memref<32x32xbf16, #tpu.memory_space<vmem>>, vector<32x32xbf16>
    %cst_81 = arith.constant dense<0.000000e+00> : vector<16x32xf32>
    %248 = tpu.matmul %246, %247, %cst_81 {dimension_numbers = #tpu.dot_dimension_numbers<[1], [0], [0], [1], [0, 0, 1, 1], [], []>} : vector<16x32xbf16>, vector<32x32xbf16>, vector<16x32xf32> -> vector<16x32xf32>
    %249 = arith.truncf %245 : vector<16x32xf32> to vector<16x32xbf16>
    %c0_82 = arith.constant 0 : index
    %c0_83 = arith.constant 0 : index
    %250 = vector.load %arg19[%c0_82, %c0_83] : memref<32x32xbf16, #tpu.memory_space<vmem>>, vector<32x32xbf16>
    %cst_84 = arith.constant dense<0.000000e+00> : vector<16x32xf32>
    %251 = tpu.matmul %249, %250, %cst_84 {dimension_numbers = #tpu.dot_dimension_numbers<[1], [0], [0], [1], [0, 0, 1, 1], [], []>} : vector<16x32xbf16>, vector<32x32xbf16>, vector<16x32xf32> -> vector<16x32xf32>
    %252 = arith.addf %248, %251 : vector<16x32xf32>
    %253 = arith.truncf %185 : vector<16x32xf32> to vector<16x32xbf16>
    %c0_85 = arith.constant 0 : index
    %c0_86 = arith.constant 0 : index
    %254 = vector.load %arg20[%c0_85, %c0_86] : memref<32x32xbf16, #tpu.memory_space<vmem>>, vector<32x32xbf16>
    %cst_87 = arith.constant dense<0.000000e+00> : vector<16x32xf32>
    %255 = tpu.matmul %253, %254, %cst_87 {dimension_numbers = #tpu.dot_dimension_numbers<[1], [0], [0], [1], [0, 0, 1, 1], [], []>} : vector<16x32xbf16>, vector<32x32xbf16>, vector<16x32xf32> -> vector<16x32xf32>
    %256 = arith.addf %252, %255 : vector<16x32xf32>
    %c0_88 = arith.constant 0 : index
    %c0_89 = arith.constant 0 : index
    %257 = vector.load %arg21[%c0_88, %c0_89] : memref<1x32xf32, #tpu.memory_space<vmem>>, vector<1x32xf32>
    %258 = vector.broadcast %257 : vector<1x32xf32> to vector<16x32xf32>
    %259 = arith.addf %256, %258 : vector<16x32xf32>
    %cst_90 = arith.constant 0.000000e+00 : f32
    %260 = vector.broadcast %cst_90 : f32 to vector<16x32xf32>
    %261 = arith.maximumf %259, %260 : vector<16x32xf32>
    %262 = arith.truncf %172 : vector<2x32xf32> to vector<2x32xbf16>
    %c0_91 = arith.constant 0 : index
    %c0_92 = arith.constant 0 : index
    %263 = vector.load %arg6[%c0_91, %c0_92] : memref<32x16xbf16, #tpu.memory_space<vmem>>, vector<32x16xbf16>
    %cst_93 = arith.constant dense<0.000000e+00> : vector<2x16xf32>
    %264 = tpu.matmul %262, %263, %cst_93 {dimension_numbers = #tpu.dot_dimension_numbers<[1], [0], [0], [1], [0, 0, 1, 1], [], []>} : vector<2x32xbf16>, vector<32x16xbf16>, vector<2x16xf32> -> vector<2x16xf32>
    %c0_94 = arith.constant 0 : index
    %c0_95 = arith.constant 0 : index
    %265 = vector.load %arg7[%c0_94, %c0_95] : memref<1x16xf32, #tpu.memory_space<vmem>>, vector<1x16xf32>
    %266 = vector.broadcast %265 : vector<1x16xf32> to vector<2x16xf32>
    %267 = arith.addf %264, %266 : vector<2x16xf32>
    %cst_96 = arith.constant 0.000000e+00 : f32
    %268 = vector.broadcast %cst_96 : f32 to vector<2x16xf32>
    %269 = arith.maximumf %267, %268 : vector<2x16xf32>
    %270 = arith.truncf %269 : vector<2x16xf32> to vector<2x16xbf16>
    %c0_97 = arith.constant 0 : index
    %c0_98 = arith.constant 0 : index
    %271 = vector.load %arg8[%c0_97, %c0_98] : memref<16x1xbf16, #tpu.memory_space<vmem>>, vector<16x1xbf16>
    %cst_99 = arith.constant dense<0.000000e+00> : vector<2x1xf32>
    %272 = tpu.matmul %270, %271, %cst_99 {dimension_numbers = #tpu.dot_dimension_numbers<[1], [0], [0], [1], [0, 0, 1, 1], [], []>} : vector<2x16xbf16>, vector<16x1xbf16>, vector<2x1xf32> -> vector<2x1xf32>
    %c0_100 = arith.constant 0 : index
    %c0_101 = arith.constant 0 : index
    %273 = vector.load %arg9[%c0_100, %c0_101] : memref<1x1xf32, #tpu.memory_space<vmem>>, vector<1x1xf32>
    %274 = vector.broadcast %273 : vector<1x1xf32> to vector<2x1xf32>
    %275 = arith.addf %272, %274 : vector<2x1xf32>
    %276 = arith.negf %275 : vector<2x1xf32>
    %277 = math.exp %276 : vector<2x1xf32>
    %cst_102 = arith.constant 1.000000e+00 : f32
    %278 = vector.broadcast %cst_102 : f32 to vector<2x1xf32>
    %279 = arith.addf %278, %277 : vector<2x1xf32>
    %280 = arith.divf %278, %279 : vector<2x1xf32>
    %281 = vector.extract_strided_slice %280 {offsets = [0, 0], sizes = [1, 1], strides = [1, 1]} : vector<2x1xf32> to vector<1x1xf32>
    %282 = vector.shape_cast %281 : vector<1x1xf32> to vector<1x1xf32>
    %283 = vector.broadcast %282 : vector<1x1xf32> to vector<8x1xf32>
    %284 = vector.extract_strided_slice %280 {offsets = [1, 0], sizes = [1, 1], strides = [1, 1]} : vector<2x1xf32> to vector<1x1xf32>
    %285 = vector.shape_cast %284 : vector<1x1xf32> to vector<1x1xf32>
    %286 = vector.broadcast %285 : vector<1x1xf32> to vector<8x1xf32>
    %287 = tpu.concatenate %283, %286 in 0 : vector<8x1xf32>, vector<8x1xf32> -> vector<16x1xf32>
    %288 = vector.broadcast %287 : vector<16x1xf32> to vector<16x32xf32>
    %289 = arith.mulf %288, %261 : vector<16x32xf32>
    %cst_103 = arith.constant 1.000000e+00 : f32
    %290 = vector.broadcast %cst_103 : f32 to vector<16x1xf32>
    %291 = arith.subf %290, %287 : vector<16x1xf32>
    %292 = vector.broadcast %291 : vector<16x1xf32> to vector<16x32xf32>
    %293 = arith.mulf %292, %171 : vector<16x32xf32>
    %294 = arith.addf %289, %293 : vector<16x32xf32>
    %295 = arith.truncf %294 : vector<16x32xf32> to vector<16x32xbf16>
    %c0_104 = arith.constant 0 : index
    %c0_105 = arith.constant 0 : index
    %296 = vector.load %arg4[%c0_104, %c0_105] : memref<32x32xbf16, #tpu.memory_space<vmem>>, vector<32x32xbf16>
    %cst_106 = arith.constant dense<0.000000e+00> : vector<16x32xf32>
    %297 = tpu.matmul %295, %296, %cst_106 {dimension_numbers = #tpu.dot_dimension_numbers<[1], [0], [0], [1], [0, 0, 1, 1], [], []>} : vector<16x32xbf16>, vector<32x32xbf16>, vector<16x32xf32> -> vector<16x32xf32>
    %c0_107 = arith.constant 0 : index
    %c0_108 = arith.constant 0 : index
    %298 = vector.load %arg5[%c0_107, %c0_108] : memref<1x32xf32, #tpu.memory_space<vmem>>, vector<1x32xf32>
    %299 = vector.broadcast %298 : vector<1x32xf32> to vector<16x32xf32>
    %300 = arith.addf %297, %299 : vector<16x32xf32>
    %301 = arith.addf %0, %300 : vector<16x32xf32>
    %cst_109 = arith.constant dense<0.000000e+00> : vector<16xf32>
    %302 = vector.multi_reduction <add>, %301, %cst_109 [1] : vector<16x32xf32> to vector<16xf32>
    %303 = vector.shape_cast %302 : vector<16xf32> to vector<16x1xf32>
    %cst_110 = arith.constant 3.200000e+01 : f32
    %304 = vector.broadcast %cst_110 : f32 to vector<16x1xf32>
    %305 = arith.divf %303, %304 : vector<16x1xf32>
    %306 = vector.broadcast %305 : vector<16x1xf32> to vector<16x32xf32>
    %307 = arith.subf %301, %306 : vector<16x32xf32>
    %308 = arith.mulf %307, %307 : vector<16x32xf32>
    %cst_111 = arith.constant dense<0.000000e+00> : vector<16xf32>
    %309 = vector.multi_reduction <add>, %308, %cst_111 [1] : vector<16x32xf32> to vector<16xf32>
    %310 = vector.shape_cast %309 : vector<16xf32> to vector<16x1xf32>
    %cst_112 = arith.constant 3.200000e+01 : f32
    %311 = vector.broadcast %cst_112 : f32 to vector<16x1xf32>
    %312 = arith.divf %310, %311 : vector<16x1xf32>
    %313 = vector.broadcast %305 : vector<16x1xf32> to vector<16x32xf32>
    %314 = arith.subf %301, %313 : vector<16x32xf32>
    %cst_113 = arith.constant 9.99999974E-6 : f32
    %315 = vector.broadcast %cst_113 : f32 to vector<16x1xf32>
    %316 = arith.addf %312, %315 : vector<16x1xf32>
    %317 = math.rsqrt %316 : vector<16x1xf32>
    %318 = vector.broadcast %317 : vector<16x1xf32> to vector<16x32xf32>
    %319 = arith.mulf %314, %318 : vector<16x32xf32>
    %c0_114 = arith.constant 0 : index
    %c0_115 = arith.constant 0 : index
    %320 = vector.load %arg22[%c0_114, %c0_115] : memref<1x32xf32, #tpu.memory_space<vmem>>, vector<1x32xf32>
    %321 = vector.broadcast %320 : vector<1x32xf32> to vector<16x32xf32>
    %322 = arith.mulf %319, %321 : vector<16x32xf32>
    %c0_116 = arith.constant 0 : index
    %c0_117 = arith.constant 0 : index
    %323 = vector.load %arg23[%c0_116, %c0_117] : memref<1x32xf32, #tpu.memory_space<vmem>>, vector<1x32xf32>
    %324 = vector.broadcast %323 : vector<1x32xf32> to vector<16x32xf32>
    %325 = arith.addf %322, %324 : vector<16x32xf32>
    %326 = arith.addf %325, %0 : vector<16x32xf32>
    %c0_118 = arith.constant 0 : index
    %c0_119 = arith.constant 0 : index
    %327 = vector.load %arg24[%c0_118, %c0_119] : memref<16x32xf32, #tpu.memory_space<vmem>>, vector<16x32xf32>
    tpu.vector_store %arg24[%c0_118, %c0_119], %326 {strides = array<i32>} : memref<16x32xf32, #tpu.memory_space<vmem>>, vector<16x32xf32>,
    return
  }
  func.func @transform_0(%arg0: i32) -> (i32, i32) {
    %c0_i32 = arith.constant 0 : i32
    %c0_i32_0 = arith.constant 0 : i32
    return %arg0, %c0_i32 : i32, i32
  }
  func.func @transform_1(%arg0: i32) -> (i32, i32) {
    %c0_i32 = arith.constant 0 : i32
    %c0_i32_0 = arith.constant 0 : i32
    %c0_i32_1 = arith.constant 0 : i32
    return %c0_i32, %c0_i32_0 : i32, i32
  }
  func.func @transform_2(%arg0: i32) -> (i32, i32) {
    %c0_i32 = arith.constant 0 : i32
    %c0_i32_0 = arith.constant 0 : i32
    %c0_i32_1 = arith.constant 0 : i32
    return %c0_i32, %c0_i32_0 : i32, i32
  }
  func.func @transform_3(%arg0: i32) -> (i32, i32) {
    %c0_i32 = arith.constant 0 : i32
    %c0_i32_0 = arith.constant 0 : i32
    %c0_i32_1 = arith.constant 0 : i32
    return %c0_i32, %c0_i32_0 : i32, i32
  }
  func.func @transform_4(%arg0: i32) -> (i32, i32) {
    %c0_i32 = arith.constant 0 : i32
    %c0_i32_0 = arith.constant 0 : i32
    %c0_i32_1 = arith.constant 0 : i32
    return %c0_i32, %c0_i32_0 : i32, i32
  }
  func.func @transform_5(%arg0: i32) -> (i32, i32) {
    %c0_i32 = arith.constant 0 : i32
    %c0_i32_0 = arith.constant 0 : i32
    %c0_i32_1 = arith.constant 0 : i32
    return %c0_i32, %c0_i32_0 : i32, i32
  }
  func.func @transform_6(%arg0: i32) -> (i32, i32) {
    %c0_i32 = arith.constant 0 : i32
    %c0_i32_0 = arith.constant 0 : i32
    %c0_i32_1 = arith.constant 0 : i32
    return %c0_i32, %c0_i32_0 : i32, i32
  }
  func.func @transform_7(%arg0: i32) -> (i32, i32) {
    %c0_i32 = arith.constant 0 : i32
    %c0_i32_0 = arith.constant 0 : i32
    %c0_i32_1 = arith.constant 0 : i32
    return %c0_i32, %c0_i32_0 : i32, i32
  }
  func.func @transform_8(%arg0: i32) -> (i32, i32) {
    %c0_i32 = arith.constant 0 : i32
    %c0_i32_0 = arith.constant 0 : i32
    %c0_i32_1 = arith.constant 0 : i32
    return %c0_i32, %c0_i32_0 : i32, i32
  }
  func.func @transform_9(%arg0: i32) -> (i32, i32) {
    %c0_i32 = arith.constant 0 : i32
    %c0_i32_0 = arith.constant 0 : i32
    %c0_i32_1 = arith.constant 0 : i32
    return %c0_i32, %c0_i32_0 : i32, i32
  }
  func.func @transform_10(%arg0: i32) -> (i32, i32) {
    %c0_i32 = arith.constant 0 : i32
    %c0_i32_0 = arith.constant 0 : i32
    %c0_i32_1 = arith.constant 0 : i32
    return %c0_i32, %c0_i32_0 : i32, i32
  }
  func.func @transform_11(%arg0: i32) -> (i32, i32) {
    %c0_i32 = arith.constant 0 : i32
    %c0_i32_0 = arith.constant 0 : i32
    %c0_i32_1 = arith.constant 0 : i32
    return %c0_i32, %c0_i32_0 : i32, i32
  }
  func.func @transform_12(%arg0: i32) -> (i32, i32) {
    %c0_i32 = arith.constant 0 : i32
    %c0_i32_0 = arith.constant 0 : i32
    %c0_i32_1 = arith.constant 0 : i32
    return %c0_i32, %c0_i32_0 : i32, i32
  }
  func.func @transform_13(%arg0: i32) -> (i32, i32) {
    %c0_i32 = arith.constant 0 : i32
    %c0_i32_0 = arith.constant 0 : i32
    %c0_i32_1 = arith.constant 0 : i32
    return %c0_i32, %c0_i32_0 : i32, i32
  }
  func.func @transform_14(%arg0: i32) -> (i32, i32) {
    %c0_i32 = arith.constant 0 : i32
    %c0_i32_0 = arith.constant 0 : i32
    %c0_i32_1 = arith.constant 0 : i32
    return %c0_i32, %c0_i32_0 : i32, i32
  }
  func.func @transform_15(%arg0: i32) -> (i32, i32) {
    %c0_i32 = arith.constant 0 : i32
    %c0_i32_0 = arith.constant 0 : i32
    %c0_i32_1 = arith.constant 0 : i32
    return %c0_i32, %c0_i32_0 : i32, i32
  }
  func.func @transform_16(%arg0: i32) -> (i32, i32) {
    %c0_i32 = arith.constant 0 : i32
    %c0_i32_0 = arith.constant 0 : i32
    %c0_i32_1 = arith.constant 0 : i32
    return %c0_i32, %c0_i32_0 : i32, i32
  }
  func.func @transform_17(%arg0: i32) -> (i32, i32) {
    %c0_i32 = arith.constant 0 : i32
    %c0_i32_0 = arith.constant 0 : i32
    %c0_i32_1 = arith.constant 0 : i32
    return %c0_i32, %c0_i32_0 : i32, i32
  }
  func.func @transform_18(%arg0: i32) -> (i32, i32) {
    %c0_i32 = arith.constant 0 : i32
    %c0_i32_0 = arith.constant 0 : i32
    %c0_i32_1 = arith.constant 0 : i32
    return %c0_i32, %c0_i32_0 : i32, i32
  }
  func.func @transform_19(%arg0: i32) -> (i32, i32) {
    %c0_i32 = arith.constant 0 : i32
    %c0_i32_0 = arith.constant 0 : i32
    %c0_i32_1 = arith.constant 0 : i32
    return %c0_i32, %c0_i32_0 : i32, i32
  }
  func.func @transform_20(%arg0: i32) -> (i32, i32) {
    %c0_i32 = arith.constant 0 : i32
    %c0_i32_0 = arith.constant 0 : i32
    %c0_i32_1 = arith.constant 0 : i32
    return %c0_i32, %c0_i32_0 : i32, i32
  }
  func.func @transform_21(%arg0: i32) -> (i32, i32) {
    %c0_i32 = arith.constant 0 : i32
    %c0_i32_0 = arith.constant 0 : i32
    %c0_i32_1 = arith.constant 0 : i32
    return %c0_i32, %c0_i32_0 : i32, i32
  }
  func.func @transform_22(%arg0: i32) -> (i32, i32) {
    %c0_i32 = arith.constant 0 : i32
    %c0_i32_0 = arith.constant 0 : i32
    %c0_i32_1 = arith.constant 0 : i32
    return %c0_i32, %c0_i32_0 : i32, i32
  }
  func.func @transform_23(%arg0: i32) -> (i32, i32) {
    %c0_i32 = arith.constant 0 : i32
    %c0_i32_0 = arith.constant 0 : i32
    return %arg0, %c0_i32 : i32, i32
  }
}

module attributes {stable_mosaic.version = 11 : i64} {
  func.func @resa_kernel(%arg0: i32, %arg1: memref<16x32xf32, #tpu.memory_space<vmem>>, %arg2: memref<32x96xbf16, #tpu.memory_space<vmem>>, %arg3: memref<1x96xf32, #tpu.memory_space<vmem>>, %arg4: memref<32x32xbf16, #tpu.memory_space<vmem>>, %arg5: memref<1x32xf32, #tpu.memory_space<vmem>>, %arg6: memref<32x16xbf16, #tpu.memory_space<vmem>>, %arg7: memref<1x16xf32, #tpu.memory_space<vmem>>, %arg8: memref<16x1xbf16, #tpu.memory_space<vmem>>, %arg9: memref<1x1xf32, #tpu.memory_space<vmem>>, %arg10: memref<32x96xbf16, #tpu.memory_space<vmem>>, %arg11: memref<32x64xbf16, #tpu.memory_space<vmem>>, %arg12: memref<32x64xbf16, #tpu.memory_space<vmem>>, %arg13: memref<32x32xbf16, #tpu.memory_space<vmem>>, %arg14: memref<32x32xbf16, #tpu.memory_space<vmem>>, %arg15: memref<1x32xf32, #tpu.memory_space<vmem>>, %arg16: memref<1x32xf32, #tpu.memory_space<vmem>>, %arg17: memref<1x32xf32, #tpu.memory_space<vmem>>, %arg18: memref<32x32xbf16, #tpu.memory_space<vmem>>, %arg19: memref<32x32xbf16, #tpu.memory_space<vmem>>, %arg20: memref<32x32xbf16, #tpu.memory_space<vmem>>, %arg21: memref<1x32xf32, #tpu.memory_space<vmem>>, %arg22: memref<1x32xf32, #tpu.memory_space<vmem>>, %arg23: memref<1x32xf32, #tpu.memory_space<vmem>>, %arg24: memref<16x32xf32, #tpu.memory_space<vmem>>) attributes {dimension_semantics = [#tpu.dimension_semantics<parallel>], iteration_bounds = array<i64: 1>, scalar_prefetch = 0 : i64, scratch_operands = 0 : i64, tpu.core_type = #tpu.core_type<tc>, window_params = [{transform_indices = @transform_0, window_bounds = array<i64: 16, 32>}, {pipeline_mode = #tpu.pipeline_mode<synchronous>, transform_indices = @transform_1, window_bounds = array<i64: 32, 96>}, {pipeline_mode = #tpu.pipeline_mode<synchronous>, transform_indices = @transform_2, window_bounds = array<i64: 1, 96>}, {pipeline_mode = #tpu.pipeline_mode<synchronous>, transform_indices = @transform_3, window_bounds = array<i64: 32, 32>}, {pipeline_mode = #tpu.pipeline_mode<synchronous>, transform_indices = @transform_4, window_bounds = array<i64: 1, 32>}, {pipeline_mode = #tpu.pipeline_mode<synchronous>, transform_indices = @transform_5, window_bounds = array<i64: 32, 16>}, {pipeline_mode = #tpu.pipeline_mode<synchronous>, transform_indices = @transform_6, window_bounds = array<i64: 1, 16>}, {pipeline_mode = #tpu.pipeline_mode<synchronous>, transform_indices = @transform_7, window_bounds = array<i64: 16, 1>}, {pipeline_mode = #tpu.pipeline_mode<synchronous>, transform_indices = @transform_8, window_bounds = array<i64: 1, 1>}, {pipeline_mode = #tpu.pipeline_mode<synchronous>, transform_indices = @transform_9, window_bounds = array<i64: 32, 96>}, {pipeline_mode = #tpu.pipeline_mode<synchronous>, transform_indices = @transform_10, window_bounds = array<i64: 32, 64>}, {pipeline_mode = #tpu.pipeline_mode<synchronous>, transform_indices = @transform_11, window_bounds = array<i64: 32, 64>}, {pipeline_mode = #tpu.pipeline_mode<synchronous>, transform_indices = @transform_12, window_bounds = array<i64: 32, 32>}, {pipeline_mode = #tpu.pipeline_mode<synchronous>, transform_indices = @transform_13, window_bounds = array<i64: 32, 32>}, {pipeline_mode = #tpu.pipeline_mode<synchronous>, transform_indices = @transform_14, window_bounds = array<i64: 1, 32>}, {pipeline_mode = #tpu.pipeline_mode<synchronous>, transform_indices = @transform_15, window_bounds = array<i64: 1, 32>}, {pipeline_mode = #tpu.pipeline_mode<synchronous>, transform_indices = @transform_16, window_bounds = array<i64: 1, 32>}, {pipeline_mode = #tpu.pipeline_mode<synchronous>, transform_indices = @transform_17, window_bounds = array<i64: 32, 32>}, {pipeline_mode = #tpu.pipeline_mode<synchronous>, transform_indices = @transform_18, window_bounds = array<i64: 32, 32>}, {pipeline_mode = #tpu.pipeline_mode<synchronous>, transform_indices = @transform_19, window_bounds = array<i64: 32, 32>}, {pipeline_mode = #tpu.pipeline_mode<synchronous>, transform_indices = @transform_20, window_bounds = array<i64: 1, 32>}, {pipeline_mode = #tpu.pipeline_mode<synchronous>, transform_indices = @transform_21, window_bounds = array<i64: 1, 32>}, {pipeline_mode = #tpu.pipeline_mode<synchronous>, transform_indices = @transform_22, window_bounds = array<i64: 1, 32>}, {transform_indices = @transform_23, window_bounds = array<i64: 16, 32>}]} {
    %c0 = arith.constant 0 : index
    %c0_0 = arith.constant 0 : index
    %0 = vector.load %arg1[%c0, %c0_0] : memref<16x32xf32, #tpu.memory_space<vmem>>, vector<16x32xf32>
    %1 = arith.truncf %0 : vector<16x32xf32> to vector<16x32xbf16>
    %c0_1 = arith.constant 0 : index
    %c0_2 = arith.constant 0 : index
    %2 = vector.load %arg2[%c0_1, %c0_2] : memref<32x96xbf16, #tpu.memory_space<vmem>>, vector<32x96xbf16>
    %cst = arith.constant dense<0.000000e+00> : vector<16x96xf32>
    %3 = tpu.matmul %1, %2, %cst {dimension_numbers = #tpu.dot_dimension_numbers<[1], [0], [0], [1], [0, 0, 1, 1], [], []>} : vector<16x32xbf16>, vector<32x96xbf16>, vector<16x96xf32> -> vector<16x96xf32>
    %c0_3 = arith.constant 0 : index
    %c0_4 = arith.constant 0 : index
    %4 = vector.load %arg3[%c0_3, %c0_4] : memref<1x96xf32, #tpu.memory_space<vmem>>, vector<1x96xf32>
    %5 = vector.broadcast %4 : vector<1x96xf32> to vector<16x96xf32>
    %6 = arith.addf %3, %5 : vector<16x96xf32>
    %7 = arith.truncf %6 : vector<16x96xf32> to vector<16x96xbf16>
    %8 = vector.extract_strided_slice %7 {offsets = [0, 0], sizes = [16, 32], strides = [1, 1]} : vector<16x96xbf16> to vector<16x32xbf16>
    %9 = vector.extract_strided_slice %7 {offsets = [0, 32], sizes = [16, 32], strides = [1, 1]} : vector<16x96xbf16> to vector<16x32xbf16>
    %10 = vector.extract_strided_slice %7 {offsets = [0, 64], sizes = [16, 32], strides = [1, 1]} : vector<16x96xbf16> to vector<16x32xbf16>
    %11 = vector.extract_strided_slice %8 {offsets = [0, 0], sizes = [8, 32], strides = [1, 1]} : vector<16x32xbf16> to vector<8x32xbf16>
    %12 = vector.extract_strided_slice %9 {offsets = [0, 0], sizes = [8, 32], strides = [1, 1]} : vector<16x32xbf16> to vector<8x32xbf16>
    %13 = vector.extract_strided_slice %10 {offsets = [0, 0], sizes = [8, 32], strides = [1, 1]} : vector<16x32xbf16> to vector<8x32xbf16>
    %14 = vector.extract_strided_slice %11 {offsets = [0, 0], sizes = [8, 8], strides = [1, 1]} : vector<8x32xbf16> to vector<8x8xbf16>
    %15 = vector.extract_strided_slice %12 {offsets = [0, 0], sizes = [8, 8], strides = [1, 1]} : vector<8x32xbf16> to vector<8x8xbf16>
    %cst_5 = arith.constant dense<0.000000e+00> : vector<8x8xf32>
    %16 = tpu.matmul %14, %15, %cst_5 {dimension_numbers = #tpu.dot_dimension_numbers<[1], [1], [0], [0], [0, 0, 1, 0], [], []>} : vector<8x8xbf16>, vector<8x8xbf16>, vector<8x8xf32> -> vector<8x8xf32>
    %cst_6 = arith.constant 0.353553385 : f32
    %17 = vector.broadcast %cst_6 : f32 to vector<8x8xf32>
    %18 = arith.mulf %16, %17 : vector<8x8xf32>
    %cst_7 = arith.constant dense<0xFF800000> : vector<8xf32>
    %19 = vector.multi_reduction <maximumf>, %18, %cst_7 [1] : vector<8x8xf32> to vector<8xf32>
    %20 = vector.shape_cast %19 : vector<8xf32> to vector<8x1xf32>
    %21 = vector.broadcast %20 : vector<8x1xf32> to vector<8x8xf32>
    %22 = arith.subf %18, %21 : vector<8x8xf32>
    %23 = math.exp %22 : vector<8x8xf32>
    %cst_8 = arith.constant dense<0.000000e+00> : vector<8xf32>
    %24 = vector.multi_reduction <add>, %23, %cst_8 [1] : vector<8x8xf32> to vector<8xf32>
    %25 = vector.shape_cast %24 : vector<8xf32> to vector<8x1xf32>
    %26 = tpu.reciprocal %25 {approx = true} : vector<8x1xf32> -> vector<8x1xf32>
    %27 = vector.broadcast %26 : vector<8x1xf32> to vector<8x8xf32>
    %28 = arith.mulf %23, %27 : vector<8x8xf32>
    %29 = arith.truncf %28 : vector<8x8xf32> to vector<8x8xbf16>
    %30 = vector.extract_strided_slice %13 {offsets = [0, 0], sizes = [8, 8], strides = [1, 1]} : vector<8x32xbf16> to vector<8x8xbf16>
    %cst_9 = arith.constant dense<0.000000e+00> : vector<8x8xf32>
    %31 = tpu.matmul %29, %30, %cst_9 {dimension_numbers = #tpu.dot_dimension_numbers<[1], [0], [0], [1], [0, 0, 1, 1], [], []>} : vector<8x8xbf16>, vector<8x8xbf16>, vector<8x8xf32> -> vector<8x8xf32>
    %32 = vector.extract_strided_slice %11 {offsets = [0, 8], sizes = [8, 8], strides = [1, 1]} : vector<8x32xbf16> to vector<8x8xbf16>
    %33 = vector.extract_strided_slice %12 {offsets = [0, 8], sizes = [8, 8], strides = [1, 1]} : vector<8x32xbf16> to vector<8x8xbf16>
    %cst_10 = arith.constant dense<0.000000e+00> : vector<8x8xf32>
    %34 = tpu.matmul %32, %33, %cst_10 {dimension_numbers = #tpu.dot_dimension_numbers<[1], [1], [0], [0], [0, 0, 1, 0], [], []>} : vector<8x8xbf16>, vector<8x8xbf16>, vector<8x8xf32> -> vector<8x8xf32>
    %cst_11 = arith.constant 0.353553385 : f32
    %35 = vector.broadcast %cst_11 : f32 to vector<8x8xf32>
    %36 = arith.mulf %34, %35 : vector<8x8xf32>
    %cst_12 = arith.constant dense<0xFF800000> : vector<8xf32>
    %37 = vector.multi_reduction <maximumf>, %36, %cst_12 [1] : vector<8x8xf32> to vector<8xf32>
    %38 = vector.shape_cast %37 : vector<8xf32> to vector<8x1xf32>
    %39 = vector.broadcast %38 : vector<8x1xf32> to vector<8x8xf32>
    %40 = arith.subf %36, %39 : vector<8x8xf32>
    %41 = math.exp %40 : vector<8x8xf32>
    %cst_13 = arith.constant dense<0.000000e+00> : vector<8xf32>
    %42 = vector.multi_reduction <add>, %41, %cst_13 [1] : vector<8x8xf32> to vector<8xf32>
    %43 = vector.shape_cast %42 : vector<8xf32> to vector<8x1xf32>
    %44 = tpu.reciprocal %43 {approx = true} : vector<8x1xf32> -> vector<8x1xf32>
    %45 = vector.broadcast %44 : vector<8x1xf32> to vector<8x8xf32>
    %46 = arith.mulf %41, %45 : vector<8x8xf32>
    %47 = arith.truncf %46 : vector<8x8xf32> to vector<8x8xbf16>
    %48 = vector.extract_strided_slice %13 {offsets = [0, 8], sizes = [8, 8], strides = [1, 1]} : vector<8x32xbf16> to vector<8x8xbf16>
    %cst_14 = arith.constant dense<0.000000e+00> : vector<8x8xf32>
    %49 = tpu.matmul %47, %48, %cst_14 {dimension_numbers = #tpu.dot_dimension_numbers<[1], [0], [0], [1], [0, 0, 1, 1], [], []>} : vector<8x8xbf16>, vector<8x8xbf16>, vector<8x8xf32> -> vector<8x8xf32>
    %50 = vector.extract_strided_slice %11 {offsets = [0, 16], sizes = [8, 8], strides = [1, 1]} : vector<8x32xbf16> to vector<8x8xbf16>
    %51 = vector.extract_strided_slice %12 {offsets = [0, 16], sizes = [8, 8], strides = [1, 1]} : vector<8x32xbf16> to vector<8x8xbf16>
    %cst_15 = arith.constant dense<0.000000e+00> : vector<8x8xf32>
    %52 = tpu.matmul %50, %51, %cst_15 {dimension_numbers = #tpu.dot_dimension_numbers<[1], [1], [0], [0], [0, 0, 1, 0], [], []>} : vector<8x8xbf16>, vector<8x8xbf16>, vector<8x8xf32> -> vector<8x8xf32>
    %cst_16 = arith.constant 0.353553385 : f32
    %53 = vector.broadcast %cst_16 : f32 to vector<8x8xf32>
    %54 = arith.mulf %52, %53 : vector<8x8xf32>
    %cst_17 = arith.constant dense<0xFF800000> : vector<8xf32>
    %55 = vector.multi_reduction <maximumf>, %54, %cst_17 [1] : vector<8x8xf32> to vector<8xf32>
    %56 = vector.shape_cast %55 : vector<8xf32> to vector<8x1xf32>
    %57 = vector.broadcast %56 : vector<8x1xf32> to vector<8x8xf32>
    %58 = arith.subf %54, %57 : vector<8x8xf32>
    %59 = math.exp %58 : vector<8x8xf32>
    %cst_18 = arith.constant dense<0.000000e+00> : vector<8xf32>
    %60 = vector.multi_reduction <add>, %59, %cst_18 [1] : vector<8x8xf32> to vector<8xf32>
    %61 = vector.shape_cast %60 : vector<8xf32> to vector<8x1xf32>
    %62 = tpu.reciprocal %61 {approx = true} : vector<8x1xf32> -> vector<8x1xf32>
    %63 = vector.broadcast %62 : vector<8x1xf32> to vector<8x8xf32>
    %64 = arith.mulf %59, %63 : vector<8x8xf32>
    %65 = arith.truncf %64 : vector<8x8xf32> to vector<8x8xbf16>
    %66 = vector.extract_strided_slice %13 {offsets = [0, 16], sizes = [8, 8], strides = [1, 1]} : vector<8x32xbf16> to vector<8x8xbf16>
    %cst_19 = arith.constant dense<0.000000e+00> : vector<8x8xf32>
    %67 = tpu.matmul %65, %66, %cst_19 {dimension_numbers = #tpu.dot_dimension_numbers<[1], [0], [0], [1], [0, 0, 1, 1], [], []>} : vector<8x8xbf16>, vector<8x8xbf16>, vector<8x8xf32> -> vector<8x8xf32>
    %68 = vector.extract_strided_slice %11 {offsets = [0, 24], sizes = [8, 8], strides = [1, 1]} : vector<8x32xbf16> to vector<8x8xbf16>
    %69 = vector.extract_strided_slice %12 {offsets = [0, 24], sizes = [8, 8], strides = [1, 1]} : vector<8x32xbf16> to vector<8x8xbf16>
    %cst_20 = arith.constant dense<0.000000e+00> : vector<8x8xf32>
    %70 = tpu.matmul %68, %69, %cst_20 {dimension_numbers = #tpu.dot_dimension_numbers<[1], [1], [0], [0], [0, 0, 1, 0], [], []>} : vector<8x8xbf16>, vector<8x8xbf16>, vector<8x8xf32> -> vector<8x8xf32>
    %cst_21 = arith.constant 0.353553385 : f32
    %71 = vector.broadcast %cst_21 : f32 to vector<8x8xf32>
    %72 = arith.mulf %70, %71 : vector<8x8xf32>
    %cst_22 = arith.constant dense<0xFF800000> : vector<8xf32>
    %73 = vector.multi_reduction <maximumf>, %72, %cst_22 [1] : vector<8x8xf32> to vector<8xf32>
    %74 = vector.shape_cast %73 : vector<8xf32> to vector<8x1xf32>
    %75 = vector.broadcast %74 : vector<8x1xf32> to vector<8x8xf32>
    %76 = arith.subf %72, %75 : vector<8x8xf32>
    %77 = math.exp %76 : vector<8x8xf32>
    %cst_23 = arith.constant dense<0.000000e+00> : vector<8xf32>
    %78 = vector.multi_reduction <add>, %77, %cst_23 [1] : vector<8x8xf32> to vector<8xf32>
    %79 = vector.shape_cast %78 : vector<8xf32> to vector<8x1xf32>
    %80 = tpu.reciprocal %79 {approx = true} : vector<8x1xf32> -> vector<8x1xf32>
    %81 = vector.broadcast %80 : vector<8x1xf32> to vector<8x8xf32>
    %82 = arith.mulf %77, %81 : vector<8x8xf32>
    %83 = arith.truncf %82 : vector<8x8xf32> to vector<8x8xbf16>
    %84 = vector.extract_strided_slice %13 {offsets = [0, 24], sizes = [8, 8], strides = [1, 1]} : vector<8x32xbf16> to vector<8x8xbf16>
    %cst_24 = arith.constant dense<0.000000e+00> : vector<8x8xf32>
    %85 = tpu.matmul %83, %84, %cst_24 {dimension_numbers = #tpu.dot_dimension_numbers<[1], [0], [0], [1], [0, 0, 1, 1], [], []>} : vector<8x8xbf16>, vector<8x8xbf16>, vector<8x8xf32> -> vector<8x8xf32>
    %86 = tpu.concatenate %31, %49, %67, %85 in 1 : vector<8x8xf32>, vector<8x8xf32>, vector<8x8xf32>, vector<8x8xf32> -> vector<8x32xf32>
    %cst_25 = arith.constant dense<0.000000e+00> : vector<32xf32>
    %87 = vector.multi_reduction <add>, %86, %cst_25 [0] : vector<8x32xf32> to vector<32xf32>
    %88 = vector.shape_cast %87 : vector<32xf32> to vector<1x32xf32>
    %cst_26 = arith.constant 8.000000e+00 : f32
    %89 = vector.broadcast %cst_26 : f32 to vector<1x32xf32>
    %90 = arith.divf %88, %89 : vector<1x32xf32>
    %91 = vector.extract_strided_slice %8 {offsets = [8, 0], sizes = [8, 32], strides = [1, 1]} : vector<16x32xbf16> to vector<8x32xbf16>
    %92 = vector.extract_strided_slice %9 {offsets = [8, 0], sizes = [8, 32], strides = [1, 1]} : vector<16x32xbf16> to vector<8x32xbf16>
    %93 = vector.extract_strided_slice %10 {offsets = [8, 0], sizes = [8, 32], strides = [1, 1]} : vector<16x32xbf16> to vector<8x32xbf16>
    %94 = vector.extract_strided_slice %91 {offsets = [0, 0], sizes = [8, 8], strides = [1, 1]} : vector<8x32xbf16> to vector<8x8xbf16>
    %95 = vector.extract_strided_slice %92 {offsets = [0, 0], sizes = [8, 8], strides = [1, 1]} : vector<8x32xbf16> to vector<8x8xbf16>
    %cst_27 = arith.constant dense<0.000000e+00> : vector<8x8xf32>
    %96 = tpu.matmul %94, %95, %cst_27 {dimension_numbers = #tpu.dot_dimension_numbers<[1], [1], [0], [0], [0, 0, 1, 0], [], []>} : vector<8x8xbf16>, vector<8x8xbf16>, vector<8x8xf32> -> vector<8x8xf32>
    %cst_28 = arith.constant 0.353553385 : f32
    %97 = vector.broadcast %cst_28 : f32 to vector<8x8xf32>
    %98 = arith.mulf %96, %97 : vector<8x8xf32>
    %cst_29 = arith.constant dense<0xFF800000> : vector<8xf32>
    %99 = vector.multi_reduction <maximumf>, %98, %cst_29 [1] : vector<8x8xf32> to vector<8xf32>
    %100 = vector.shape_cast %99 : vector<8xf32> to vector<8x1xf32>
    %101 = vector.broadcast %100 : vector<8x1xf32> to vector<8x8xf32>
    %102 = arith.subf %98, %101 : vector<8x8xf32>
    %103 = math.exp %102 : vector<8x8xf32>
    %cst_30 = arith.constant dense<0.000000e+00> : vector<8xf32>
    %104 = vector.multi_reduction <add>, %103, %cst_30 [1] : vector<8x8xf32> to vector<8xf32>
    %105 = vector.shape_cast %104 : vector<8xf32> to vector<8x1xf32>
    %106 = tpu.reciprocal %105 {approx = true} : vector<8x1xf32> -> vector<8x1xf32>
    %107 = vector.broadcast %106 : vector<8x1xf32> to vector<8x8xf32>
    %108 = arith.mulf %103, %107 : vector<8x8xf32>
    %109 = arith.truncf %108 : vector<8x8xf32> to vector<8x8xbf16>
    %110 = vector.extract_strided_slice %93 {offsets = [0, 0], sizes = [8, 8], strides = [1, 1]} : vector<8x32xbf16> to vector<8x8xbf16>
    %cst_31 = arith.constant dense<0.000000e+00> : vector<8x8xf32>
    %111 = tpu.matmul %109, %110, %cst_31 {dimension_numbers = #tpu.dot_dimension_numbers<[1], [0], [0], [1], [0, 0, 1, 1], [], []>} : vector<8x8xbf16>, vector<8x8xbf16>, vector<8x8xf32> -> vector<8x8xf32>
    %112 = vector.extract_strided_slice %91 {offsets = [0, 8], sizes = [8, 8], strides = [1, 1]} : vector<8x32xbf16> to vector<8x8xbf16>
    %113 = vector.extract_strided_slice %92 {offsets = [0, 8], sizes = [8, 8], strides = [1, 1]} : vector<8x32xbf16> to vector<8x8xbf16>
    %cst_32 = arith.constant dense<0.000000e+00> : vector<8x8xf32>
    %114 = tpu.matmul %112, %113, %cst_32 {dimension_numbers = #tpu.dot_dimension_numbers<[1], [1], [0], [0], [0, 0, 1, 0], [], []>} : vector<8x8xbf16>, vector<8x8xbf16>, vector<8x8xf32> -> vector<8x8xf32>
    %cst_33 = arith.constant 0.353553385 : f32
    %115 = vector.broadcast %cst_33 : f32 to vector<8x8xf32>
    %116 = arith.mulf %114, %115 : vector<8x8xf32>
    %cst_34 = arith.constant dense<0xFF800000> : vector<8xf32>
    %117 = vector.multi_reduction <maximumf>, %116, %cst_34 [1] : vector<8x8xf32> to vector<8xf32>
    %118 = vector.shape_cast %117 : vector<8xf32> to vector<8x1xf32>
    %119 = vector.broadcast %118 : vector<8x1xf32> to vector<8x8xf32>
    %120 = arith.subf %116, %119 : vector<8x8xf32>
    %121 = math.exp %120 : vector<8x8xf32>
    %cst_35 = arith.constant dense<0.000000e+00> : vector<8xf32>
    %122 = vector.multi_reduction <add>, %121, %cst_35 [1] : vector<8x8xf32> to vector<8xf32>
    %123 = vector.shape_cast %122 : vector<8xf32> to vector<8x1xf32>
    %124 = tpu.reciprocal %123 {approx = true} : vector<8x1xf32> -> vector<8x1xf32>
    %125 = vector.broadcast %124 : vector<8x1xf32> to vector<8x8xf32>
    %126 = arith.mulf %121, %125 : vector<8x8xf32>
    %127 = arith.truncf %126 : vector<8x8xf32> to vector<8x8xbf16>
    %128 = vector.extract_strided_slice %93 {offsets = [0, 8], sizes = [8, 8], strides = [1, 1]} : vector<8x32xbf16> to vector<8x8xbf16>
    %cst_36 = arith.constant dense<0.000000e+00> : vector<8x8xf32>
    %129 = tpu.matmul %127, %128, %cst_36 {dimension_numbers = #tpu.dot_dimension_numbers<[1], [0], [0], [1], [0, 0, 1, 1], [], []>} : vector<8x8xbf16>, vector<8x8xbf16>, vector<8x8xf32> -> vector<8x8xf32>
    %130 = vector.extract_strided_slice %91 {offsets = [0, 16], sizes = [8, 8], strides = [1, 1]} : vector<8x32xbf16> to vector<8x8xbf16>
    %131 = vector.extract_strided_slice %92 {offsets = [0, 16], sizes = [8, 8], strides = [1, 1]} : vector<8x32xbf16> to vector<8x8xbf16>
    %cst_37 = arith.constant dense<0.000000e+00> : vector<8x8xf32>
    %132 = tpu.matmul %130, %131, %cst_37 {dimension_numbers = #tpu.dot_dimension_numbers<[1], [1], [0], [0], [0, 0, 1, 0], [], []>} : vector<8x8xbf16>, vector<8x8xbf16>, vector<8x8xf32> -> vector<8x8xf32>
    %cst_38 = arith.constant 0.353553385 : f32
    %133 = vector.broadcast %cst_38 : f32 to vector<8x8xf32>
    %134 = arith.mulf %132, %133 : vector<8x8xf32>
    %cst_39 = arith.constant dense<0xFF800000> : vector<8xf32>
    %135 = vector.multi_reduction <maximumf>, %134, %cst_39 [1] : vector<8x8xf32> to vector<8xf32>
    %136 = vector.shape_cast %135 : vector<8xf32> to vector<8x1xf32>
    %137 = vector.broadcast %136 : vector<8x1xf32> to vector<8x8xf32>
    %138 = arith.subf %134, %137 : vector<8x8xf32>
    %139 = math.exp %138 : vector<8x8xf32>
    %cst_40 = arith.constant dense<0.000000e+00> : vector<8xf32>
    %140 = vector.multi_reduction <add>, %139, %cst_40 [1] : vector<8x8xf32> to vector<8xf32>
    %141 = vector.shape_cast %140 : vector<8xf32> to vector<8x1xf32>
    %142 = tpu.reciprocal %141 {approx = true} : vector<8x1xf32> -> vector<8x1xf32>
    %143 = vector.broadcast %142 : vector<8x1xf32> to vector<8x8xf32>
    %144 = arith.mulf %139, %143 : vector<8x8xf32>
    %145 = arith.truncf %144 : vector<8x8xf32> to vector<8x8xbf16>
    %146 = vector.extract_strided_slice %93 {offsets = [0, 16], sizes = [8, 8], strides = [1, 1]} : vector<8x32xbf16> to vector<8x8xbf16>
    %cst_41 = arith.constant dense<0.000000e+00> : vector<8x8xf32>
    %147 = tpu.matmul %145, %146, %cst_41 {dimension_numbers = #tpu.dot_dimension_numbers<[1], [0], [0], [1], [0, 0, 1, 1], [], []>} : vector<8x8xbf16>, vector<8x8xbf16>, vector<8x8xf32> -> vector<8x8xf32>
    %148 = vector.extract_strided_slice %91 {offsets = [0, 24], sizes = [8, 8], strides = [1, 1]} : vector<8x32xbf16> to vector<8x8xbf16>
    %149 = vector.extract_strided_slice %92 {offsets = [0, 24], sizes = [8, 8], strides = [1, 1]} : vector<8x32xbf16> to vector<8x8xbf16>
    %cst_42 = arith.constant dense<0.000000e+00> : vector<8x8xf32>
    %150 = tpu.matmul %148, %149, %cst_42 {dimension_numbers = #tpu.dot_dimension_numbers<[1], [1], [0], [0], [0, 0, 1, 0], [], []>} : vector<8x8xbf16>, vector<8x8xbf16>, vector<8x8xf32> -> vector<8x8xf32>
    %cst_43 = arith.constant 0.353553385 : f32
    %151 = vector.broadcast %cst_43 : f32 to vector<8x8xf32>
    %152 = arith.mulf %150, %151 : vector<8x8xf32>
    %cst_44 = arith.constant dense<0xFF800000> : vector<8xf32>
    %153 = vector.multi_reduction <maximumf>, %152, %cst_44 [1] : vector<8x8xf32> to vector<8xf32>
    %154 = vector.shape_cast %153 : vector<8xf32> to vector<8x1xf32>
    %155 = vector.broadcast %154 : vector<8x1xf32> to vector<8x8xf32>
    %156 = arith.subf %152, %155 : vector<8x8xf32>
    %157 = math.exp %156 : vector<8x8xf32>
    %cst_45 = arith.constant dense<0.000000e+00> : vector<8xf32>
    %158 = vector.multi_reduction <add>, %157, %cst_45 [1] : vector<8x8xf32> to vector<8xf32>
    %159 = vector.shape_cast %158 : vector<8xf32> to vector<8x1xf32>
    %160 = tpu.reciprocal %159 {approx = true} : vector<8x1xf32> -> vector<8x1xf32>
    %161 = vector.broadcast %160 : vector<8x1xf32> to vector<8x8xf32>
    %162 = arith.mulf %157, %161 : vector<8x8xf32>
    %163 = arith.truncf %162 : vector<8x8xf32> to vector<8x8xbf16>
    %164 = vector.extract_strided_slice %93 {offsets = [0, 24], sizes = [8, 8], strides = [1, 1]} : vector<8x32xbf16> to vector<8x8xbf16>
    %cst_46 = arith.constant dense<0.000000e+00> : vector<8x8xf32>
    %165 = tpu.matmul %163, %164, %cst_46 {dimension_numbers = #tpu.dot_dimension_numbers<[1], [0], [0], [1], [0, 0, 1, 1], [], []>} : vector<8x8xbf16>, vector<8x8xbf16>, vector<8x8xf32> -> vector<8x8xf32>
    %166 = tpu.concatenate %111, %129, %147, %165 in 1 : vector<8x8xf32>, vector<8x8xf32>, vector<8x8xf32>, vector<8x8xf32> -> vector<8x32xf32>
    %cst_47 = arith.constant dense<0.000000e+00> : vector<32xf32>
    %167 = vector.multi_reduction <add>, %166, %cst_47 [0] : vector<8x32xf32> to vector<32xf32>
    %168 = vector.shape_cast %167 : vector<32xf32> to vector<1x32xf32>
    %cst_48 = arith.constant 8.000000e+00 : f32
    %169 = vector.broadcast %cst_48 : f32 to vector<1x32xf32>
    %170 = arith.divf %168, %169 : vector<1x32xf32>
    %171 = tpu.concatenate %86, %166 in 0 : vector<8x32xf32>, vector<8x32xf32> -> vector<16x32xf32>
    %172 = tpu.concatenate %90, %170 in 0 : vector<1x32xf32>, vector<1x32xf32> -> vector<2x32xf32>
    %173 = arith.truncf %171 : vector<16x32xf32> to vector<16x32xbf16>
    %174 = tpu.iota {dimensions = array<i32: 0>} : vector<8x1xi32>
    %175 = tpu.concatenate %174, %174 in 0 : vector<8x1xi32>, vector<8x1xi32> -> vector<16x1xi32>
    %c0_49 = arith.constant 0 : index
    %c0_50 = arith.constant 0 : index
    %176 = vector.load %arg10[%c0_49, %c0_50] : memref<32x96xbf16, #tpu.memory_space<vmem>>, vector<32x96xbf16>
    %cst_51 = arith.constant dense<0.000000e+00> : vector<16x96xf32>
    %177 = tpu.matmul %173, %176, %cst_51 {dimension_numbers = #tpu.dot_dimension_numbers<[1], [0], [0], [1], [0, 0, 1, 1], [], []>} : vector<16x32xbf16>, vector<32x96xbf16>, vector<16x96xf32> -> vector<16x96xf32>
    %178 = vector.extract_strided_slice %177 {offsets = [0, 0], sizes = [16, 32], strides = [1, 1]} : vector<16x96xf32> to vector<16x32xf32>
    %179 = vector.extract_strided_slice %177 {offsets = [0, 32], sizes = [16, 32], strides = [1, 1]} : vector<16x96xf32> to vector<16x32xf32>
    %180 = vector.extract_strided_slice %177 {offsets = [0, 64], sizes = [16, 32], strides = [1, 1]} : vector<16x96xf32> to vector<16x32xf32>
    %c0_52 = arith.constant 0 : index
    %c0_53 = arith.constant 0 : index
    %181 = vector.load %arg15[%c0_52, %c0_53] : memref<1x32xf32, #tpu.memory_space<vmem>>, vector<1x32xf32>
    %182 = vector.broadcast %181 : vector<1x32xf32> to vector<16x32xf32>
    %183 = arith.addf %180, %182 : vector<16x32xf32>
    %cst_54 = arith.constant 0.000000e+00 : f32
    %184 = vector.broadcast %cst_54 : f32 to vector<16x32xf32>
    %185 = arith.maximumf %183, %184 : vector<16x32xf32>
    %c1_i32 = arith.constant 1 : i32
    %186 = tpu.dynamic_rotate %171 by %c1_i32 dim 0 : vector<16x32xf32>, i32 -> vector<16x32xf32>
    %c1_i32_55 = arith.constant 1 : i32
    %187 = vector.broadcast %c1_i32_55 : i32 to vector<16x1xi32>
    %188 = arith.cmpi sge, %175, %187 : vector<16x1xi32>
    %cst_56 = arith.constant 0.000000e+00 : f32
    %189 = vector.shape_cast %188 : vector<16x1xi1> to vector<16x1xi1>
    %190 = vector.broadcast %189 : vector<16x1xi1> to vector<16x32xi1>
    %191 = vector.broadcast %cst_56 : f32 to vector<16x32xf32>
    %192 = arith.select %190, %186, %191 : vector<16x32xi1>, vector<16x32xf32>
    %193 = arith.truncf %192 : vector<16x32xf32> to vector<16x32xbf16>
    %c0_57 = arith.constant 0 : index
    %c0_58 = arith.constant 0 : index
    %194 = vector.load %arg11[%c0_57, %c0_58] : memref<32x64xbf16, #tpu.memory_space<vmem>>, vector<32x64xbf16>
    %cst_59 = arith.constant dense<0.000000e+00> : vector<16x64xf32>
    %195 = tpu.matmul %193, %194, %cst_59 {dimension_numbers = #tpu.dot_dimension_numbers<[1], [0], [0], [1], [0, 0, 1, 1], [], []>} : vector<16x32xbf16>, vector<32x64xbf16>, vector<16x64xf32> -> vector<16x64xf32>
    %c15_i32 = arith.constant 15 : i32
    %196 = tpu.dynamic_rotate %171 by %c15_i32 dim 0 : vector<16x32xf32>, i32 -> vector<16x32xf32>
    %c7_i32 = arith.constant 7 : i32
    %197 = vector.broadcast %c7_i32 : i32 to vector<16x1xi32>
    %198 = arith.cmpi slt, %175, %197 : vector<16x1xi32>
    %cst_60 = arith.constant 0.000000e+00 : f32
    %199 = vector.shape_cast %198 : vector<16x1xi1> to vector<16x1xi1>
    %200 = vector.broadcast %199 : vector<16x1xi1> to vector<16x32xi1>
    %201 = vector.broadcast %cst_60 : f32 to vector<16x32xf32>
    %202 = arith.select %200, %196, %201 : vector<16x32xi1>, vector<16x32xf32>
    %203 = arith.truncf %202 : vector<16x32xf32> to vector<16x32xbf16>
    %c0_61 = arith.constant 0 : index
    %c0_62 = arith.constant 0 : index
    %204 = vector.load %arg12[%c0_61, %c0_62] : memref<32x64xbf16, #tpu.memory_space<vmem>>, vector<32x64xbf16>
    %cst_63 = arith.constant dense<0.000000e+00> : vector<16x64xf32>
    %205 = tpu.matmul %203, %204, %cst_63 {dimension_numbers = #tpu.dot_dimension_numbers<[1], [0], [0], [1], [0, 0, 1, 1], [], []>} : vector<16x32xbf16>, vector<32x64xbf16>, vector<16x64xf32> -> vector<16x64xf32>
    %206 = vector.extract_strided_slice %195 {offsets = [0, 0], sizes = [16, 32], strides = [1, 1]} : vector<16x64xf32> to vector<16x32xf32>
    %207 = arith.addf %178, %206 : vector<16x32xf32>
    %208 = vector.extract_strided_slice %205 {offsets = [0, 0], sizes = [16, 32], strides = [1, 1]} : vector<16x64xf32> to vector<16x32xf32>
    %209 = arith.addf %207, %208 : vector<16x32xf32>
    %210 = vector.extract_strided_slice %195 {offsets = [0, 32], sizes = [16, 32], strides = [1, 1]} : vector<16x64xf32> to vector<16x32xf32>
    %211 = arith.addf %179, %210 : vector<16x32xf32>
    %212 = vector.extract_strided_slice %205 {offsets = [0, 32], sizes = [16, 32], strides = [1, 1]} : vector<16x64xf32> to vector<16x32xf32>
    %213 = arith.addf %211, %212 : vector<16x32xf32>
    %c2_i32 = arith.constant 2 : i32
    %214 = tpu.dynamic_rotate %171 by %c2_i32 dim 0 : vector<16x32xf32>, i32 -> vector<16x32xf32>
    %c2_i32_64 = arith.constant 2 : i32
    %215 = vector.broadcast %c2_i32_64 : i32 to vector<16x1xi32>
    %216 = arith.cmpi sge, %175, %215 : vector<16x1xi32>
    %cst_65 = arith.constant 0.000000e+00 : f32
    %217 = vector.shape_cast %216 : vector<16x1xi1> to vector<16x1xi1>
    %218 = vector.broadcast %217 : vector<16x1xi1> to vector<16x32xi1>
    %219 = vector.broadcast %cst_65 : f32 to vector<16x32xf32>
    %220 = arith.select %218, %214, %219 : vector<16x32xi1>, vector<16x32xf32>
    %221 = arith.truncf %220 : vector<16x32xf32> to vector<16x32xbf16>
    %c0_66 = arith.constant 0 : index
    %c0_67 = arith.constant 0 : index
    %222 = vector.load %arg13[%c0_66, %c0_67] : memref<32x32xbf16, #tpu.memory_space<vmem>>, vector<32x32xbf16>
    %cst_68 = arith.constant dense<0.000000e+00> : vector<16x32xf32>
    %223 = tpu.matmul %221, %222, %cst_68 {dimension_numbers = #tpu.dot_dimension_numbers<[1], [0], [0], [1], [0, 0, 1, 1], [], []>} : vector<16x32xbf16>, vector<32x32xbf16>, vector<16x32xf32> -> vector<16x32xf32>
    %224 = arith.addf %213, %223 : vector<16x32xf32>
    %c14_i32 = arith.constant 14 : i32
    %225 = tpu.dynamic_rotate %171 by %c14_i32 dim 0 : vector<16x32xf32>, i32 -> vector<16x32xf32>
    %c6_i32 = arith.constant 6 : i32
    %226 = vector.broadcast %c6_i32 : i32 to vector<16x1xi32>
    %227 = arith.cmpi slt, %175, %226 : vector<16x1xi32>
    %cst_69 = arith.constant 0.000000e+00 : f32
    %228 = vector.shape_cast %227 : vector<16x1xi1> to vector<16x1xi1>
    %229 = vector.broadcast %228 : vector<16x1xi1> to vector<16x32xi1>
    %230 = vector.broadcast %cst_69 : f32 to vector<16x32xf32>
    %231 = arith.select %229, %225, %230 : vector<16x32xi1>, vector<16x32xf32>
    %232 = arith.truncf %231 : vector<16x32xf32> to vector<16x32xbf16>
    %c0_70 = arith.constant 0 : index
    %c0_71 = arith.constant 0 : index
    %233 = vector.load %arg14[%c0_70, %c0_71] : memref<32x32xbf16, #tpu.memory_space<vmem>>, vector<32x32xbf16>
    %cst_72 = arith.constant dense<0.000000e+00> : vector<16x32xf32>
    %234 = tpu.matmul %232, %233, %cst_72 {dimension_numbers = #tpu.dot_dimension_numbers<[1], [0], [0], [1], [0, 0, 1, 1], [], []>} : vector<16x32xbf16>, vector<32x32xbf16>, vector<16x32xf32> -> vector<16x32xf32>
    %235 = arith.addf %224, %234 : vector<16x32xf32>
    %c0_73 = arith.constant 0 : index
    %c0_74 = arith.constant 0 : index
    %236 = vector.load %arg16[%c0_73, %c0_74] : memref<1x32xf32, #tpu.memory_space<vmem>>, vector<1x32xf32>
    %237 = vector.broadcast %236 : vector<1x32xf32> to vector<16x32xf32>
    %238 = arith.addf %209, %237 : vector<16x32xf32>
    %cst_75 = arith.constant 0.000000e+00 : f32
    %239 = vector.broadcast %cst_75 : f32 to vector<16x32xf32>
    %240 = arith.maximumf %238, %239 : vector<16x32xf32>
    %c0_76 = arith.constant 0 : index
    %c0_77 = arith.constant 0 : index
    %241 = vector.load %arg17[%c0_76, %c0_77] : memref<1x32xf32, #tpu.memory_space<vmem>>, vector<1x32xf32>
    %242 = vector.broadcast %241 : vector<1x32xf32> to vector<16x32xf32>
    %243 = arith.addf %235, %242 : vector<16x32xf32>
    %cst_78 = arith.constant 0.000000e+00 : f32
    %244 = vector.broadcast %cst_78 : f32 to vector<16x32xf32>
    %245 = arith.maximumf %243, %244 : vector<16x32xf32>
    %246 = arith.truncf %240 : vector<16x32xf32> to vector<16x32xbf16>
    %c0_79 = arith.constant 0 : index
    %c0_80 = arith.constant 0 : index
    %247 = vector.load %arg18[%c0_79, %c0_80] : memref<32x32xbf16, #tpu.memory_space<vmem>>, vector<32x32xbf16>
    %cst_81 = arith.constant dense<0.000000e+00> : vector<16x32xf32>
    %248 = tpu.matmul %246, %247, %cst_81 {dimension_numbers = #tpu.dot_dimension_numbers<[1], [0], [0], [1], [0, 0, 1, 1], [], []>} : vector<16x32xbf16>, vector<32x32xbf16>, vector<16x32xf32> -> vector<16x32xf32>
    %249 = arith.truncf %245 : vector<16x32xf32> to vector<16x32xbf16>
    %c0_82 = arith.constant 0 : index
    %c0_83 = arith.constant 0 : index
    %250 = vector.load %arg19[%c0_82, %c0_83] : memref<32x32xbf16, #tpu.memory_space<vmem>>, vector<32x32xbf16>
    %cst_84 = arith.constant dense<0.000000e+00> : vector<16x32xf32>
    %251 = tpu.matmul %249, %250, %cst_84 {dimension_numbers = #tpu.dot_dimension_numbers<[1], [0], [0], [1], [0, 0, 1, 1], [], []>} : vector<16x32xbf16>, vector<32x32xbf16>, vector<16x32xf32> -> vector<16x32xf32>
    %252 = arith.addf %248, %251 : vector<16x32xf32>
    %253 = arith.truncf %185 : vector<16x32xf32> to vector<16x32xbf16>
    %c0_85 = arith.constant 0 : index
    %c0_86 = arith.constant 0 : index
    %254 = vector.load %arg20[%c0_85, %c0_86] : memref<32x32xbf16, #tpu.memory_space<vmem>>, vector<32x32xbf16>
    %cst_87 = arith.constant dense<0.000000e+00> : vector<16x32xf32>
    %255 = tpu.matmul %253, %254, %cst_87 {dimension_numbers = #tpu.dot_dimension_numbers<[1], [0], [0], [1], [0, 0, 1, 1], [], []>} : vector<16x32xbf16>, vector<32x32xbf16>, vector<16x32xf32> -> vector<16x32xf32>
    %256 = arith.addf %252, %255 : vector<16x32xf32>
    %c0_88 = arith.constant 0 : index
    %c0_89 = arith.constant 0 : index
    %257 = vector.load %arg21[%c0_88, %c0_89] : memref<1x32xf32, #tpu.memory_space<vmem>>, vector<1x32xf32>
    %258 = vector.broadcast %257 : vector<1x32xf32> to vector<16x32xf32>
    %259 = arith.addf %256, %258 : vector<16x32xf32>
    %cst_90 = arith.constant 0.000000e+00 : f32
    %260 = vector.broadcast %cst_90 : f32 to vector<16x32xf32>
    %261 = arith.maximumf %259, %260 : vector<16x32xf32>
    %262 = arith.truncf %172 : vector<2x32xf32> to vector<2x32xbf16>
    %c0_91 = arith.constant 0 : index
    %c0_92 = arith.constant 0 : index
    %263 = vector.load %arg6[%c0_91, %c0_92] : memref<32x16xbf16, #tpu.memory_space<vmem>>, vector<32x16xbf16>
    %cst_93 = arith.constant dense<0.000000e+00> : vector<2x16xf32>
    %264 = tpu.matmul %262, %263, %cst_93 {dimension_numbers = #tpu.dot_dimension_numbers<[1], [0], [0], [1], [0, 0, 1, 1], [], []>} : vector<2x32xbf16>, vector<32x16xbf16>, vector<2x16xf32> -> vector<2x16xf32>
    %c0_94 = arith.constant 0 : index
    %c0_95 = arith.constant 0 : index
    %265 = vector.load %arg7[%c0_94, %c0_95] : memref<1x16xf32, #tpu.memory_space<vmem>>, vector<1x16xf32>
    %266 = vector.broadcast %265 : vector<1x16xf32> to vector<2x16xf32>
    %267 = arith.addf %264, %266 : vector<2x16xf32>
    %cst_96 = arith.constant 0.000000e+00 : f32
    %268 = vector.broadcast %cst_96 : f32 to vector<2x16xf32>
    %269 = arith.maximumf %267, %268 : vector<2x16xf32>
    %270 = arith.truncf %269 : vector<2x16xf32> to vector<2x16xbf16>
    %c0_97 = arith.constant 0 : index
    %c0_98 = arith.constant 0 : index
    %271 = vector.load %arg8[%c0_97, %c0_98] : memref<16x1xbf16, #tpu.memory_space<vmem>>, vector<16x1xbf16>
    %cst_99 = arith.constant dense<0.000000e+00> : vector<2x1xf32>
    %272 = tpu.matmul %270, %271, %cst_99 {dimension_numbers = #tpu.dot_dimension_numbers<[1], [0], [0], [1], [0, 0, 1, 1], [], []>} : vector<2x16xbf16>, vector<16x1xbf16>, vector<2x1xf32> -> vector<2x1xf32>
    %c0_100 = arith.constant 0 : index
    %c0_101 = arith.constant 0 : index
    %273 = vector.load %arg9[%c0_100, %c0_101] : memref<1x1xf32, #tpu.memory_space<vmem>>, vector<1x1xf32>
    %274 = vector.broadcast %273 : vector<1x1xf32> to vector<2x1xf32>
    %275 = arith.addf %272, %274 : vector<2x1xf32>
    %276 = arith.negf %275 : vector<2x1xf32>
    %277 = math.exp %276 : vector<2x1xf32>
    %cst_102 = arith.constant 1.000000e+00 : f32
    %278 = vector.broadcast %cst_102 : f32 to vector<2x1xf32>
    %279 = arith.addf %278, %277 : vector<2x1xf32>
    %280 = arith.divf %278, %279 : vector<2x1xf32>
    %281 = vector.extract_strided_slice %280 {offsets = [0, 0], sizes = [1, 1], strides = [1, 1]} : vector<2x1xf32> to vector<1x1xf32>
    %282 = vector.shape_cast %281 : vector<1x1xf32> to vector<1x1xf32>
    %283 = vector.broadcast %282 : vector<1x1xf32> to vector<8x1xf32>
    %284 = vector.extract_strided_slice %280 {offsets = [1, 0], sizes = [1, 1], strides = [1, 1]} : vector<2x1xf32> to vector<1x1xf32>
    %285 = vector.shape_cast %284 : vector<1x1xf32> to vector<1x1xf32>
    %286 = vector.broadcast %285 : vector<1x1xf32> to vector<8x1xf32>
    %287 = tpu.concatenate %283, %286 in 0 : vector<8x1xf32>, vector<8x1xf32> -> vector<16x1xf32>
    %288 = vector.broadcast %287 : vector<16x1xf32> to vector<16x32xf32>
    %289 = arith.mulf %288, %261 : vector<16x32xf32>
    %cst_103 = arith.constant 1.000000e+00 : f32
    %290 = vector.broadcast %cst_103 : f32 to vector<16x1xf32>
    %291 = arith.subf %290, %287 : vector<16x1xf32>
    %292 = vector.broadcast %291 : vector<16x1xf32> to vector<16x32xf32>
    %293 = arith.mulf %292, %171 : vector<16x32xf32>
    %294 = arith.addf %289, %293 : vector<16x32xf32>
    %295 = arith.truncf %294 : vector<16x32xf32> to vector<16x32xbf16>
    %c0_104 = arith.constant 0 : index
    %c0_105 = arith.constant 0 : index
    %296 = vector.load %arg4[%c0_104, %c0_105] : memref<32x32xbf16, #tpu.memory_space<vmem>>, vector<32x32xbf16>
    %cst_106 = arith.constant dense<0.000000e+00> : vector<16x32xf32>
    %297 = tpu.matmul %295, %296, %cst_106 {dimension_numbers = #tpu.dot_dimension_numbers<[1], [0], [0], [1], [0, 0, 1, 1], [], []>} : vector<16x32xbf16>, vector<32x32xbf16>, vector<16x32xf32> -> vector<16x32xf32>
    %c0_107 = arith.constant 0 : index
    %c0_108 = arith.constant 0 : index
    %298 = vector.load %arg5[%c0_107, %c0_108] : memref<1x32xf32, #tpu.memory_space<vmem>>, vector<1x32xf32>
    %299 = vector.broadcast %298 : vector<1x32xf32> to vector<16x32xf32>
    %300 = arith.addf %297, %299 : vector<16x32xf32>
    %301 = arith.addf %0, %300 : vector<16x32xf32>
    %cst_109 = arith.constant dense<0.000000e+00> : vector<16xf32>
    %302 = vector.multi_reduction <add>, %301, %cst_109 [1] : vector<16x32xf32> to vector<16xf32>
    %303 = vector.shape_cast %302 : vector<16xf32> to vector<16x1xf32>
    %cst_110 = arith.constant 3.200000e+01 : f32
    %304 = vector.broadcast %cst_110 : f32 to vector<16x1xf32>
    %305 = arith.divf %303, %304 : vector<16x1xf32>
    %306 = vector.broadcast %305 : vector<16x1xf32> to vector<16x32xf32>
    %307 = arith.subf %301, %306 : vector<16x32xf32>
    %308 = arith.mulf %307, %307 : vector<16x32xf32>
    %cst_111 = arith.constant dense<0.000000e+00> : vector<16xf32>
    %309 = vector.multi_reduction <add>, %308, %cst_111 [1] : vector<16x32xf32> to vector<16xf32>
    %310 = vector.shape_cast %309 : vector<16xf32> to vector<16x1xf32>
    %cst_112 = arith.constant 3.200000e+01 : f32
    %311 = vector.broadcast %cst_112 : f32 to vector<16x1xf32>
    %312 = arith.divf %310, %311 : vector<16x1xf32>
    %313 = vector.broadcast %305 : vector<16x1xf32> to vector<16x32xf32>
    %314 = arith.subf %301, %313 : vector<16x32xf32>
    %cst_113 = arith.constant 9.99999974E-6 : f32
    %315 = vector.broadcast %cst_113 : f32 to vector<16x1xf32>
    %316 = arith.addf %312, %315 : vector<16x1xf32>
    %317 = math.rsqrt %316 : vector<16x1xf32>
    %318 = vector.broadcast %317 : vector<16x1xf32> to vector<16x32xf32>
    %319 = arith.mulf %314, %318 : vector<16x32xf32>
    %c0_114 = arith.constant 0 : index
    %c0_115 = arith.constant 0 : index
    %320 = vector.load %arg22[%c0_114, %c0_115] : memref<1x32xf32, #tpu.memory_space<vmem>>, vector<1x32xf32>
    %321 = vector.broadcast %320 : vector<1x32xf32> to vector<16x32xf32>
    %322 = arith.mulf %319, %321 : vector<16x32xf32>
    %c0_116 = arith.constant 0 : index
    %c0_117 = arith.constant 0 : index
    %323 = vector.load %arg23[%c0_116, %c0_117] : memref<1x32xf32, #tpu.memory_space<vmem>>, vector<1x32xf32>
    %324 = vector.broadcast %323 : vector<1x32xf32> to vector<16x32xf32>
    %325 = arith.addf %322, %324 : vector<16x32xf32>
    %326 = arith.addf %325, %0 : vector<16x32xf32>
    %c0_118 = arith.constant 0 : index
    %c0_119 = arith.constant 0 : index
    %327 = vector.load %arg24[%c0_118, %c0_119] : memref<16x32xf32, #tpu.memory_space<vmem>>, vector<16x32xf32>
    tpu.vector_store %arg24[%c0_118, %c0_119], %326 {strides = array<i32>} : memref<16x32xf32, #tpu.memory_space<vmem>>, vector<16x32xf32>,
    return
  }
  func.func @transform_0(%arg0: i32) -> (i32, i32) {
    %c0_i32 = arith.constant 0 : i32
    %c0_i32_0 = arith.constant 0 : i32
    return %arg0, %c0_i32 : i32, i32
  }
  func.func @transform_1(%arg0: i32) -> (i32, i32) {
    %c0_i32 = arith.constant 0 : i32
    %c0_i32_0 = arith.constant 0 : i32
    %c0_i32_1 = arith.constant 0 : i32
    return %c0_i32, %c0_i32_0 : i32, i32
  }
  func.func @transform_2(%arg0: i32) -> (i32, i32) {
    %c0_i32 = arith.constant 0 : i32
    %c0_i32_0 = arith.constant 0 : i32
    %c0_i32_1 = arith.constant 0 : i32
    return %c0_i32, %c0_i32_0 : i32, i32
  }
  func.func @transform_3(%arg0: i32) -> (i32, i32) {
    %c0_i32 = arith.constant 0 : i32
    %c0_i32_0 = arith.constant 0 : i32
    %c0_i32_1 = arith.constant 0 : i32
    return %c0_i32, %c0_i32_0 : i32, i32
  }
  func.func @transform_4(%arg0: i32) -> (i32, i32) {
    %c0_i32 = arith.constant 0 : i32
    %c0_i32_0 = arith.constant 0 : i32
    %c0_i32_1 = arith.constant 0 : i32
    return %c0_i32, %c0_i32_0 : i32, i32
  }
  func.func @transform_5(%arg0: i32) -> (i32, i32) {
    %c0_i32 = arith.constant 0 : i32
    %c0_i32_0 = arith.constant 0 : i32
    %c0_i32_1 = arith.constant 0 : i32
    return %c0_i32, %c0_i32_0 : i32, i32
  }
  func.func @transform_6(%arg0: i32) -> (i32, i32) {
    %c0_i32 = arith.constant 0 : i32
    %c0_i32_0 = arith.constant 0 : i32
    %c0_i32_1 = arith.constant 0 : i32
    return %c0_i32, %c0_i32_0 : i32, i32
  }
  func.func @transform_7(%arg0: i32) -> (i32, i32) {
    %c0_i32 = arith.constant 0 : i32
    %c0_i32_0 = arith.constant 0 : i32
    %c0_i32_1 = arith.constant 0 : i32
    return %c0_i32, %c0_i32_0 : i32, i32
  }
  func.func @transform_8(%arg0: i32) -> (i32, i32) {
    %c0_i32 = arith.constant 0 : i32
    %c0_i32_0 = arith.constant 0 : i32
    %c0_i32_1 = arith.constant 0 : i32
    return %c0_i32, %c0_i32_0 : i32, i32
  }
  func.func @transform_9(%arg0: i32) -> (i32, i32) {
    %c0_i32 = arith.constant 0 : i32
    %c0_i32_0 = arith.constant 0 : i32
    %c0_i32_1 = arith.constant 0 : i32
    return %c0_i32, %c0_i32_0 : i32, i32
  }
  func.func @transform_10(%arg0: i32) -> (i32, i32) {
    %c0_i32 = arith.constant 0 : i32
    %c0_i32_0 = arith.constant 0 : i32
    %c0_i32_1 = arith.constant 0 : i32
    return %c0_i32, %c0_i32_0 : i32, i32
  }
  func.func @transform_11(%arg0: i32) -> (i32, i32) {
    %c0_i32 = arith.constant 0 : i32
    %c0_i32_0 = arith.constant 0 : i32
    %c0_i32_1 = arith.constant 0 : i32
    return %c0_i32, %c0_i32_0 : i32, i32
  }
  func.func @transform_12(%arg0: i32) -> (i32, i32) {
    %c0_i32 = arith.constant 0 : i32
    %c0_i32_0 = arith.constant 0 : i32
    %c0_i32_1 = arith.constant 0 : i32
    return %c0_i32, %c0_i32_0 : i32, i32
  }
  func.func @transform_13(%arg0: i32) -> (i32, i32) {
    %c0_i32 = arith.constant 0 : i32
    %c0_i32_0 = arith.constant 0 : i32
    %c0_i32_1 = arith.constant 0 : i32
    return %c0_i32, %c0_i32_0 : i32, i32
  }
  func.func @transform_14(%arg0: i32) -> (i32, i32) {
    %c0_i32 = arith.constant 0 : i32
    %c0_i32_0 = arith.constant 0 : i32
    %c0_i32_1 = arith.constant 0 : i32
    return %c0_i32, %c0_i32_0 : i32, i32
  }
  func.func @transform_15(%arg0: i32) -> (i32, i32) {
    %c0_i32 = arith.constant 0 : i32
    %c0_i32_0 = arith.constant 0 : i32
    %c0_i32_1 = arith.constant 0 : i32
    return %c0_i32, %c0_i32_0 : i32, i32
  }
  func.func @transform_16(%arg0: i32) -> (i32, i32) {
    %c0_i32 = arith.constant 0 : i32
    %c0_i32_0 = arith.constant 0 : i32
    %c0_i32_1 = arith.constant 0 : i32
    return %c0_i32, %c0_i32_0 : i32, i32
  }
  func.func @transform_17(%arg0: i32) -> (i32, i32) {
    %c0_i32 = arith.constant 0 : i32
    %c0_i32_0 = arith.constant 0 : i32
    %c0_i32_1 = arith.constant 0 : i32
    return %c0_i32, %c0_i32_0 : i32, i32
  }
  func.func @transform_18(%arg0: i32) -> (i32, i32) {
    %c0_i32 = arith.constant 0 : i32
    %c0_i32_0 = arith.constant 0 : i32
    %c0_i32_1 = arith.constant 0 : i32
    return %c0_i32, %c0_i32_0 : i32, i32
  }
  func.func @transform_19(%arg0: i32) -> (i32, i32) {
    %c0_i32 = arith.constant 0 : i32
    %c0_i32_0 = arith.constant 0 : i32
    %c0_i32_1 = arith.constant 0 : i32
    return %c0_i32, %c0_i32_0 : i32, i32
  }
  func.func @transform_20(%arg0: i32) -> (i32, i32) {
    %c0_i32 = arith.constant 0 : i32
    %c0_i32_0 = arith.constant 0 : i32
    %c0_i32_1 = arith.constant 0 : i32
    return %c0_i32, %c0_i32_0 : i32, i32
  }
  func.func @transform_21(%arg0: i32) -> (i32, i32) {
    %c0_i32 = arith.constant 0 : i32
    %c0_i32_0 = arith.constant 0 : i32
    %c0_i32_1 = arith.constant 0 : i32
    return %c0_i32, %c0_i32_0 : i32, i32
  }
  func.func @transform_22(%arg0: i32) -> (i32, i32) {
    %c0_i32 = arith.constant 0 : i32
    %c0_i32_0 = arith.constant 0 : i32
    %c0_i32_1 = arith.constant 0 : i32
    return %c0_i32, %c0_i32_0 : i32, i32
  }
  func.func @transform_23(%arg0: i32) -> (i32, i32) {
    %c0_i32 = arith.constant 0 : i32
    %c0_i32_0 = arith.constant 0 : i32
    return %arg0, %c0_i32 : i32, i32
  }
}

</mosaic_0001>

<llo_original>
// kernel: tpu_custom_call.1
$region0: #{tpu_custom_call.1}
  #allocation0 [shape = 'u32[]', space=smem, size = 0x4, offset = 0x4, fixed_abs, tag = 'smem constant byte address 0x4 - core index']
  #allocation1 [shape = 'u32[144,128]{1,0:T(1,128)}', space=vmem, size = 0x12000, scoped, tag = 'internal scratch']
  #allocation2 [shape = 'f32[1,1]{1,0:T(1,128)S(1)}', space=vmem, size = 0x200, scoped, tag = 'scoped memory for tpu_custom_call.1']
  %s0 = inlined_call_operand.vmem [shape: f32[16,32], index: 0, kind: input, shape index: {}]
  %s1 = inlined_call_operand.vmem [shape: bf16[32,96], index: 1, kind: input, shape index: {}]
  %s2 = inlined_call_operand.hbm [shape: f32[1,96], index: 2, kind: input, shape index: {}]
  %s3 = inlined_call_operand.vmem [shape: bf16[32,32], index: 3, kind: input, shape index: {}]
  %s4 = inlined_call_operand.vmem [shape: f32[1,32], index: 4, kind: input, shape index: {}]
  %s5 = inlined_call_operand.vmem [shape: bf16[32,16], index: 5, kind: input, shape index: {}]
  %s6 = inlined_call_operand.hbm [shape: f32[1,16], index: 6, kind: input, shape index: {}]
  %s7 = inlined_call_operand.vmem [shape: bf16[16,1], index: 7, kind: input, shape index: {}]
  %s8 = inlined_call_operand.<no memory space> [shape: f32[1,1], index: 8, kind: input, shape index: {}]
  %s9 = inlined_call_operand.vmem [shape: bf16[32,96], index: 9, kind: input, shape index: {}]
  %s10 = inlined_call_operand.hbm [shape: bf16[32,64], index: 10, kind: input, shape index: {}]
  %s11 = inlined_call_operand.hbm [shape: bf16[32,64], index: 11, kind: input, shape index: {}]
  %s12 = inlined_call_operand.hbm [shape: bf16[32,32], index: 12, kind: input, shape index: {}]
  %s13 = inlined_call_operand.vmem [shape: bf16[32,32], index: 13, kind: input, shape index: {}]
  %s14 = inlined_call_operand.hbm [shape: f32[1,32], index: 14, kind: input, shape index: {}]
  %s15 = inlined_call_operand.hbm [shape: f32[1,32], index: 15, kind: input, shape index: {}]
  %s16 = inlined_call_operand.hbm [shape: f32[1,32], index: 16, kind: input, shape index: {}]
  %s17 = inlined_call_operand.vmem [shape: bf16[32,32], index: 17, kind: input, shape index: {}]
  %s18 = inlined_call_operand.hbm [shape: bf16[32,32], index: 18, kind: input, shape index: {}]
  %s19 = inlined_call_operand.hbm [shape: bf16[32,32], index: 19, kind: input, shape index: {}]
  %s20 = inlined_call_operand.vmem [shape: f32[1,32], index: 20, kind: input, shape index: {}]
  %s21 = inlined_call_operand.vmem [shape: f32[1,32], index: 21, kind: input, shape index: {}]
  %s22 = inlined_call_operand.vmem [shape: f32[1,32], index: 22, kind: input, shape index: {}]
  %s23 = inlined_call_operand.hbm [shape: f32[16,32], index: 23, kind: output, shape index: {}]
  %s24 = sld [smem:[#allocation0]]
  $region142: #{tpu_custom_call.1} parent=0
    _
  %s26 = ssub.s32 1, %s24
  %s27 = scalar_select 0, %s26, %s24
  %v28 = vstv %s8
  %29 = vst [vmem:[#allocation2] sm:$0x1] %v28
  $region1: #{tpu_custom_call.1} parent=0
    #allocation3 [shape = 'u8[512]{0}', space=vmem, size = 0x400, scoped, tag = 'input window, operand 2, single buffered']
    #allocation4 [shape = 's32[1]{0}', space=sflag, size = 0x4, scoped, tag = 'scoped memory for tpu_custom_call.1']
    #allocation5 [shape = 's32[1]{0}', space=sflag, size = 0x4, scoped, tag = 'scoped memory for tpu_custom_call.1']
    #allocation6 [shape = 'u8[512]{0}', space=vmem, size = 0x400, scoped, tag = 'input window, operand 6, single buffered']
    #allocation7 [shape = 's32[1]{0}', space=sflag, size = 0x4, scoped, tag = 'scoped memory for tpu_custom_call.1']
    #allocation8 [shape = 'u8[8192]{0}', space=vmem, size = 0x2000, scoped, tag = 'input window, operand 10, single buffered']
    #allocation9 [shape = 'u8[8192]{0}', space=vmem, size = 0x2000, scoped, tag = 'input window, operand 11, single buffered']
    #allocation10 [shape = 's32[1]{0}', space=sflag, size = 0x4, scoped, tag = 'scoped memory for tpu_custom_call.1']
    #allocation11 [shape = 'u8[8192]{0}', space=vmem, size = 0x2000, scoped, tag = 'input window, operand 12, single buffered']
    #allocation12 [shape = 'u8[512]{0}', space=vmem, size = 0x400, scoped, tag = 'input window, operand 14, single buffered']
    #allocation13 [shape = 's32[1]{0}', space=sflag, size = 0x4, scoped, tag = 'scoped memory for tpu_custom_call.1']
    #allocation14 [shape = 'u8[512]{0}', space=vmem, size = 0x400, scoped, tag = 'input window, operand 15, single buffered']
    #allocation15 [shape = 'u8[512]{0}', space=vmem, size = 0x400, scoped, tag = 'input window, operand 16, single buffered']
    #allocation16 [shape = 's32[1]{0}', space=sflag, size = 0x4, scoped, tag = 'scoped memory for tpu_custom_call.1']
    #allocation17 [shape = 'u8[8192]{0}', space=vmem, size = 0x2000, scoped, tag = 'input window, operand 18, single buffered']
    #allocation18 [shape = 'u8[8192]{0}', space=vmem, size = 0x2000, scoped, tag = 'input window, operand 19, single buffered']
    #allocation19 [shape = 's32[1]{0}', space=sflag, size = 0x4, scoped, tag = 'scoped memory for tpu_custom_call.1']
    #allocation20 [shape = 'u8[8192]{0}', space=vmem, size = 0x2000, scoped, tag = 'output window, operand 0, single buffered']
    %30 = vsyncpa [#allocation4], 0
    %31 = vsyncpa [#allocation7], 0
    %32 = vsyncpa [#allocation10], 0
    %33 = vsyncpa [#allocation13], 0
    %34 = vsyncpa [#allocation16], 0
    %35 = vsyncpa [#allocation19], 0
    %36 = vsyncpa [#allocation5], 0
    // Predicated region
    $region2: #{tpu_custom_call.1} parent=1 // pred_check
      _
    $region3: #{tpu_custom_call.1} parent=1 // pred_check_branch
      %38 = sbr.rel (0) target = $region5
    $region4: #{tpu_custom_call.1} parent=1 // pred_region
      _
    $region5: #{tpu_custom_call.1} parent=1 // pred_fallthru
      _
    // Predicated region
    $region6: #{tpu_custom_call.1} parent=1 // pred_check
      _
    $region7: #{tpu_custom_call.1} parent=1 // pred_check_branch
      %40 = sbr.rel (0) target = $region9
    $region8: #{tpu_custom_call.1} parent=1 // pred_region
      _
    $region9: #{tpu_custom_call.1} parent=1 // pred_fallthru
      _
    // Predicated region
    $region10: #{tpu_custom_call.1} parent=1 // pred_check
      _
    $region11: #{tpu_custom_call.1} parent=1 // pred_check_branch
      %42 = sbr.rel (0) target = $region13
    $region12: #{tpu_custom_call.1} parent=1 // pred_region
      %s44 = ssub.s32 16, 16
      %45 = vsyncadd [#allocation4], %s44
      %s47 = sshll.u32 [#allocation3], 4
      %s48 = int_to_ptr.vmem [resolvable:$true] %s47
      %50 = dma.hbm_to_vmem [thread:$0]  %s2, 16, %s48, [#allocation4]
    $region13: #{tpu_custom_call.1} parent=1 // pred_fallthru
      _
    // Predicated region
    $region14: #{tpu_custom_call.1} parent=1 // pred_check
      _
    $region15: #{tpu_custom_call.1} parent=1 // pred_check_branch
      %52 = sbr.rel (0) target = $region17
    $region16: #{tpu_custom_call.1} parent=1 // pred_region
      _
    $region17: #{tpu_custom_call.1} parent=1 // pred_fallthru
      _
    // Predicated region
    $region18: #{tpu_custom_call.1} parent=1 // pred_check
      _
    $region19: #{tpu_custom_call.1} parent=1 // pred_check_branch
      %54 = sbr.rel (0) target = $region21
    $region20: #{tpu_custom_call.1} parent=1 // pred_region
      _
    $region21: #{tpu_custom_call.1} parent=1 // pred_fallthru
      _
    // Predicated region
    $region22: #{tpu_custom_call.1} parent=1 // pred_check
      _
    $region23: #{tpu_custom_call.1} parent=1 // pred_check_branch
      %56 = sbr.rel (0) target = $region25
    $region24: #{tpu_custom_call.1} parent=1 // pred_region
      _
    $region25: #{tpu_custom_call.1} parent=1 // pred_fallthru
      _
    // Predicated region
    $region26: #{tpu_custom_call.1} parent=1 // pred_check
      _
    $region27: #{tpu_custom_call.1} parent=1 // pred_check_branch
      %58 = sbr.rel (0) target = $region29
    $region28: #{tpu_custom_call.1} parent=1 // pred_region
      %s60 = ssub.s32 16, 16
      %61 = vsyncadd [#allocation7], %s60
      %s63 = sshll.u32 [#allocation6], 4
      %s64 = int_to_ptr.vmem [resolvable:$true] %s63
      %66 = dma.hbm_to_vmem [thread:$0]  %s6, 16, %s64, [#allocation7]
    $region29: #{tpu_custom_call.1} parent=1 // pred_fallthru
      _
    // Predicated region
    $region30: #{tpu_custom_call.1} parent=1 // pred_check
      _
    $region31: #{tpu_custom_call.1} parent=1 // pred_check_branch
      %68 = sbr.rel (0) target = $region33
    $region32: #{tpu_custom_call.1} parent=1 // pred_region
      _
    $region33: #{tpu_custom_call.1} parent=1 // pred_fallthru
      _
    // Predicated region
    $region34: #{tpu_custom_call.1} parent=1 // pred_check
      _
    $region35: #{tpu_custom_call.1} parent=1 // pred_check_branch
      %70 = sbr.rel (0) target = $region37
    $region36: #{tpu_custom_call.1} parent=1 // pred_region
      _
    $region37: #{tpu_custom_call.1} parent=1 // pred_fallthru
      _
    // Predicated region
    $region38: #{tpu_custom_call.1} parent=1 // pred_check
      _
    $region39: #{tpu_custom_call.1} parent=1 // pred_check_branch
      %72 = sbr.rel (0) target = $region41
    $region40: #{tpu_custom_call.1} parent=1 // pred_region
      _
    $region41: #{tpu_custom_call.1} parent=1 // pred_fallthru
      _
    // Predicated region
    $region42: #{tpu_custom_call.1} parent=1 // pred_check
      _
    $region43: #{tpu_custom_call.1} parent=1 // pred_check_branch
      %74 = sbr.rel (0) target = $region45
    $region44: #{tpu_custom_call.1} parent=1 // pred_region
      %s76 = ssub.s32 256, 256
      %77 = vsyncadd [#allocation7], %s76
      %s78 = sshll.u32 [#allocation8], 4
      %s79 = int_to_ptr.vmem [resolvable:$true] %s78
      %84 = dma.hbm_to_vmem [thread:$0]  %s10, 256, %s79, [#allocation7], 64, 64, 4
    $region45: #{tpu_custom_call.1} parent=1 // pred_fallthru
      _
    // Predicated region
    $region46: #{tpu_custom_call.1} parent=1 // pred_check
      _
    $region47: #{tpu_custom_call.1} parent=1 // pred_check_branch
      %86 = sbr.rel (0) target = $region49
    $region48: #{tpu_custom_call.1} parent=1 // pred_region
      %s88 = ssub.s32 256, 256
      %89 = vsyncadd [#allocation10], %s88
      %s90 = sshll.u32 [#allocation9], 4
      %s91 = int_to_ptr.vmem [resolvable:$true] %s90
      %96 = dma.hbm_to_vmem [thread:$0]  %s11, 256, %s91, [#allocation10], 64, 64, 4
    $region49: #{tpu_custom_call.1} parent=1 // pred_fallthru
      _
    // Predicated region
    $region50: #{tpu_custom_call.1} parent=1 // pred_check
      _
    $region51: #{tpu_custom_call.1} parent=1 // pred_check_branch
      %98 = sbr.rel (0) target = $region53
    $region52: #{tpu_custom_call.1} parent=1 // pred_region
      %s100 = ssub.s32 256, 256
      %101 = vsyncadd [#allocation10], %s100
      %s102 = sshll.u32 [#allocation11], 4
      %s103 = int_to_ptr.vmem [resolvable:$true] %s102
      %108 = dma.hbm_to_vmem [thread:$0]  %s12, 256, %s103, [#allocation10], 64, 64, 4
    $region53: #{tpu_custom_call.1} parent=1 // pred_fallthru
      _
    // Predicated region
    $region54: #{tpu_custom_call.1} parent=1 // pred_check
      _
    $region55: #{tpu_custom_call.1} parent=1 // pred_check_branch
      %110 = sbr.rel (0) target = $region57
    $region56: #{tpu_custom_call.1} parent=1 // pred_region
      _
    $region57: #{tpu_custom_call.1} parent=1 // pred_fallthru
      _
    // Predicated region
    $region58: #{tpu_custom_call.1} parent=1 // pred_check
      _
    $region59: #{tpu_custom_call.1} parent=1 // pred_check_branch
      %112 = sbr.rel (0) target = $region61
    $region60: #{tpu_custom_call.1} parent=1 // pred_region
      %s114 = ssub.s32 16, 16
      %115 = vsyncadd [#allocation13], %s114
      %s117 = sshll.u32 [#allocation12], 4
      %s118 = int_to_ptr.vmem [resolvable:$true] %s117
      %120 = dma.hbm_to_vmem [thread:$0]  %s14, 16, %s118, [#allocation13]
    $region61: #{tpu_custom_call.1} parent=1 // pred_fallthru
      _
    // Predicated region
    $region62: #{tpu_custom_call.1} parent=1 // pred_check
      _
    $region63: #{tpu_custom_call.1} parent=1 // pred_check_branch
      %122 = sbr.rel (0) target = $region65
    $region64: #{tpu_custom_call.1} parent=1 // pred_region
      %s124 = ssub.s32 16, 16
      %125 = vsyncadd [#allocation13], %s124
      %s127 = sshll.u32 [#allocation14], 4
      %s128 = int_to_ptr.vmem [resolvable:$true] %s127
      %130 = dma.hbm_to_vmem [thread:$0]  %s15, 16, %s128, [#allocation13]
    $region65: #{tpu_custom_call.1} parent=1 // pred_fallthru
      _
    // Predicated region
    $region66: #{tpu_custom_call.1} parent=1 // pred_check
      _
    $region67: #{tpu_custom_call.1} parent=1 // pred_check_branch
      %132 = sbr.rel (0) target = $region69
    $region68: #{tpu_custom_call.1} parent=1 // pred_region
      %s134 = ssub.s32 16, 16
      %135 = vsyncadd [#allocation16], %s134
      %s137 = sshll.u32 [#allocation15], 4
      %s138 = int_to_ptr.vmem [resolvable:$true] %s137
      %140 = dma.hbm_to_vmem [thread:$0]  %s16, 16, %s138, [#allocation16]
    $region69: #{tpu_custom_call.1} parent=1 // pred_fallthru
      _
    // Predicated region
    $region70: #{tpu_custom_call.1} parent=1 // pred_check
      _
    $region71: #{tpu_custom_call.1} parent=1 // pred_check_branch
      %142 = sbr.rel (0) target = $region73
    $region72: #{tpu_custom_call.1} parent=1 // pred_region
      _
    $region73: #{tpu_custom_call.1} parent=1 // pred_fallthru
      _
    // Predicated region
    $region74: #{tpu_custom_call.1} parent=1 // pred_check
      _
    $region75: #{tpu_custom_call.1} parent=1 // pred_check_branch
      %144 = sbr.rel (0) target = $region77
    $region76: #{tpu_custom_call.1} parent=1 // pred_region
      %s146 = ssub.s32 256, 256
      %147 = vsyncadd [#allocation16], %s146
      %s148 = sshll.u32 [#allocation17], 4
      %s149 = int_to_ptr.vmem [resolvable:$true] %s148
      %154 = dma.hbm_to_vmem [thread:$0]  %s18, 256, %s149, [#allocation16], 64, 64, 4
    $region77: #{tpu_custom_call.1} parent=1 // pred_fallthru
      _
    // Predicated region
    $region78: #{tpu_custom_call.1} parent=1 // pred_check
      _
    $region79: #{tpu_custom_call.1} parent=1 // pred_check_branch
      %156 = sbr.rel (0) target = $region81
    $region80: #{tpu_custom_call.1} parent=1 // pred_region
      %s158 = ssub.s32 256, 256
      %159 = vsyncadd [#allocation19], %s158
      %s160 = sshll.u32 [#allocation18], 4
      %s161 = int_to_ptr.vmem [resolvable:$true] %s160
      %166 = dma.hbm_to_vmem [thread:$0]  %s19, 256, %s161, [#allocation19], 64, 64, 4
    $region81: #{tpu_custom_call.1} parent=1 // pred_fallthru
      _
    // Predicated region
    $region82: #{tpu_custom_call.1} parent=1 // pred_check
      _
    $region83: #{tpu_custom_call.1} parent=1 // pred_check_branch
      %168 = sbr.rel (0) target = $region85
    $region84: #{tpu_custom_call.1} parent=1 // pred_region
      _
    $region85: #{tpu_custom_call.1} parent=1 // pred_fallthru
      _
    // Predicated region
    $region86: #{tpu_custom_call.1} parent=1 // pred_check
      _
    $region87: #{tpu_custom_call.1} parent=1 // pred_check_branch
      %170 = sbr.rel (0) target = $region89
    $region88: #{tpu_custom_call.1} parent=1 // pred_region
      _
    $region89: #{tpu_custom_call.1} parent=1 // pred_fallthru
      _
    // Predicated region
    $region90: #{tpu_custom_call.1} parent=1 // pred_check
      _
    $region91: #{tpu_custom_call.1} parent=1 // pred_check_branch
      %172 = sbr.rel (0) target = $region93
    $region92: #{tpu_custom_call.1} parent=1 // pred_region
      _
    $region93: #{tpu_custom_call.1} parent=1 // pred_fallthru
      _
    // Predicated region
    $region94: #{tpu_custom_call.1} parent=1 // pred_check
      _
    $region95: #{tpu_custom_call.1} parent=1 // pred_check_branch
      %174 = sbr.rel (0) target = $region97
    $region96: #{tpu_custom_call.1} parent=1 // pred_region
      %175 = dma.done [#allocation4], 16
    $region97: #{tpu_custom_call.1} parent=1 // pred_fallthru
      _
    // Predicated region
    $region98: #{tpu_custom_call.1} parent=1 // pred_check
      _
    $region99: #{tpu_custom_call.1} parent=1 // pred_check_branch
      %177 = sbr.rel (0) target = $region101
    $region100: #{tpu_custom_call.1} parent=1 // pred_region
      %178 = dma.done [#allocation7], 16
    $region101: #{tpu_custom_call.1} parent=1 // pred_fallthru
      _
    // Predicated region
    $region102: #{tpu_custom_call.1} parent=1 // pred_check
      _
    $region103: #{tpu_custom_call.1} parent=1 // pred_check_branch
      %180 = sbr.rel (0) target = $region105
    $region104: #{tpu_custom_call.1} parent=1 // pred_region
      %181 = dma.done [#allocation7], 256
    $region105: #{tpu_custom_call.1} parent=1 // pred_fallthru
      _
    // Predicated region
    $region106: #{tpu_custom_call.1} parent=1 // pred_check
      _
    $region107: #{tpu_custom_call.1} parent=1 // pred_check_branch
      %183 = sbr.rel (0) target = $region109
    $region108: #{tpu_custom_call.1} parent=1 // pred_region
      %184 = dma.done [#allocation10], 256
    $region109: #{tpu_custom_call.1} parent=1 // pred_fallthru
      _
    // Predicated region
    $region110: #{tpu_custom_call.1} parent=1 // pred_check
      _
    $region111: #{tpu_custom_call.1} parent=1 // pred_check_branch
      %186 = sbr.rel (0) target = $region113
    $region112: #{tpu_custom_call.1} parent=1 // pred_region
      %187 = dma.done [#allocation10], 256
    $region113: #{tpu_custom_call.1} parent=1 // pred_fallthru
      _
    // Predicated region
    $region114: #{tpu_custom_call.1} parent=1 // pred_check
      _
    $region115: #{tpu_custom_call.1} parent=1 // pred_check_branch
      %189 = sbr.rel (0) target = $region117
    $region116: #{tpu_custom_call.1} parent=1 // pred_region
      %190 = dma.done [#allocation13], 16
    $region117: #{tpu_custom_call.1} parent=1 // pred_fallthru
      _
    // Predicated region
    $region118: #{tpu_custom_call.1} parent=1 // pred_check
      _
    $region119: #{tpu_custom_call.1} parent=1 // pred_check_branch
      %192 = sbr.rel (0) target = $region121
    $region120: #{tpu_custom_call.1} parent=1 // pred_region
      %193 = dma.done [#allocation13], 16
    $region121: #{tpu_custom_call.1} parent=1 // pred_fallthru
      _
    // Predicated region
    $region122: #{tpu_custom_call.1} parent=1 // pred_check
      _
    $region123: #{tpu_custom_call.1} parent=1 // pred_check_branch
      %195 = sbr.rel (0) target = $region125
    $region124: #{tpu_custom_call.1} parent=1 // pred_region
      %196 = dma.done [#allocation16], 16
    $region125: #{tpu_custom_call.1} parent=1 // pred_fallthru
      _
    // Predicated region
    $region126: #{tpu_custom_call.1} parent=1 // pred_check
      _
    $region127: #{tpu_custom_call.1} parent=1 // pred_check_branch
      %198 = sbr.rel (0) target = $region129
    $region128: #{tpu_custom_call.1} parent=1 // pred_region
      %199 = dma.done [#allocation16], 256
    $region129: #{tpu_custom_call.1} parent=1 // pred_fallthru
      _
    // Predicated region
    $region130: #{tpu_custom_call.1} parent=1 // pred_check
      _
    $region131: #{tpu_custom_call.1} parent=1 // pred_check_branch
      %201 = sbr.rel (0) target = $region133
    $region132: #{tpu_custom_call.1} parent=1 // pred_region
      %202 = dma.done [#allocation19], 256
    $region133: #{tpu_custom_call.1} parent=1 // pred_fallthru
      _
    %v204 = vld [vmem:[%s0] sm:$0xff]
    %v205 = vld [vmem:[%s0 + $0x8] sm:$0xff]
    %v206 = vpack.c.bf16 %v205, %v204
    %v207 = vld [vmem:[%s1] sm:$0xf]
    %v208 = vld [vmem:[%s1 + $0x4] sm:$0xf]
    %v209 = vld [vmem:[%s1 + $0x8] sm:$0xf]
    %v210 = vld [vmem:[%s1 + $0xc] sm:$0xf]
    %v211 = vld [vmem:[#allocation3] sm:$0x1]
    %v213 = vlaneseq
    %v214 = vshrl.u32 %v213, 7
    %v215 = vsub.s32 0, %v214
    %v216 = vrot.slane %v211, %v215
    %v222 = vunpack.c.l.b16 %v207
    %v223 = vunpack.c.l.b16 %v208
    %v224 = vunpack.c.l.b16 %v209
    %v225 = vunpack.c.l.b16 %v210
    %v226 = vpack.c.b16 %v223, %v222
    %v227 = vpack.c.b16 %v225, %v224
    %vm230 = vcmask 261120
    %v232 = vsel %vm230, %v206, 0
    %234 = vmatprep.subr.bf16.mxu0 0
    %235 = vmatpush1.bf16.msra.mxu0 %v226
    %236 = vmatprep.subr.bf16.mxu0 0
    %237 = vmatpush1.bf16.msra.mxu0 %v227
    %238 = vmatprep.subr.bf16.mxu0 0
    %239 = vmatpush1.bf16.msra.mxu0 0
    %240 = vmatprep.subr.bf16.mxu0 0
    %241 = vmatpush1.bf16.msra.mxu0 0
    %242 = vmatprep.subr.bf16.mxu0 0
    %243 = vmatpush1.bf16.msra.mxu0 0
    %244 = vmatprep.subr.bf16.mxu0 0
    %245 = vmatpush1.bf16.msra.mxu0 0
    %246 = vmatprep.subr.bf16.mxu0 0
    %247 = vmatpush1.bf16.msra.mxu0 0
    %248 = vmatprep.subr.bf16.mxu0 0
    %249 = vmatpush1.bf16.msra.mxu0 0
    %250 = vmatprep.subr.bf16.mxu0 0
    %251 = vmatpush1.bf16.msra.mxu0 0
    %252 = vmatprep.subr.bf16.mxu0 0
    %253 = vmatpush1.bf16.msra.mxu0 0
    %254 = vmatprep.subr.bf16.mxu0 0
    %255 = vmatpush1.bf16.msra.mxu0 0
    %256 = vmatprep.subr.bf16.mxu0 0
    %257 = vmatpush1.bf16.msra.mxu0 0
    %258 = vmatprep.subr.bf16.mxu0 0
    %259 = vmatpush1.bf16.msra.mxu0 0
    %260 = vmatprep.subr.bf16.mxu0 0
    %261 = vmatpush1.bf16.msra.mxu0 0
    %262 = vmatprep.subr.bf16.mxu0 0
    %263 = vmatpush1.bf16.msra.mxu0 0
    %264 = vmatprep.subr.bf16.mxu0 0
    %265 = vmatpush1.bf16.msra.mxu0 0
    %266 = vmatprep.mubr.bf16.mxu0 0
    %267 = vmatmul.mubr.bf16.gmra.mrb[0].mxu0 %v232
    %v268 = vpop.f32.mrb[0].mxu0
    %v269 = vadd.f32 %v216, %v268
    %v270 = vpop.f32.mrb[0].mxu0
    %v271 = vpop.f32.mrb[0].mxu0
    %v272 = vadd.f32 %v216, %v271
    %v273 = vpop.f32.mrb[0].mxu0
    %274 = vdwg.mxu0
    %v275 = vpack.c.bf16 %v272, %v269
    %277 = vrot.lane.b32.xlu0 %v275, 96
    %v278 = vpop.permute.xlu0 %277
    %vm279 = vcmask 64512
    %v281 = vsel %vm279, %v275, 0
    %v284 = vsel %vm279, %v278, 0
    %286 = vmatprep.subr.bf16.mxu0 0
    %287 = vmatpush1.bf16.xpose.msra.mxu0 %v284
    %288 = vmatprep.subr.bf16.mxu0 0
    %289 = vmatpush1.bf16.xpose.msra.mxu0 0
    %290 = vmatprep.subr.bf16.mxu0 0
    %291 = vmatpush1.bf16.xpose.msra.mxu0 0
    %292 = vmatprep.subr.bf16.mxu0 0
    %293 = vmatpush1.bf16.xpose.msra.mxu0 0
    %294 = vmatprep.subr.bf16.mxu0 0
    %295 = vmatpush1.bf16.xpose.msra.mxu0 0
    %296 = vmatprep.subr.bf16.mxu0 0
    %297 = vmatpush1.bf16.xpose.msra.mxu0 0
    %298 = vmatprep.subr.bf16.mxu0 0
    %299 = vmatpush1.bf16.xpose.msra.mxu0 0
    %300 = vmatprep.subr.bf16.mxu0 0
    %301 = vmatpush1.bf16.xpose.msra.mxu0 0
    %302 = vmatprep.subr.bf16.mxu0 0
    %303 = vmatpush1.bf16.xpose.msra.mxu0 0
    %304 = vmatprep.subr.bf16.mxu0 0
    %305 = vmatpush1.bf16.xpose.msra.mxu0 0
    %306 = vmatprep.subr.bf16.mxu0 0
    %307 = vmatpush1.bf16.xpose.msra.mxu0 0
    %308 = vmatprep.subr.bf16.mxu0 0
    %309 = vmatpush1.bf16.xpose.msra.mxu0 0
    %310 = vmatprep.subr.bf16.mxu0 0
    %311 = vmatpush1.bf16.xpose.msra.mxu0 0
    %312 = vmatprep.subr.bf16.mxu0 0
    %313 = vmatpush1.bf16.xpose.msra.mxu0 0
    %314 = vmatprep.subr.bf16.mxu0 0
    %315 = vmatpush1.bf16.xpose.msra.mxu0 0
    %316 = vmatprep.subr.bf16.mxu0 0
    %317 = vmatpush1.bf16.xpose.msra.mxu0 0
    %318 = vmatprep.mubr.bf16.mxu0 0
    %319 = vmatmul.mubr.bf16.gmra.mrb[0].mxu0 %v281
    %v320 = vpop.f32.mrb[0].mxu0
    %v321 = vadd.f32 0.0, %v320
    %v322 = vpop.f32.mrb[0].mxu0
    %v323 = vpop.f32.mrb[0].mxu0
    %v324 = vpop.f32.mrb[0].mxu0
    %325 = vdwg.mxu0
    %v326 = vmul.f32 %v321, 0.35355338
    %v327 = vsel %vm279, %v326, -inf
    %328 = vmax.xlane.f32.xlu0 %v327
    %v329 = vpop.xlane.xlu0 %328
    %v330 = vsub.f32 %v326, %v329
    %v331 = vmul.f32 %v330, 1.442695
    %v332 = vpow.pop %v331
    %v333 = vsel %vm279, %v332, 0.0
    %334 = vadd.xlane.f32.xlu0 %v333
    %v335 = vpop.xlane.xlu0 %334
    %v336 = vrcp.pop %v335
    %v337 = vmul.f32 %v332, %v336
    %v338 = vpack.c.bf16 %v337, %v337
    %339 = vrot.lane.b32.xlu0 %v275, 64
    %v340 = vpop.permute.xlu0 %339
    %v342 = vsel %vm279, %v338, 0
    %vm344 = vcmask 1043456
    %v346 = vsel %vm344, %v340, 0
    %348 = vmatprep.subr.bf16.mxu0 0
    %349 = vmatpush1.bf16.msra.mxu0 %v346
    %350 = vmatprep.subr.bf16.mxu0 0
    %351 = vmatpush1.bf16.msra.mxu0 0
    %352 = vmatprep.subr.bf16.mxu0 0
    %353 = vmatpush1.bf16.msra.mxu0 0
    %354 = vmatprep.subr.bf16.mxu0 0
    %355 = vmatpush1.bf16.msra.mxu0 0
    %356 = vmatprep.subr.bf16.mxu0 0
    %357 = vmatpush1.bf16.msra.mxu0 0
    %358 = vmatprep.subr.bf16.mxu0 0
    %359 = vmatpush1.bf16.msra.mxu0 0
    %360 = vmatprep.subr.bf16.mxu0 0
    %361 = vmatpush1.bf16.msra.mxu0 0
    %362 = vmatprep.subr.bf16.mxu0 0
    %363 = vmatpush1.bf16.msra.mxu0 0
    %364 = vmatprep.subr.bf16.mxu0 0
    %365 = vmatpush1.bf16.msra.mxu0 0
    %366 = vmatprep.subr.bf16.mxu0 0
    %367 = vmatpush1.bf16.msra.mxu0 0
    %368 = vmatprep.subr.bf16.mxu0 0
    %369 = vmatpush1.bf16.msra.mxu0 0
    %370 = vmatprep.subr.bf16.mxu0 0
    %371 = vmatpush1.bf16.msra.mxu0 0
    %372 = vmatprep.subr.bf16.mxu0 0
    %373 = vmatpush1.bf16.msra.mxu0 0
    %374 = vmatprep.subr.bf16.mxu0 0
    %375 = vmatpush1.bf16.msra.mxu0 0
    %376 = vmatprep.subr.bf16.mxu0 0
    %377 = vmatpush1.bf16.msra.mxu0 0
    %378 = vmatprep.subr.bf16.mxu0 0
    %379 = vmatpush1.bf16.msra.mxu0 0
    %380 = vmatprep.mubr.bf16.mxu0 0
    %381 = vmatmul.mubr.bf16.gmra.mrb[0].mxu0 %v342
    %v382 = vpop.f32.mrb[0].mxu0
    %v383 = vadd.f32 0.0, %v382
    %v384 = vpop.f32.mrb[0].mxu0
    %v385 = vpop.f32.mrb[0].mxu0
    %v386 = vpop.f32.mrb[0].mxu0
    %387 = vdwg.mxu0
    %388 = vrot.lane.b32.xlu0 %v275, 120
    %v389 = vpop.permute.xlu0 %388
    %390 = vrot.lane.b32.xlu0 %v275, 88
    %v391 = vpop.permute.xlu0 %390
    %v393 = vsel %vm279, %v389, 0
    %v396 = vsel %vm279, %v391, 0
    %398 = vmatprep.subr.bf16.mxu0 0
    %399 = vmatpush1.bf16.xpose.msra.mxu0 %v396
    %400 = vmatprep.subr.bf16.mxu0 0
    %401 = vmatpush1.bf16.xpose.msra.mxu0 0
    %402 = vmatprep.subr.bf16.mxu0 0
    %403 = vmatpush1.bf16.xpose.msra.mxu0 0
    %404 = vmatprep.subr.bf16.mxu0 0
    %405 = vmatpush1.bf16.xpose.msra.mxu0 0
    %406 = vmatprep.subr.bf16.mxu0 0
    %407 = vmatpush1.bf16.xpose.msra.mxu0 0
    %408 = vmatprep.subr.bf16.mxu0 0
    %409 = vmatpush1.bf16.xpose.msra.mxu0 0
    %410 = vmatprep.subr.bf16.mxu0 0
    %411 = vmatpush1.bf16.xpose.msra.mxu0 0
    %412 = vmatprep.subr.bf16.mxu0 0
    %413 = vmatpush1.bf16.xpose.msra.mxu0 0
    %414 = vmatprep.subr.bf16.mxu0 0
    %415 = vmatpush1.bf16.xpose.msra.mxu0 0
    %416 = vmatprep.subr.bf16.mxu0 0
    %417 = vmatpush1.bf16.xpose.msra.mxu0 0
    %418 = vmatprep.subr.bf16.mxu0 0
    %419 = vmatpush1.bf16.xpose.msra.mxu0 0
    %420 = vmatprep.subr.bf16.mxu0 0
    %421 = vmatpush1.bf16.xpose.msra.mxu0 0
    %422 = vmatprep.subr.bf16.mxu0 0
    %423 = vmatpush1.bf16.xpose.msra.mxu0 0
    %424 = vmatprep.subr.bf16.mxu0 0
    %425 = vmatpush1.bf16.xpose.msra.mxu0 0
    %426 = vmatprep.subr.bf16.mxu0 0
    %427 = vmatpush1.bf16.xpose.msra.mxu0 0
    %428 = vmatprep.subr.bf16.mxu0 0
    %429 = vmatpush1.bf16.xpose.msra.mxu0 0
    %430 = vmatprep.mubr.bf16.mxu0 0
    %431 = vmatmul.mubr.bf16.gmra.mrb[0].mxu0 %v393
    %v432 = vpop.f32.mrb[0].mxu0
    %v433 = vadd.f32 0.0, %v432
    %v434 = vpop.f32.mrb[0].mxu0
    %v435 = vpop.f32.mrb[0].mxu0
    %v436 = vpop.f32.mrb[0].mxu0
    %437 = vdwg.mxu0
    %v438 = vmul.f32 %v433, 0.35355338
    %v439 = vsel %vm279, %v438, -inf
    %440 = vmax.xlane.f32.xlu0 %v439
    %v441 = vpop.xlane.xlu0 %440
    %v442 = vsub.f32 %v438, %v441
    %v443 = vmul.f32 %v442, 1.442695
    %v444 = vpow.pop %v443
    %v445 = vsel %vm279, %v444, 0.0
    %446 = vadd.xlane.f32.xlu0 %v445
    %v447 = vpop.xlane.xlu0 %446
    %v448 = vrcp.pop %v447
    %v449 = vmul.f32 %v444, %v448
    %v450 = vpack.c.bf16 %v449, %v449
    %451 = vrot.lane.b32.xlu0 %v275, 56
    %v452 = vpop.permute.xlu0 %451
    %v454 = vsel %vm279, %v450, 0
    %v457 = vsel %vm344, %v452, 0
    %459 = vmatprep.subr.bf16.mxu0 0
    %460 = vmatpush1.bf16.msra.mxu0 %v457
    %461 = vmatprep.subr.bf16.mxu0 0
    %462 = vmatpush1.bf16.msra.mxu0 0
    %463 = vmatprep.subr.bf16.mxu0 0
    %464 = vmatpush1.bf16.msra.mxu0 0
    %465 = vmatprep.subr.bf16.mxu0 0
    %466 = vmatpush1.bf16.msra.mxu0 0
    %467 = vmatprep.subr.bf16.mxu0 0
    %468 = vmatpush1.bf16.msra.mxu0 0
    %469 = vmatprep.subr.bf16.mxu0 0
    %470 = vmatpush1.bf16.msra.mxu0 0
    %471 = vmatprep.subr.bf16.mxu0 0
    %472 = vmatpush1.bf16.msra.mxu0 0
    %473 = vmatprep.subr.bf16.mxu0 0
    %474 = vmatpush1.bf16.msra.mxu0 0
    %475 = vmatprep.subr.bf16.mxu0 0
    %476 = vmatpush1.bf16.msra.mxu0 0
    %477 = vmatprep.subr.bf16.mxu0 0
    %478 = vmatpush1.bf16.msra.mxu0 0
    %479 = vmatprep.subr.bf16.mxu0 0
    %480 = vmatpush1.bf16.msra.mxu0 0
    %481 = vmatprep.subr.bf16.mxu0 0
    %482 = vmatpush1.bf16.msra.mxu0 0
    %483 = vmatprep.subr.bf16.mxu0 0
    %484 = vmatpush1.bf16.msra.mxu0 0
    %485 = vmatprep.subr.bf16.mxu0 0
    %486 = vmatpush1.bf16.msra.mxu0 0
    %487 = vmatprep.subr.bf16.mxu0 0
    %488 = vmatpush1.bf16.msra.mxu0 0
    %489 = vmatprep.subr.bf16.mxu0 0
    %490 = vmatpush1.bf16.msra.mxu0 0
    %491 = vmatprep.mubr.bf16.mxu0 0
    %492 = vmatmul.mubr.bf16.gmra.mrb[0].mxu0 %v454
    %v493 = vpop.f32.mrb[0].mxu0
    %v494 = vadd.f32 0.0, %v493
    %v495 = vpop.f32.mrb[0].mxu0
    %v496 = vpop.f32.mrb[0].mxu0
    %v497 = vpop.f32.mrb[0].mxu0
    %498 = vdwg.mxu0
    %499 = vrot.lane.b32.xlu0 %v275, 112
    %v500 = vpop.permute.xlu0 %499
    %501 = vrot.lane.b32.xlu0 %v275, 80
    %v502 = vpop.permute.xlu0 %501
    %v504 = vsel %vm279, %v500, 0
    %v507 = vsel %vm279, %v502, 0
    %509 = vmatprep.subr.bf16.mxu0 0
    %510 = vmatpush1.bf16.xpose.msra.mxu0 %v507
    %511 = vmatprep.subr.bf16.mxu0 0
    %512 = vmatpush1.bf16.xpose.msra.mxu0 0
    %513 = vmatprep.subr.bf16.mxu0 0
    %514 = vmatpush1.bf16.xpose.msra.mxu0 0
    %515 = vmatprep.subr.bf16.mxu0 0
    %516 = vmatpush1.bf16.xpose.msra.mxu0 0
    %517 = vmatprep.subr.bf16.mxu0 0
    %518 = vmatpush1.bf16.xpose.msra.mxu0 0
    %519 = vmatprep.subr.bf16.mxu0 0
    %520 = vmatpush1.bf16.xpose.msra.mxu0 0
    %521 = vmatprep.subr.bf16.mxu0 0
    %522 = vmatpush1.bf16.xpose.msra.mxu0 0
    %523 = vmatprep.subr.bf16.mxu0 0
    %524 = vmatpush1.bf16.xpose.msra.mxu0 0
    %525 = vmatprep.subr.bf16.mxu0 0
    %526 = vmatpush1.bf16.xpose.msra.mxu0 0
    %527 = vmatprep.subr.bf16.mxu0 0
    %528 = vmatpush1.bf16.xpose.msra.mxu0 0
    %529 = vmatprep.subr.bf16.mxu0 0
    %530 = vmatpush1.bf16.xpose.msra.mxu0 0
    %531 = vmatprep.subr.bf16.mxu0 0
    %532 = vmatpush1.bf16.xpose.msra.mxu0 0
    %533 = vmatprep.subr.bf16.mxu0 0
    %534 = vmatpush1.bf16.xpose.msra.mxu0 0
    %535 = vmatprep.subr.bf16.mxu0 0
    %536 = vmatpush1.bf16.xpose.msra.mxu0 0
    %537 = vmatprep.subr.bf16.mxu0 0
    %538 = vmatpush1.bf16.xpose.msra.mxu0 0
    %539 = vmatprep.subr.bf16.mxu0 0
    %540 = vmatpush1.bf16.xpose.msra.mxu0 0
    %541 = vmatprep.mubr.bf16.mxu0 0
    %542 = vmatmul.mubr.bf16.gmra.mrb[0].mxu0 %v504
    %v543 = vpop.f32.mrb[0].mxu0
    %v544 = vadd.f32 0.0, %v543
    %v545 = vpop.f32.mrb[0].mxu0
    %v546 = vpop.f32.mrb[0].mxu0
    %v547 = vpop.f32.mrb[0].mxu0
    %548 = vdwg.mxu0
    %v549 = vmul.f32 %v544, 0.35355338
    %v550 = vsel %vm279, %v549, -inf
    %551 = vmax.xlane.f32.xlu0 %v550
    %v552 = vpop.xlane.xlu0 %551
    %v553 = vsub.f32 %v549, %v552
    %v554 = vmul.f32 %v553, 1.442695
    %v555 = vpow.pop %v554
    %v556 = vsel %vm279, %v555, 0.0
    %557 = vadd.xlane.f32.xlu0 %v556
    %v558 = vpop.xlane.xlu0 %557
    %v559 = vrcp.pop %v558
    %v560 = vmul.f32 %v555, %v559
    %v561 = vpack.c.bf16 %v560, %v560
    %562 = vrot.lane.b32.xlu0 %v275, 48
    %v563 = vpop.permute.xlu0 %562
    %v565 = vsel %vm279, %v561, 0
    %v568 = vsel %vm344, %v563, 0
    %570 = vmatprep.subr.bf16.mxu0 0
    %571 = vmatpush1.bf16.msra.mxu0 %v568
    %572 = vmatprep.subr.bf16.mxu0 0
    %573 = vmatpush1.bf16.msra.mxu0 0
    %574 = vmatprep.subr.bf16.mxu0 0
    %575 = vmatpush1.bf16.msra.mxu0 0
    %576 = vmatprep.subr.bf16.mxu0 0
    %577 = vmatpush1.bf16.msra.mxu0 0
    %578 = vmatprep.subr.bf16.mxu0 0
    %579 = vmatpush1.bf16.msra.mxu0 0
    %580 = vmatprep.subr.bf16.mxu0 0
    %581 = vmatpush1.bf16.msra.mxu0 0
    %582 = vmatprep.subr.bf16.mxu0 0
    %583 = vmatpush1.bf16.msra.mxu0 0
    %584 = vmatprep.subr.bf16.mxu0 0
    %585 = vmatpush1.bf16.msra.mxu0 0
    %586 = vmatprep.subr.bf16.mxu0 0
    %587 = vmatpush1.bf16.msra.mxu0 0
    %588 = vmatprep.subr.bf16.mxu0 0
    %589 = vmatpush1.bf16.msra.mxu0 0
    %590 = vmatprep.subr.bf16.mxu0 0
    %591 = vmatpush1.bf16.msra.mxu0 0
    %592 = vmatprep.subr.bf16.mxu0 0
    %593 = vmatpush1.bf16.msra.mxu0 0
    %594 = vmatprep.subr.bf16.mxu0 0
    %595 = vmatpush1.bf16.msra.mxu0 0
    %596 = vmatprep.subr.bf16.mxu0 0
    %597 = vmatpush1.bf16.msra.mxu0 0
    %598 = vmatprep.subr.bf16.mxu0 0
    %599 = vmatpush1.bf16.msra.mxu0 0
    %600 = vmatprep.subr.bf16.mxu0 0
    %601 = vmatpush1.bf16.msra.mxu0 0
    %602 = vmatprep.mubr.bf16.mxu0 0
    %603 = vmatmul.mubr.bf16.gmra.mrb[0].mxu0 %v565
    %v604 = vpop.f32.mrb[0].mxu0
    %v605 = vadd.f32 0.0, %v604
    %v606 = vpop.f32.mrb[0].mxu0
    %v607 = vpop.f32.mrb[0].mxu0
    %v608 = vpop.f32.mrb[0].mxu0
    %609 = vdwg.mxu0
    %610 = vrot.lane.b32.xlu0 %v275, 104
    %v611 = vpop.permute.xlu0 %610
    %612 = vrot.lane.b32.xlu0 %v275, 72
    %v613 = vpop.permute.xlu0 %612
    %v615 = vsel %vm279, %v611, 0
    %v618 = vsel %vm279, %v613, 0
    %620 = vmatprep.subr.bf16.mxu0 0
    %621 = vmatpush1.bf16.xpose.msra.mxu0 %v618
    %622 = vmatprep.subr.bf16.mxu0 0
    %623 = vmatpush1.bf16.xpose.msra.mxu0 0
    %624 = vmatprep.subr.bf16.mxu0 0
    %625 = vmatpush1.bf16.xpose.msra.mxu0 0
    %626 = vmatprep.subr.bf16.mxu0 0
    %627 = vmatpush1.bf16.xpose.msra.mxu0 0
    %628 = vmatprep.subr.bf16.mxu0 0
    %629 = vmatpush1.bf16.xpose.msra.mxu0 0
    %630 = vmatprep.subr.bf16.mxu0 0
    %631 = vmatpush1.bf16.xpose.msra.mxu0 0
    %632 = vmatprep.subr.bf16.mxu0 0
    %633 = vmatpush1.bf16.xpose.msra.mxu0 0
    %634 = vmatprep.subr.bf16.mxu0 0
    %635 = vmatpush1.bf16.xpose.msra.mxu0 0
    %636 = vmatprep.subr.bf16.mxu0 0
    %637 = vmatpush1.bf16.xpose.msra.mxu0 0
    %638 = vmatprep.subr.bf16.mxu0 0
    %639 = vmatpush1.bf16.xpose.msra.mxu0 0
    %640 = vmatprep.subr.bf16.mxu0 0
    %641 = vmatpush1.bf16.xpose.msra.mxu0 0
    %642 = vmatprep.subr.bf16.mxu0 0
    %643 = vmatpush1.bf16.xpose.msra.mxu0 0
    %644 = vmatprep.subr.bf16.mxu0 0
    %645 = vmatpush1.bf16.xpose.msra.mxu0 0
    %646 = vmatprep.subr.bf16.mxu0 0
    %647 = vmatpush1.bf16.xpose.msra.mxu0 0
    %648 = vmatprep.subr.bf16.mxu0 0
    %649 = vmatpush1.bf16.xpose.msra.mxu0 0
    %650 = vmatprep.subr.bf16.mxu0 0
    %651 = vmatpush1.bf16.xpose.msra.mxu0 0
    %652 = vmatprep.mubr.bf16.mxu0 0
    %653 = vmatmul.mubr.bf16.gmra.mrb[0].mxu0 %v615
    %v654 = vpop.f32.mrb[0].mxu0
    %v655 = vadd.f32 0.0, %v654
    %v656 = vpop.f32.mrb[0].mxu0
    %v657 = vpop.f32.mrb[0].mxu0
    %v658 = vpop.f32.mrb[0].mxu0
    %659 = vdwg.mxu0
    %v660 = vmul.f32 %v655, 0.35355338
    %v661 = vsel %vm279, %v660, -inf
    %662 = vmax.xlane.f32.xlu0 %v661
    %v663 = vpop.xlane.xlu0 %662
    %v664 = vsub.f32 %v660, %v663
    %v665 = vmul.f32 %v664, 1.442695
    %v666 = vpow.pop %v665
    %v667 = vsel %vm279, %v666, 0.0
    %668 = vadd.xlane.f32.xlu0 %v667
    %v669 = vpop.xlane.xlu0 %668
    %v670 = vrcp.pop %v669
    %v671 = vmul.f32 %v666, %v670
    %v672 = vpack.c.bf16 %v671, %v671
    %673 = vrot.lane.b32.xlu0 %v275, 40
    %v674 = vpop.permute.xlu0 %673
    %v676 = vsel %vm279, %v672, 0
    %v679 = vsel %vm344, %v674, 0
    %681 = vmatprep.subr.bf16.mxu0 0
    %682 = vmatpush1.bf16.msra.mxu0 %v679
    %683 = vmatprep.subr.bf16.mxu0 0
    %684 = vmatpush1.bf16.msra.mxu0 0
    %685 = vmatprep.subr.bf16.mxu0 0
    %686 = vmatpush1.bf16.msra.mxu0 0
    %687 = vmatprep.subr.bf16.mxu0 0
    %688 = vmatpush1.bf16.msra.mxu0 0
    %689 = vmatprep.subr.bf16.mxu0 0
    %690 = vmatpush1.bf16.msra.mxu0 0
    %691 = vmatprep.subr.bf16.mxu0 0
    %692 = vmatpush1.bf16.msra.mxu0 0
    %693 = vmatprep.subr.bf16.mxu0 0
    %694 = vmatpush1.bf16.msra.mxu0 0
    %695 = vmatprep.subr.bf16.mxu0 0
    %696 = vmatpush1.bf16.msra.mxu0 0
    %697 = vmatprep.subr.bf16.mxu0 0
    %698 = vmatpush1.bf16.msra.mxu0 0
    %699 = vmatprep.subr.bf16.mxu0 0
    %700 = vmatpush1.bf16.msra.mxu0 0
    %701 = vmatprep.subr.bf16.mxu0 0
    %702 = vmatpush1.bf16.msra.mxu0 0
    %703 = vmatprep.subr.bf16.mxu0 0
    %704 = vmatpush1.bf16.msra.mxu0 0
    %705 = vmatprep.subr.bf16.mxu0 0
    %706 = vmatpush1.bf16.msra.mxu0 0
    %707 = vmatprep.subr.bf16.mxu0 0
    %708 = vmatpush1.bf16.msra.mxu0 0
    %709 = vmatprep.subr.bf16.mxu0 0
    %710 = vmatpush1.bf16.msra.mxu0 0
    %711 = vmatprep.subr.bf16.mxu0 0
    %712 = vmatpush1.bf16.msra.mxu0 0
    %713 = vmatprep.mubr.bf16.mxu0 0
    %714 = vmatmul.mubr.bf16.gmra.mrb[0].mxu0 %v676
    %v715 = vpop.f32.mrb[0].mxu0
    %v716 = vadd.f32 0.0, %v715
    %v717 = vpop.f32.mrb[0].mxu0
    %v718 = vpop.f32.mrb[0].mxu0
    %v719 = vpop.f32.mrb[0].mxu0
    %720 = vdwg.mxu0
    %722 = vrot.lane.b32.xlu0 %v494, 8
    %v723 = vpop.permute.xlu0 %722
    %726 = vrot.lane.b32.xlu0 %v605, 16
    %v727 = vpop.permute.xlu0 %726
    %730 = vrot.lane.b32.xlu0 %v716, 24
    %v731 = vpop.permute.xlu0 %730
    %v733 = vsel %vm279, %v383, %v723
    %vm734 = vcmask 130048
    %v735 = vsel %vm734, %v733, %v727
    %vm736 = vcmask 195584
    %v737 = vsel %vm736, %v735, %v731
    %v738 = vsel %vm230, %v737, 0.0
    %v739 = vrot.slane %v738, 4
    %v740 = vadd.f32 %v738, %v739
    %v741 = vrot.slane %v740, 2
    %v742 = vadd.f32 %v740, %v741
    %v743 = vrot.slane %v742, 1
    %v744 = vadd.f32 %v742, %v743
    %v745 = vrcp.pop 8.0
    %v746 = vmul.f32 %v744, %v745
    %v747 = vrot.slane %v275, 4
    %748 = vrot.lane.b32.xlu0 %v747, 96
    %v749 = vpop.permute.xlu0 %748
    %v751 = vsel %vm279, %v747, 0
    %v754 = vsel %vm279, %v749, 0
    %756 = vmatprep.subr.bf16.mxu0 0
    %757 = vmatpush1.bf16.xpose.msra.mxu0 %v754
    %758 = vmatprep.subr.bf16.mxu0 0
    %759 = vmatpush1.bf16.xpose.msra.mxu0 0
    %760 = vmatprep.subr.bf16.mxu0 0
    %761 = vmatpush1.bf16.xpose.msra.mxu0 0
    %762 = vmatprep.subr.bf16.mxu0 0
    %763 = vmatpush1.bf16.xpose.msra.mxu0 0
    %764 = vmatprep.subr.bf16.mxu0 0
    %765 = vmatpush1.bf16.xpose.msra.mxu0 0
    %766 = vmatprep.subr.bf16.mxu0 0
    %767 = vmatpush1.bf16.xpose.msra.mxu0 0
    %768 = vmatprep.subr.bf16.mxu0 0
    %769 = vmatpush1.bf16.xpose.msra.mxu0 0
    %770 = vmatprep.subr.bf16.mxu0 0
    %771 = vmatpush1.bf16.xpose.msra.mxu0 0
    %772 = vmatprep.subr.bf16.mxu0 0
    %773 = vmatpush1.bf16.xpose.msra.mxu0 0
    %774 = vmatprep.subr.bf16.mxu0 0
    %775 = vmatpush1.bf16.xpose.msra.mxu0 0
    %776 = vmatprep.subr.bf16.mxu0 0
    %777 = vmatpush1.bf16.xpose.msra.mxu0 0
    %778 = vmatprep.subr.bf16.mxu0 0
    %779 = vmatpush1.bf16.xpose.msra.mxu0 0
    %780 = vmatprep.subr.bf16.mxu0 0
    %781 = vmatpush1.bf16.xpose.msra.mxu0 0
    %782 = vmatprep.subr.bf16.mxu0 0
    %783 = vmatpush1.bf16.xpose.msra.mxu0 0
    %784 = vmatprep.subr.bf16.mxu0 0
    %785 = vmatpush1.bf16.xpose.msra.mxu0 0
    %786 = vmatprep.subr.bf16.mxu0 0
    %787 = vmatpush1.bf16.xpose.msra.mxu0 0
    %788 = vmatprep.mubr.bf16.mxu0 0
    %789 = vmatmul.mubr.bf16.gmra.mrb[0].mxu0 %v751
    %v790 = vpop.f32.mrb[0].mxu0
    %v791 = vadd.f32 0.0, %v790
    %v792 = vpop.f32.mrb[0].mxu0
    %v793 = vpop.f32.mrb[0].mxu0
    %v794 = vpop.f32.mrb[0].mxu0
    %795 = vdwg.mxu0
    %v796 = vmul.f32 %v791, 0.35355338
    %v797 = vsel %vm279, %v796, -inf
    %798 = vmax.xlane.f32.xlu0 %v797
    %v799 = vpop.xlane.xlu0 %798
    %v800 = vsub.f32 %v796, %v799
    %v801 = vmul.f32 %v800, 1.442695
    %v802 = vpow.pop %v801
    %v803 = vsel %vm279, %v802, 0.0
    %804 = vadd.xlane.f32.xlu0 %v803
    %v805 = vpop.xlane.xlu0 %804
    %v806 = vrcp.pop %v805
    %v807 = vmul.f32 %v802, %v806
    %v808 = vpack.c.bf16 %v807, %v807
    %809 = vrot.lane.b32.xlu0 %v747, 64
    %v810 = vpop.permute.xlu0 %809
    %v812 = vsel %vm279, %v808, 0
    %v815 = vsel %vm344, %v810, 0
    %817 = vmatprep.subr.bf16.mxu0 0
    %818 = vmatpush1.bf16.msra.mxu0 %v815
    %819 = vmatprep.subr.bf16.mxu0 0
    %820 = vmatpush1.bf16.msra.mxu0 0
    %821 = vmatprep.subr.bf16.mxu0 0
    %822 = vmatpush1.bf16.msra.mxu0 0
    %823 = vmatprep.subr.bf16.mxu0 0
    %824 = vmatpush1.bf16.msra.mxu0 0
    %825 = vmatprep.subr.bf16.mxu0 0
    %826 = vmatpush1.bf16.msra.mxu0 0
    %827 = vmatprep.subr.bf16.mxu0 0
    %828 = vmatpush1.bf16.msra.mxu0 0
    %829 = vmatprep.subr.bf16.mxu0 0
    %830 = vmatpush1.bf16.msra.mxu0 0
    %831 = vmatprep.subr.bf16.mxu0 0
    %832 = vmatpush1.bf16.msra.mxu0 0
    %833 = vmatprep.subr.bf16.mxu0 0
    %834 = vmatpush1.bf16.msra.mxu0 0
    %835 = vmatprep.subr.bf16.mxu0 0
    %836 = vmatpush1.bf16.msra.mxu0 0
    %837 = vmatprep.subr.bf16.mxu0 0
    %838 = vmatpush1.bf16.msra.mxu0 0
    %839 = vmatprep.subr.bf16.mxu0 0
    %840 = vmatpush1.bf16.msra.mxu0 0
    %841 = vmatprep.subr.bf16.mxu0 0
    %842 = vmatpush1.bf16.msra.mxu0 0
    %843 = vmatprep.subr.bf16.mxu0 0
    %844 = vmatpush1.bf16.msra.mxu0 0
    %845 = vmatprep.subr.bf16.mxu0 0
    %846 = vmatpush1.bf16.msra.mxu0 0
    %847 = vmatprep.subr.bf16.mxu0 0
    %848 = vmatpush1.bf16.msra.mxu0 0
    %849 = vmatprep.mubr.bf16.mxu0 0
    %850 = vmatmul.mubr.bf16.gmra.mrb[0].mxu0 %v812
    %v851 = vpop.f32.mrb[0].mxu0
    %v852 = vadd.f32 0.0, %v851
    %v853 = vpop.f32.mrb[0].mxu0
    %v854 = vpop.f32.mrb[0].mxu0
    %v855 = vpop.f32.mrb[0].mxu0
    %856 = vdwg.mxu0
    %857 = vrot.lane.b32.xlu0 %v747, 120
    %v858 = vpop.permute.xlu0 %857
    %859 = vrot.lane.b32.xlu0 %v747, 88
    %v860 = vpop.permute.xlu0 %859
    %v862 = vsel %vm279, %v858, 0
    %v865 = vsel %vm279, %v860, 0
    %867 = vmatprep.subr.bf16.mxu0 0
    %868 = vmatpush1.bf16.xpose.msra.mxu0 %v865
    %869 = vmatprep.subr.bf16.mxu0 0
    %870 = vmatpush1.bf16.xpose.msra.mxu0 0
    %871 = vmatprep.subr.bf16.mxu0 0
    %872 = vmatpush1.bf16.xpose.msra.mxu0 0
    %873 = vmatprep.subr.bf16.mxu0 0
    %874 = vmatpush1.bf16.xpose.msra.mxu0 0
    %875 = vmatprep.subr.bf16.mxu0 0
    %876 = vmatpush1.bf16.xpose.msra.mxu0 0
    %877 = vmatprep.subr.bf16.mxu0 0
    %878 = vmatpush1.bf16.xpose.msra.mxu0 0
    %879 = vmatprep.subr.bf16.mxu0 0
    %880 = vmatpush1.bf16.xpose.msra.mxu0 0
    %881 = vmatprep.subr.bf16.mxu0 0
    %882 = vmatpush1.bf16.xpose.msra.mxu0 0
    %883 = vmatprep.subr.bf16.mxu0 0
    %884 = vmatpush1.bf16.xpose.msra.mxu0 0
    %885 = vmatprep.subr.bf16.mxu0 0
    %886 = vmatpush1.bf16.xpose.msra.mxu0 0
    %887 = vmatprep.subr.bf16.mxu0 0
    %888 = vmatpush1.bf16.xpose.msra.mxu0 0
    %889 = vmatprep.subr.bf16.mxu0 0
    %890 = vmatpush1.bf16.xpose.msra.mxu0 0
    %891 = vmatprep.subr.bf16.mxu0 0
    %892 = vmatpush1.bf16.xpose.msra.mxu0 0
    %893 = vmatprep.subr.bf16.mxu0 0
    %894 = vmatpush1.bf16.xpose.msra.mxu0 0
    %895 = vmatprep.subr.bf16.mxu0 0
    %896 = vmatpush1.bf16.xpose.msra.mxu0 0
    %897 = vmatprep.subr.bf16.mxu0 0
    %898 = vmatpush1.bf16.xpose.msra.mxu0 0
    %899 = vmatprep.mubr.bf16.mxu0 0
    %900 = vmatmul.mubr.bf16.gmra.mrb[0].mxu0 %v862
    %v901 = vpop.f32.mrb[0].mxu0
    %v902 = vadd.f32 0.0, %v901
    %v903 = vpop.f32.mrb[0].mxu0
    %v904 = vpop.f32.mrb[0].mxu0
    %v905 = vpop.f32.mrb[0].mxu0
    %906 = vdwg.mxu0
    %v907 = vmul.f32 %v902, 0.35355338
    %v908 = vsel %vm279, %v907, -inf
    %909 = vmax.xlane.f32.xlu0 %v908
    %v910 = vpop.xlane.xlu0 %909
    %v911 = vsub.f32 %v907, %v910
    %v912 = vmul.f32 %v911, 1.442695
    %v913 = vpow.pop %v912
    %v914 = vsel %vm279, %v913, 0.0
    %915 = vadd.xlane.f32.xlu0 %v914
    %v916 = vpop.xlane.xlu0 %915
    %v917 = vrcp.pop %v916
    %v918 = vmul.f32 %v913, %v917
    %v919 = vpack.c.bf16 %v918, %v918
    %920 = vrot.lane.b32.xlu0 %v747, 56
    %v921 = vpop.permute.xlu0 %920
    %v923 = vsel %vm279, %v919, 0
    %v926 = vsel %vm344, %v921, 0
    %928 = vmatprep.subr.bf16.mxu0 0
    %929 = vmatpush1.bf16.msra.mxu0 %v926
    %930 = vmatprep.subr.bf16.mxu0 0
    %931 = vmatpush1.bf16.msra.mxu0 0
    %932 = vmatprep.subr.bf16.mxu0 0
    %933 = vmatpush1.bf16.msra.mxu0 0
    %934 = vmatprep.subr.bf16.mxu0 0
    %935 = vmatpush1.bf16.msra.mxu0 0
    %936 = vmatprep.subr.bf16.mxu0 0
    %937 = vmatpush1.bf16.msra.mxu0 0
    %938 = vmatprep.subr.bf16.mxu0 0
    %939 = vmatpush1.bf16.msra.mxu0 0
    %940 = vmatprep.subr.bf16.mxu0 0
    %941 = vmatpush1.bf16.msra.mxu0 0
    %942 = vmatprep.subr.bf16.mxu0 0
    %943 = vmatpush1.bf16.msra.mxu0 0
    %944 = vmatprep.subr.bf16.mxu0 0
    %945 = vmatpush1.bf16.msra.mxu0 0
    %946 = vmatprep.subr.bf16.mxu0 0
    %947 = vmatpush1.bf16.msra.mxu0 0
    %948 = vmatprep.subr.bf16.mxu0 0
    %949 = vmatpush1.bf16.msra.mxu0 0
    %950 = vmatprep.subr.bf16.mxu0 0
    %951 = vmatpush1.bf16.msra.mxu0 0
    %952 = vmatprep.subr.bf16.mxu0 0
    %953 = vmatpush1.bf16.msra.mxu0 0
    %954 = vmatprep.subr.bf16.mxu0 0
    %955 = vmatpush1.bf16.msra.mxu0 0
    %956 = vmatprep.subr.bf16.mxu0 0
    %957 = vmatpush1.bf16.msra.mxu0 0
    %958 = vmatprep.subr.bf16.mxu0 0
    %959 = vmatpush1.bf16.msra.mxu0 0
    %960 = vmatprep.mubr.bf16.mxu0 0
    %961 = vmatmul.mubr.bf16.gmra.mrb[0].mxu0 %v923
    %v962 = vpop.f32.mrb[0].mxu0
    %v963 = vadd.f32 0.0, %v962
    %v964 = vpop.f32.mrb[0].mxu0
    %v965 = vpop.f32.mrb[0].mxu0
    %v966 = vpop.f32.mrb[0].mxu0
    %967 = vdwg.mxu0
    %968 = vrot.lane.b32.xlu0 %v747, 112
    %v969 = vpop.permute.xlu0 %968
    %970 = vrot.lane.b32.xlu0 %v747, 80
    %v971 = vpop.permute.xlu0 %970
    %v973 = vsel %vm279, %v969, 0
    %v976 = vsel %vm279, %v971, 0
    %978 = vmatprep.subr.bf16.mxu0 0
    %979 = vmatpush1.bf16.xpose.msra.mxu0 %v976
    %980 = vmatprep.subr.bf16.mxu0 0
    %981 = vmatpush1.bf16.xpose.msra.mxu0 0
    %982 = vmatprep.subr.bf16.mxu0 0
    %983 = vmatpush1.bf16.xpose.msra.mxu0 0
    %984 = vmatprep.subr.bf16.mxu0 0
    %985 = vmatpush1.bf16.xpose.msra.mxu0 0
    %986 = vmatprep.subr.bf16.mxu0 0
    %987 = vmatpush1.bf16.xpose.msra.mxu0 0
    %988 = vmatprep.subr.bf16.mxu0 0
    %989 = vmatpush1.bf16.xpose.msra.mxu0 0
    %990 = vmatprep.subr.bf16.mxu0 0
    %991 = vmatpush1.bf16.xpose.msra.mxu0 0
    %992 = vmatprep.subr.bf16.mxu0 0
    %993 = vmatpush1.bf16.xpose.msra.mxu0 0
    %994 = vmatprep.subr.bf16.mxu0 0
    %995 = vmatpush1.bf16.xpose.msra.mxu0 0
    %996 = vmatprep.subr.bf16.mxu0 0
    %997 = vmatpush1.bf16.xpose.msra.mxu0 0
    %998 = vmatprep.subr.bf16.mxu0 0
    %999 = vmatpush1.bf16.xpose.msra.mxu0 0
    %1000 = vmatprep.subr.bf16.mxu0 0
    %1001 = vmatpush1.bf16.xpose.msra.mxu0 0
    %1002 = vmatprep.subr.bf16.mxu0 0
    %1003 = vmatpush1.bf16.xpose.msra.mxu0 0
    %1004 = vmatprep.subr.bf16.mxu0 0
    %1005 = vmatpush1.bf16.xpose.msra.mxu0 0
    %1006 = vmatprep.subr.bf16.mxu0 0
    %1007 = vmatpush1.bf16.xpose.msra.mxu0 0
    %1008 = vmatprep.subr.bf16.mxu0 0
    %1009 = vmatpush1.bf16.xpose.msra.mxu0 0
    %1010 = vmatprep.mubr.bf16.mxu0 0
    %1011 = vmatmul.mubr.bf16.gmra.mrb[0].mxu0 %v973
    %v1012 = vpop.f32.mrb[0].mxu0
    %v1013 = vadd.f32 0.0, %v1012
    %v1014 = vpop.f32.mrb[0].mxu0
    %v1015 = vpop.f32.mrb[0].mxu0
    %v1016 = vpop.f32.mrb[0].mxu0
    %1017 = vdwg.mxu0
    %v1018 = vmul.f32 %v1013, 0.35355338
    %v1019 = vsel %vm279, %v1018, -inf
    %1020 = vmax.xlane.f32.xlu0 %v1019
    %v1021 = vpop.xlane.xlu0 %1020
    %v1022 = vsub.f32 %v1018, %v1021
    %v1023 = vmul.f32 %v1022, 1.442695
    %v1024 = vpow.pop %v1023
    %v1025 = vsel %vm279, %v1024, 0.0
    %1026 = vadd.xlane.f32.xlu0 %v1025
    %v1027 = vpop.xlane.xlu0 %1026
    %v1028 = vrcp.pop %v1027
    %v1029 = vmul.f32 %v1024, %v1028
    %v1030 = vpack.c.bf16 %v1029, %v1029
    %1031 = vrot.lane.b32.xlu0 %v747, 48
    %v1032 = vpop.permute.xlu0 %1031
    %v1034 = vsel %vm279, %v1030, 0
    %v1037 = vsel %vm344, %v1032, 0
    %1039 = vmatprep.subr.bf16.mxu0 0
    %1040 = vmatpush1.bf16.msra.mxu0 %v1037
    %1041 = vmatprep.subr.bf16.mxu0 0
    %1042 = vmatpush1.bf16.msra.mxu0 0
    %1043 = vmatprep.subr.bf16.mxu0 0
    %1044 = vmatpush1.bf16.msra.mxu0 0
    %1045 = vmatprep.subr.bf16.mxu0 0
    %1046 = vmatpush1.bf16.msra.mxu0 0
    %1047 = vmatprep.subr.bf16.mxu0 0
    %1048 = vmatpush1.bf16.msra.mxu0 0
    %1049 = vmatprep.subr.bf16.mxu0 0
    %1050 = vmatpush1.bf16.msra.mxu0 0
    %1051 = vmatprep.subr.bf16.mxu0 0
    %1052 = vmatpush1.bf16.msra.mxu0 0
    %1053 = vmatprep.subr.bf16.mxu0 0
    %1054 = vmatpush1.bf16.msra.mxu0 0
    %1055 = vmatprep.subr.bf16.mxu0 0
    %1056 = vmatpush1.bf16.msra.mxu0 0
    %1057 = vmatprep.subr.bf16.mxu0 0
    %1058 = vmatpush1.bf16.msra.mxu0 0
    %1059 = vmatprep.subr.bf16.mxu0 0
    %1060 = vmatpush1.bf16.msra.mxu0 0
    %1061 = vmatprep.subr.bf16.mxu0 0
    %1062 = vmatpush1.bf16.msra.mxu0 0
    %1063 = vmatprep.subr.bf16.mxu0 0
    %1064 = vmatpush1.bf16.msra.mxu0 0
    %1065 = vmatprep.subr.bf16.mxu0 0
    %1066 = vmatpush1.bf16.msra.mxu0 0
    %1067 = vmatprep.subr.bf16.mxu0 0
    %1068 = vmatpush1.bf16.msra.mxu0 0
    %1069 = vmatprep.subr.bf16.mxu0 0
    %1070 = vmatpush1.bf16.msra.mxu0 0
    %1071 = vmatprep.mubr.bf16.mxu0 0
    %1072 = vmatmul.mubr.bf16.gmra.mrb[0].mxu0 %v1034
    %v1073 = vpop.f32.mrb[0].mxu0
    %v1074 = vadd.f32 0.0, %v1073
    %v1075 = vpop.f32.mrb[0].mxu0
    %v1076 = vpop.f32.mrb[0].mxu0
    %v1077 = vpop.f32.mrb[0].mxu0
    %1078 = vdwg.mxu0
    %1079 = vrot.lane.b32.xlu0 %v747, 104
    %v1080 = vpop.permute.xlu0 %1079
    %1081 = vrot.lane.b32.xlu0 %v747, 72
    %v1082 = vpop.permute.xlu0 %1081
    %v1084 = vsel %vm279, %v1080, 0
    %v1087 = vsel %vm279, %v1082, 0
    %1089 = vmatprep.subr.bf16.mxu0 0
    %1090 = vmatpush1.bf16.xpose.msra.mxu0 %v1087
    %1091 = vmatprep.subr.bf16.mxu0 0
    %1092 = vmatpush1.bf16.xpose.msra.mxu0 0
    %1093 = vmatprep.subr.bf16.mxu0 0
    %1094 = vmatpush1.bf16.xpose.msra.mxu0 0
    %1095 = vmatprep.subr.bf16.mxu0 0
    %1096 = vmatpush1.bf16.xpose.msra.mxu0 0
    %1097 = vmatprep.subr.bf16.mxu0 0
    %1098 = vmatpush1.bf16.xpose.msra.mxu0 0
    %1099 = vmatprep.subr.bf16.mxu0 0
    %1100 = vmatpush1.bf16.xpose.msra.mxu0 0
    %1101 = vmatprep.subr.bf16.mxu0 0
    %1102 = vmatpush1.bf16.xpose.msra.mxu0 0
    %1103 = vmatprep.subr.bf16.mxu0 0
    %1104 = vmatpush1.bf16.xpose.msra.mxu0 0
    %1105 = vmatprep.subr.bf16.mxu0 0
    %1106 = vmatpush1.bf16.xpose.msra.mxu0 0
    %1107 = vmatprep.subr.bf16.mxu0 0
    %1108 = vmatpush1.bf16.xpose.msra.mxu0 0
    %1109 = vmatprep.subr.bf16.mxu0 0
    %1110 = vmatpush1.bf16.xpose.msra.mxu0 0
    %1111 = vmatprep.subr.bf16.mxu0 0
    %1112 = vmatpush1.bf16.xpose.msra.mxu0 0
    %1113 = vmatprep.subr.bf16.mxu0 0
    %1114 = vmatpush1.bf16.xpose.msra.mxu0 0
    %1115 = vmatprep.subr.bf16.mxu0 0
    %1116 = vmatpush1.bf16.xpose.msra.mxu0 0
    %1117 = vmatprep.subr.bf16.mxu0 0
    %1118 = vmatpush1.bf16.xpose.msra.mxu0 0
    %1119 = vmatprep.subr.bf16.mxu0 0
    %1120 = vmatpush1.bf16.xpose.msra.mxu0 0
    %1121 = vmatprep.mubr.bf16.mxu0 0
    %1122 = vmatmul.mubr.bf16.gmra.mrb[0].mxu0 %v1084
    %v1123 = vpop.f32.mrb[0].mxu0
    %v1124 = vadd.f32 0.0, %v1123
    %v1125 = vpop.f32.mrb[0].mxu0
    %v1126 = vpop.f32.mrb[0].mxu0
    %v1127 = vpop.f32.mrb[0].mxu0
    %1128 = vdwg.mxu0
    %v1129 = vmul.f32 %v1124, 0.35355338
    %v1130 = vsel %vm279, %v1129, -inf
    %1131 = vmax.xlane.f32.xlu0 %v1130
    %v1132 = vpop.xlane.xlu0 %1131
    %v1133 = vsub.f32 %v1129, %v1132
    %v1134 = vmul.f32 %v1133, 1.442695
    %v1135 = vpow.pop %v1134
    %v1136 = vsel %vm279, %v1135, 0.0
    %1137 = vadd.xlane.f32.xlu0 %v1136
    %v1138 = vpop.xlane.xlu0 %1137
    %v1139 = vrcp.pop %v1138
    %v1140 = vmul.f32 %v1135, %v1139
    %v1141 = vpack.c.bf16 %v1140, %v1140
    %1142 = vrot.lane.b32.xlu0 %v747, 40
    %v1143 = vpop.permute.xlu0 %1142
    %v1145 = vsel %vm279, %v1141, 0
    %v1148 = vsel %vm344, %v1143, 0
    %1150 = vmatprep.subr.bf16.mxu0 0
    %1151 = vmatpush1.bf16.msra.mxu0 %v1148
    %1152 = vmatprep.subr.bf16.mxu0 0
    %1153 = vmatpush1.bf16.msra.mxu0 0
    %1154 = vmatprep.subr.bf16.mxu0 0
    %1155 = vmatpush1.bf16.msra.mxu0 0
    %1156 = vmatprep.subr.bf16.mxu0 0
    %1157 = vmatpush1.bf16.msra.mxu0 0
    %1158 = vmatprep.subr.bf16.mxu0 0
    %1159 = vmatpush1.bf16.msra.mxu0 0
    %1160 = vmatprep.subr.bf16.mxu0 0
    %1161 = vmatpush1.bf16.msra.mxu0 0
    %1162 = vmatprep.subr.bf16.mxu0 0
    %1163 = vmatpush1.bf16.msra.mxu0 0
    %1164 = vmatprep.subr.bf16.mxu0 0
    %1165 = vmatpush1.bf16.msra.mxu0 0
    %1166 = vmatprep.subr.bf16.mxu0 0
    %1167 = vmatpush1.bf16.msra.mxu0 0
    %1168 = vmatprep.subr.bf16.mxu0 0
    %1169 = vmatpush1.bf16.msra.mxu0 0
    %1170 = vmatprep.subr.bf16.mxu0 0
    %1171 = vmatpush1.bf16.msra.mxu0 0
    %1172 = vmatprep.subr.bf16.mxu0 0
    %1173 = vmatpush1.bf16.msra.mxu0 0
    %1174 = vmatprep.subr.bf16.mxu0 0
    %1175 = vmatpush1.bf16.msra.mxu0 0
    %1176 = vmatprep.subr.bf16.mxu0 0
    %1177 = vmatpush1.bf16.msra.mxu0 0
    %1178 = vmatprep.subr.bf16.mxu0 0
    %1179 = vmatpush1.bf16.msra.mxu0 0
    %1180 = vmatprep.subr.bf16.mxu0 0
    %1181 = vmatpush1.bf16.msra.mxu0 0
    %1182 = vmatprep.mubr.bf16.mxu0 0
    %1183 = vmatmul.mubr.bf16.gmra.mrb[0].mxu0 %v1145
    %v1184 = vpop.f32.mrb[0].mxu0
    %v1185 = vadd.f32 0.0, %v1184
    %v1186 = vpop.f32.mrb[0].mxu0
    %v1187 = vpop.f32.mrb[0].mxu0
    %v1188 = vpop.f32.mrb[0].mxu0
    %1189 = vdwg.mxu0
    %1191 = vrot.lane.b32.xlu0 %v963, 8
    %v1192 = vpop.permute.xlu0 %1191
    %1195 = vrot.lane.b32.xlu0 %v1074, 16
    %v1196 = vpop.permute.xlu0 %1195
    %1199 = vrot.lane.b32.xlu0 %v1185, 24
    %v1200 = vpop.permute.xlu0 %1199
    %v1202 = vsel %vm279, %v852, %v1192
    %v1203 = vsel %vm734, %v1202, %v1196
    %v1204 = vsel %vm736, %v1203, %v1200
    %v1205 = vsel %vm230, %v1204, 0.0
    %v1206 = vrot.slane %v1205, 4
    %v1207 = vadd.f32 %v1205, %v1206
    %v1208 = vrot.slane %v1207, 2
    %v1209 = vadd.f32 %v1207, %v1208
    %v1210 = vrot.slane %v1209, 1
    %v1211 = vadd.f32 %v1209, %v1210
    %v1212 = vmul.f32 %v1211, %v745
    %vm1213 = vcmask 1040384
    %v1214 = vsel %vm1213, %v746, %v1212
    %v1215 = vpack.c.bf16 %v1204, %v737
    %v1216 = vlaneseq
    %v1217 = vshrl.u32 %v1216, 7
    %v1218 = vld [vmem:[%s9] sm:$0xf]
    %v1219 = vld [vmem:[%s9 + $0x4] sm:$0xf]
    %v1220 = vld [vmem:[%s9 + $0x8] sm:$0xf]
    %v1221 = vld [vmem:[%s9 + $0xc] sm:$0xf]
    %v1226 = vunpack.c.l.b16 %v1218
    %v1227 = vunpack.c.l.b16 %v1219
    %v1228 = vunpack.c.l.b16 %v1220
    %v1229 = vunpack.c.l.b16 %v1221
    %v1230 = vpack.c.b16 %v1227, %v1226
    %v1231 = vpack.c.b16 %v1229, %v1228
    %v1235 = vsel %vm230, %v1215, 0
    %1237 = vmatprep.subr.bf16.mxu0 0
    %1238 = vmatpush1.bf16.msra.mxu0 %v1230
    %1239 = vmatprep.subr.bf16.mxu0 0
    %1240 = vmatpush1.bf16.msra.mxu0 %v1231
    %1241 = vmatprep.subr.bf16.mxu0 0
    %1242 = vmatpush1.bf16.msra.mxu0 0
    %1243 = vmatprep.subr.bf16.mxu0 0
    %1244 = vmatpush1.bf16.msra.mxu0 0
    %1245 = vmatprep.subr.bf16.mxu0 0
    %1246 = vmatpush1.bf16.msra.mxu0 0
    %1247 = vmatprep.subr.bf16.mxu0 0
    %1248 = vmatpush1.bf16.msra.mxu0 0
    %1249 = vmatprep.subr.bf16.mxu0 0
    %1250 = vmatpush1.bf16.msra.mxu0 0
    %1251 = vmatprep.subr.bf16.mxu0 0
    %1252 = vmatpush1.bf16.msra.mxu0 0
    %1253 = vmatprep.subr.bf16.mxu0 0
    %1254 = vmatpush1.bf16.msra.mxu0 0
    %1255 = vmatprep.subr.bf16.mxu0 0
    %1256 = vmatpush1.bf16.msra.mxu0 0
    %1257 = vmatprep.subr.bf16.mxu0 0
    %1258 = vmatpush1.bf16.msra.mxu0 0
    %1259 = vmatprep.subr.bf16.mxu0 0
    %1260 = vmatpush1.bf16.msra.mxu0 0
    %1261 = vmatprep.subr.bf16.mxu0 0
    %1262 = vmatpush1.bf16.msra.mxu0 0
    %1263 = vmatprep.subr.bf16.mxu0 0
    %1264 = vmatpush1.bf16.msra.mxu0 0
    %1265 = vmatprep.subr.bf16.mxu0 0
    %1266 = vmatpush1.bf16.msra.mxu0 0
    %1267 = vmatprep.subr.bf16.mxu0 0
    %1268 = vmatpush1.bf16.msra.mxu0 0
    %1269 = vmatprep.mubr.bf16.mxu0 0
    %1270 = vmatmul.mubr.bf16.gmra.mrb[0].mxu0 %v1235
    %v1271 = vpop.f32.mrb[0].mxu0
    %v1272 = vadd.f32 0.0, %v1271
    %v1273 = vpop.f32.mrb[0].mxu0
    %v1274 = vpop.f32.mrb[0].mxu0
    %v1275 = vadd.f32 0.0, %v1274
    %v1276 = vpop.f32.mrb[0].mxu0
    %1277 = vdwg.mxu0
    %v1278 = vld [vmem:[#allocation12] sm:$0x1]
    %v1280 = vlaneseq
    %v1281 = vshrl.u32 %v1280, 7
    %v1282 = vsub.s32 0, %v1281
    %v1283 = vrot.slane %v1278, %v1282
    %1284 = vrot.lane.b32.xlu0 %v1283, 64
    %v1285 = vpop.permute.xlu0 %1284
    %v1287 = vadd.f32 %v1272, %v1285
    %v1288 = vadd.f32 %v1275, %v1285
    %v1289 = vmax.f32 %v1287, 0.0
    %v1290 = vmax.f32 %v1288, 0.0
    %v1291 = vrot.slane %v737, 7
    %v1292 = vrot.slane %v1204, 7
    %vm1293 = vcmp.lt.s32.totalorder %v1217, 1
    %v1294 = vsel %vm1293, %v1291, %v1292
    %v1295 = vsel %vm1293, %v1292, %v1291
    %vm1296 = vcmp.ge.s32.totalorder %v1217, 1
    %v1297 = vsel %vm1296, 1, 0
    %1298 = vset.pattern.permute.xlu0 0
    %1299 = vperm.xlu0 %1298, %v1297
    %v1300 = vpop.permute.xlu0 %1299
    %vm1301 = vcmp.eq.s32.totalorder %v1300, 1
    %v1302 = vsel %vm1301, %v1295, 0.0
    %v1303 = vsel %vm1301, %v1294, 0.0
    %v1304 = vpack.c.bf16 %v1303, %v1302
    %v1305 = vld [vmem:[#allocation8] sm:$0xf]
    %v1306 = vld [vmem:[#allocation8 + $0x4] sm:$0xf]
    %v1307 = vld [vmem:[#allocation8 + $0x8] sm:$0xf]
    %v1308 = vld [vmem:[#allocation8 + $0xc] sm:$0xf]
    %v1313 = vunpack.c.l.b16 %v1305
    %v1314 = vunpack.c.l.b16 %v1306
    %v1315 = vunpack.c.l.b16 %v1307
    %v1316 = vunpack.c.l.b16 %v1308
    %v1317 = vpack.c.b16 %v1314, %v1313
    %v1318 = vpack.c.b16 %v1316, %v1315
    %v1322 = vsel %vm230, %v1304, 0
    %1324 = vmatprep.subr.bf16.mxu0 0
    %1325 = vmatpush1.bf16.msra.mxu0 %v1317
    %1326 = vmatprep.subr.bf16.mxu0 0
    %1327 = vmatpush1.bf16.msra.mxu0 %v1318
    %1328 = vmatprep.subr.bf16.mxu0 0
    %1329 = vmatpush1.bf16.msra.mxu0 0
    %1330 = vmatprep.subr.bf16.mxu0 0
    %1331 = vmatpush1.bf16.msra.mxu0 0
    %1332 = vmatprep.subr.bf16.mxu0 0
    %1333 = vmatpush1.bf16.msra.mxu0 0
    %1334 = vmatprep.subr.bf16.mxu0 0
    %1335 = vmatpush1.bf16.msra.mxu0 0
    %1336 = vmatprep.subr.bf16.mxu0 0
    %1337 = vmatpush1.bf16.msra.mxu0 0
    %1338 = vmatprep.subr.bf16.mxu0 0
    %1339 = vmatpush1.bf16.msra.mxu0 0
    %1340 = vmatprep.subr.bf16.mxu0 0
    %1341 = vmatpush1.bf16.msra.mxu0 0
    %1342 = vmatprep.subr.bf16.mxu0 0
    %1343 = vmatpush1.bf16.msra.mxu0 0
    %1344 = vmatprep.subr.bf16.mxu0 0
    %1345 = vmatpush1.bf16.msra.mxu0 0
    %1346 = vmatprep.subr.bf16.mxu0 0
    %1347 = vmatpush1.bf16.msra.mxu0 0
    %1348 = vmatprep.subr.bf16.mxu0 0
    %1349 = vmatpush1.bf16.msra.mxu0 0
    %1350 = vmatprep.subr.bf16.mxu0 0
    %1351 = vmatpush1.bf16.msra.mxu0 0
    %1352 = vmatprep.subr.bf16.mxu0 0
    %1353 = vmatpush1.bf16.msra.mxu0 0
    %1354 = vmatprep.subr.bf16.mxu0 0
    %1355 = vmatpush1.bf16.msra.mxu0 0
    %1356 = vmatprep.mubr.bf16.mxu0 0
    %1357 = vmatmul.mubr.bf16.gmra.mrb[0].mxu0 %v1322
    %v1358 = vpop.f32.mrb[0].mxu0
    %v1359 = vadd.f32 0.0, %v1358
    %v1360 = vpop.f32.mrb[0].mxu0
    %v1361 = vpop.f32.mrb[0].mxu0
    %v1362 = vadd.f32 0.0, %v1361
    %v1363 = vpop.f32.mrb[0].mxu0
    %1364 = vdwg.mxu0
    %v1365 = vrot.slane %v737, 1
    %v1366 = vrot.slane %v1204, 1
    %vm1367 = vcmp.lt.s32.totalorder %v1217, 7
    %v1368 = vsel %vm1367, %v1365, %v1366
    %v1369 = vsel %vm1367, %v1366, %v1365
    %v1370 = vsel %vm1367, 1, 0
    %1371 = vset.pattern.permute.xlu0 0
    %1372 = vperm.xlu0 %1371, %v1370
    %v1373 = vpop.permute.xlu0 %1372
    %vm1374 = vcmp.eq.s32.totalorder %v1373, 1
    %v1375 = vsel %vm1374, %v1368, 0.0
    %v1376 = vsel %vm1374, %v1369, 0.0
    %v1377 = vpack.c.bf16 %v1376, %v1375
    %v1378 = vld [vmem:[#allocation9] sm:$0xf]
    %v1379 = vld [vmem:[#allocation9 + $0x4] sm:$0xf]
    %v1380 = vld [vmem:[#allocation9 + $0x8] sm:$0xf]
    %v1381 = vld [vmem:[#allocation9 + $0xc] sm:$0xf]
    %v1386 = vunpack.c.l.b16 %v1378
    %v1387 = vunpack.c.l.b16 %v1379
    %v1388 = vunpack.c.l.b16 %v1380
    %v1389 = vunpack.c.l.b16 %v1381
    %v1390 = vpack.c.b16 %v1387, %v1386
    %v1391 = vpack.c.b16 %v1389, %v1388
    %v1395 = vsel %vm230, %v1377, 0
    %1397 = vmatprep.subr.bf16.mxu0 0
    %1398 = vmatpush1.bf16.msra.mxu0 %v1390
    %1399 = vmatprep.subr.bf16.mxu0 0
    %1400 = vmatpush1.bf16.msra.mxu0 %v1391
    %1401 = vmatprep.subr.bf16.mxu0 0
    %1402 = vmatpush1.bf16.msra.mxu0 0
    %1403 = vmatprep.subr.bf16.mxu0 0
    %1404 = vmatpush1.bf16.msra.mxu0 0
    %1405 = vmatprep.subr.bf16.mxu0 0
    %1406 = vmatpush1.bf16.msra.mxu0 0
    %1407 = vmatprep.subr.bf16.mxu0 0
    %1408 = vmatpush1.bf16.msra.mxu0 0
    %1409 = vmatprep.subr.bf16.mxu0 0
    %1410 = vmatpush1.bf16.msra.mxu0 0
    %1411 = vmatprep.subr.bf16.mxu0 0
    %1412 = vmatpush1.bf16.msra.mxu0 0
    %1413 = vmatprep.subr.bf16.mxu0 0
    %1414 = vmatpush1.bf16.msra.mxu0 0
    %1415 = vmatprep.subr.bf16.mxu0 0
    %1416 = vmatpush1.bf16.msra.mxu0 0
    %1417 = vmatprep.subr.bf16.mxu0 0
    %1418 = vmatpush1.bf16.msra.mxu0 0
    %1419 = vmatprep.subr.bf16.mxu0 0
    %1420 = vmatpush1.bf16.msra.mxu0 0
    %1421 = vmatprep.subr.bf16.mxu0 0
    %1422 = vmatpush1.bf16.msra.mxu0 0
    %1423 = vmatprep.subr.bf16.mxu0 0
    %1424 = vmatpush1.bf16.msra.mxu0 0
    %1425 = vmatprep.subr.bf16.mxu0 0
    %1426 = vmatpush1.bf16.msra.mxu0 0
    %1427 = vmatprep.subr.bf16.mxu0 0
    %1428 = vmatpush1.bf16.msra.mxu0 0
    %1429 = vmatprep.mubr.bf16.mxu0 0
    %1430 = vmatmul.mubr.bf16.gmra.mrb[0].mxu0 %v1395
    %v1431 = vpop.f32.mrb[0].mxu0
    %v1432 = vadd.f32 0.0, %v1431
    %v1433 = vpop.f32.mrb[0].mxu0
    %v1434 = vpop.f32.mrb[0].mxu0
    %v1435 = vadd.f32 0.0, %v1434
    %v1436 = vpop.f32.mrb[0].mxu0
    %1437 = vdwg.mxu0
    %v1438 = vadd.f32 %v1272, %v1359
    %v1439 = vadd.f32 %v1275, %v1362
    %v1440 = vadd.f32 %v1438, %v1432
    %v1441 = vadd.f32 %v1439, %v1435
    %v1442 = vrot.slane %v737, 6
    %v1443 = vrot.slane %v1204, 6
    %vm1444 = vcmp.lt.s32.totalorder %v1217, 2
    %v1445 = vsel %vm1444, %v1442, %v1443
    %v1446 = vsel %vm1444, %v1443, %v1442
    %vm1447 = vcmp.ge.s32.totalorder %v1217, 2
    %v1448 = vsel %vm1447, 1, 0
    %1449 = vset.pattern.permute.xlu0 0
    %1450 = vperm.xlu0 %1449, %v1448
    %v1451 = vpop.permute.xlu0 %1450
    %vm1452 = vcmp.eq.s32.totalorder %v1451, 1
    %v1453 = vsel %vm1452, %v1446, 0.0
    %v1454 = vsel %vm1452, %v1445, 0.0
    %v1455 = vpack.c.bf16 %v1454, %v1453
    %v1456 = vld [vmem:[#allocation11] sm:$0xf]
    %v1457 = vld [vmem:[#allocation11 + $0x4] sm:$0xf]
    %v1458 = vld [vmem:[#allocation11 + $0x8] sm:$0xf]
    %v1459 = vld [vmem:[#allocation11 + $0xc] sm:$0xf]
    %v1464 = vunpack.c.l.b16 %v1456
    %v1465 = vunpack.c.l.b16 %v1457
    %v1466 = vunpack.c.l.b16 %v1458
    %v1467 = vunpack.c.l.b16 %v1459
    %v1468 = vpack.c.b16 %v1465, %v1464
    %v1469 = vpack.c.b16 %v1467, %v1466
    %v1473 = vsel %vm230, %v1455, 0
    %1475 = vmatprep.subr.bf16.mxu0 0
    %1476 = vmatpush1.bf16.msra.mxu0 %v1468
    %1477 = vmatprep.subr.bf16.mxu0 0
    %1478 = vmatpush1.bf16.msra.mxu0 %v1469
    %1479 = vmatprep.subr.bf16.mxu0 0
    %1480 = vmatpush1.bf16.msra.mxu0 0
    %1481 = vmatprep.subr.bf16.mxu0 0
    %1482 = vmatpush1.bf16.msra.mxu0 0
    %1483 = vmatprep.subr.bf16.mxu0 0
    %1484 = vmatpush1.bf16.msra.mxu0 0
    %1485 = vmatprep.subr.bf16.mxu0 0
    %1486 = vmatpush1.bf16.msra.mxu0 0
    %1487 = vmatprep.subr.bf16.mxu0 0
    %1488 = vmatpush1.bf16.msra.mxu0 0
    %1489 = vmatprep.subr.bf16.mxu0 0
    %1490 = vmatpush1.bf16.msra.mxu0 0
    %1491 = vmatprep.subr.bf16.mxu0 0
    %1492 = vmatpush1.bf16.msra.mxu0 0
    %1493 = vmatprep.subr.bf16.mxu0 0
    %1494 = vmatpush1.bf16.msra.mxu0 0
    %1495 = vmatprep.subr.bf16.mxu0 0
    %1496 = vmatpush1.bf16.msra.mxu0 0
    %1497 = vmatprep.subr.bf16.mxu0 0
    %1498 = vmatpush1.bf16.msra.mxu0 0
    %1499 = vmatprep.subr.bf16.mxu0 0
    %1500 = vmatpush1.bf16.msra.mxu0 0
    %1501 = vmatprep.subr.bf16.mxu0 0
    %1502 = vmatpush1.bf16.msra.mxu0 0
    %1503 = vmatprep.subr.bf16.mxu0 0
    %1504 = vmatpush1.bf16.msra.mxu0 0
    %1505 = vmatprep.subr.bf16.mxu0 0
    %1506 = vmatpush1.bf16.msra.mxu0 0
    %1507 = vmatprep.mubr.bf16.mxu0 0
    %1508 = vmatmul.mubr.bf16.gmra.mrb[0].mxu0 %v1473
    %v1509 = vpop.f32.mrb[0].mxu0
    %v1510 = vadd.f32 0.0, %v1509
    %v1511 = vpop.f32.mrb[0].mxu0
    %v1512 = vpop.f32.mrb[0].mxu0
    %v1513 = vadd.f32 0.0, %v1512
    %v1514 = vpop.f32.mrb[0].mxu0
    %1515 = vdwg.mxu0
    %1518 = vrot.lane.b32.xlu0 %v1510, 32
    %v1519 = vpop.permute.xlu0 %1518
    %1520 = vrot.lane.b32.xlu0 %v1513, 32
    %v1521 = vpop.permute.xlu0 %1520
    %v1524 = vadd.f32 %v1440, %v1519
    %v1525 = vadd.f32 %v1441, %v1521
    %v1526 = vrot.slane %v737, 2
    %v1527 = vrot.slane %v1204, 2
    %vm1528 = vcmp.lt.s32.totalorder %v1217, 6
    %v1529 = vsel %vm1528, %v1526, %v1527
    %v1530 = vsel %vm1528, %v1527, %v1526
    %v1531 = vsel %vm1528, 1, 0
    %1532 = vset.pattern.permute.xlu0 0
    %1533 = vperm.xlu0 %1532, %v1531
    %v1534 = vpop.permute.xlu0 %1533
    %vm1535 = vcmp.eq.s32.totalorder %v1534, 1
    %v1536 = vsel %vm1535, %v1529, 0.0
    %v1537 = vsel %vm1535, %v1530, 0.0
    %v1538 = vpack.c.bf16 %v1537, %v1536
    %v1539 = vld [vmem:[%s13] sm:$0xf]
    %v1540 = vld [vmem:[%s13 + $0x4] sm:$0xf]
    %v1541 = vld [vmem:[%s13 + $0x8] sm:$0xf]
    %v1542 = vld [vmem:[%s13 + $0xc] sm:$0xf]
    %v1547 = vunpack.c.l.b16 %v1539
    %v1548 = vunpack.c.l.b16 %v1540
    %v1549 = vunpack.c.l.b16 %v1541
    %v1550 = vunpack.c.l.b16 %v1542
    %v1551 = vpack.c.b16 %v1548, %v1547
    %v1552 = vpack.c.b16 %v1550, %v1549
    %v1556 = vsel %vm230, %v1538, 0
    %1558 = vmatprep.subr.bf16.mxu0 0
    %1559 = vmatpush1.bf16.msra.mxu0 %v1551
    %1560 = vmatprep.subr.bf16.mxu0 0
    %1561 = vmatpush1.bf16.msra.mxu0 %v1552
    %1562 = vmatprep.subr.bf16.mxu0 0
    %1563 = vmatpush1.bf16.msra.mxu0 0
    %1564 = vmatprep.subr.bf16.mxu0 0
    %1565 = vmatpush1.bf16.msra.mxu0 0
    %1566 = vmatprep.subr.bf16.mxu0 0
    %1567 = vmatpush1.bf16.msra.mxu0 0
    %1568 = vmatprep.subr.bf16.mxu0 0
    %1569 = vmatpush1.bf16.msra.mxu0 0
    %1570 = vmatprep.subr.bf16.mxu0 0
    %1571 = vmatpush1.bf16.msra.mxu0 0
    %1572 = vmatprep.subr.bf16.mxu0 0
    %1573 = vmatpush1.bf16.msra.mxu0 0
    %1574 = vmatprep.subr.bf16.mxu0 0
    %1575 = vmatpush1.bf16.msra.mxu0 0
    %1576 = vmatprep.subr.bf16.mxu0 0
    %1577 = vmatpush1.bf16.msra.mxu0 0
    %1578 = vmatprep.subr.bf16.mxu0 0
    %1579 = vmatpush1.bf16.msra.mxu0 0
    %1580 = vmatprep.subr.bf16.mxu0 0
    %1581 = vmatpush1.bf16.msra.mxu0 0
    %1582 = vmatprep.subr.bf16.mxu0 0
    %1583 = vmatpush1.bf16.msra.mxu0 0
    %1584 = vmatprep.subr.bf16.mxu0 0
    %1585 = vmatpush1.bf16.msra.mxu0 0
    %1586 = vmatprep.subr.bf16.mxu0 0
    %1587 = vmatpush1.bf16.msra.mxu0 0
    %1588 = vmatprep.subr.bf16.mxu0 0
    %1589 = vmatpush1.bf16.msra.mxu0 0
    %1590 = vmatprep.mubr.bf16.mxu0 0
    %1591 = vmatmul.mubr.bf16.gmra.mrb[0].mxu0 %v1556
    %v1592 = vpop.f32.mrb[0].mxu0
    %v1593 = vadd.f32 0.0, %v1592
    %v1594 = vpop.f32.mrb[0].mxu0
    %v1595 = vpop.f32.mrb[0].mxu0
    %v1596 = vadd.f32 0.0, %v1595
    %v1597 = vpop.f32.mrb[0].mxu0
    %1598 = vdwg.mxu0
    %1601 = vrot.lane.b32.xlu0 %v1593, 32
    %v1602 = vpop.permute.xlu0 %1601
    %1603 = vrot.lane.b32.xlu0 %v1596, 32
    %v1604 = vpop.permute.xlu0 %1603
    %v1607 = vadd.f32 %v1524, %v1602
    %v1608 = vadd.f32 %v1525, %v1604
    %v1609 = vld [vmem:[#allocation14] sm:$0x1]
    %v1611 = vlaneseq
    %v1612 = vshrl.u32 %v1611, 7
    %v1613 = vsub.s32 0, %v1612
    %v1614 = vrot.slane %v1609, %v1613
    %v1616 = vadd.f32 %v1440, %v1614
    %v1617 = vadd.f32 %v1441, %v1614
    %v1618 = vmax.f32 %v1616, 0.0
    %v1619 = vmax.f32 %v1617, 0.0
    %v1620 = vld [vmem:[#allocation15] sm:$0x1]
    %v1622 = vlaneseq
    %v1623 = vshrl.u32 %v1622, 7
    %v1624 = vsub.s32 0, %v1623
    %v1625 = vrot.slane %v1620, %v1624
    %1626 = vrot.lane.b32.xlu0 %v1625, 32
    %v1627 = vpop.permute.xlu0 %1626
    %v1629 = vadd.f32 %v1607, %v1627
    %v1630 = vadd.f32 %v1608, %v1627
    %v1631 = vmax.f32 %v1629, 0.0
    %v1632 = vmax.f32 %v1630, 0.0
    %v1633 = vpack.c.bf16 %v1619, %v1618
    %v1634 = vld [vmem:[%s17] sm:$0xf]
    %v1635 = vld [vmem:[%s17 + $0x4] sm:$0xf]
    %v1636 = vld [vmem:[%s17 + $0x8] sm:$0xf]
    %v1637 = vld [vmem:[%s17 + $0xc] sm:$0xf]
    %v1638 = vpack.c.bf16 %v1632, %v1631
    %v1639 = vld [vmem:[#allocation17] sm:$0xf]
    %v1640 = vld [vmem:[#allocation17 + $0x4] sm:$0xf]
    %v1641 = vld [vmem:[#allocation17 + $0x8] sm:$0xf]
    %v1642 = vld [vmem:[#allocation17 + $0xc] sm:$0xf]
    %1644 = vrot.lane.b32.xlu0 %v1638, 96
    %v1645 = vpop.permute.xlu0 %1644
    %v1650 = vunpack.c.l.b16 %v1639
    %v1651 = vunpack.c.l.b16 %v1640
    %v1652 = vunpack.c.l.b16 %v1641
    %v1653 = vunpack.c.l.b16 %v1642
    %v1654 = vpack.c.b16 %v1651, %v1650
    %v1655 = vpack.c.b16 %v1653, %v1652
    %v1659 = vsel %vm230, %v1645, 0
    %1661 = vmatprep.subr.bf16.mxu0 0
    %1662 = vmatpush1.bf16.msra.mxu0 %v1654
    %1663 = vmatprep.subr.bf16.mxu0 0
    %1664 = vmatpush1.bf16.msra.mxu0 %v1655
    %1665 = vmatprep.subr.bf16.mxu0 0
    %1666 = vmatpush1.bf16.msra.mxu0 0
    %1667 = vmatprep.subr.bf16.mxu0 0
    %1668 = vmatpush1.bf16.msra.mxu0 0
    %1669 = vmatprep.subr.bf16.mxu0 0
    %1670 = vmatpush1.bf16.msra.mxu0 0
    %1671 = vmatprep.subr.bf16.mxu0 0
    %1672 = vmatpush1.bf16.msra.mxu0 0
    %1673 = vmatprep.subr.bf16.mxu0 0
    %1674 = vmatpush1.bf16.msra.mxu0 0
    %1675 = vmatprep.subr.bf16.mxu0 0
    %1676 = vmatpush1.bf16.msra.mxu0 0
    %1677 = vmatprep.subr.bf16.mxu0 0
    %1678 = vmatpush1.bf16.msra.mxu0 0
    %1679 = vmatprep.subr.bf16.mxu0 0
    %1680 = vmatpush1.bf16.msra.mxu0 0
    %1681 = vmatprep.subr.bf16.mxu0 0
    %1682 = vmatpush1.bf16.msra.mxu0 0
    %1683 = vmatprep.subr.bf16.mxu0 0
    %1684 = vmatpush1.bf16.msra.mxu0 0
    %1685 = vmatprep.subr.bf16.mxu0 0
    %1686 = vmatpush1.bf16.msra.mxu0 0
    %1687 = vmatprep.subr.bf16.mxu0 0
    %1688 = vmatpush1.bf16.msra.mxu0 0
    %1689 = vmatprep.subr.bf16.mxu0 0
    %1690 = vmatpush1.bf16.msra.mxu0 0
    %1691 = vmatprep.subr.bf16.mxu0 0
    %1692 = vmatpush1.bf16.msra.mxu0 0
    %1693 = vmatprep.mubr.bf16.mxu0 0
    %1694 = vmatmul.mubr.bf16.gmra.mrb[0].mxu0 %v1659
    %v1695 = vpop.f32.mrb[0].mxu0
    %v1696 = vadd.f32 0.0, %v1695
    %v1697 = vpop.f32.mrb[0].mxu0
    %v1698 = vpop.f32.mrb[0].mxu0
    %v1699 = vadd.f32 0.0, %v1698
    %v1700 = vpop.f32.mrb[0].mxu0
    %1701 = vdwg.mxu0
    %v1706 = vunpack.c.l.b16 %v1634
    %v1707 = vunpack.c.l.b16 %v1635
    %v1708 = vunpack.c.l.b16 %v1636
    %v1709 = vunpack.c.l.b16 %v1637
    %v1710 = vpack.c.b16 %v1707, %v1706
    %v1711 = vpack.c.b16 %v1709, %v1708
    %v1715 = vsel %vm230, %v1633, 0
    %1717 = vmatprep.subr.bf16.mxu0 0
    %1718 = vmatpush1.bf16.msra.mxu0 %v1710
    %1719 = vmatprep.subr.bf16.mxu0 0
    %1720 = vmatpush1.bf16.msra.mxu0 %v1711
    %1721 = vmatprep.subr.bf16.mxu0 0
    %1722 = vmatpush1.bf16.msra.mxu0 0
    %1723 = vmatprep.subr.bf16.mxu0 0
    %1724 = vmatpush1.bf16.msra.mxu0 0
    %1725 = vmatprep.subr.bf16.mxu0 0
    %1726 = vmatpush1.bf16.msra.mxu0 0
    %1727 = vmatprep.subr.bf16.mxu0 0
    %1728 = vmatpush1.bf16.msra.mxu0 0
    %1729 = vmatprep.subr.bf16.mxu0 0
    %1730 = vmatpush1.bf16.msra.mxu0 0
    %1731 = vmatprep.subr.bf16.mxu0 0
    %1732 = vmatpush1.bf16.msra.mxu0 0
    %1733 = vmatprep.subr.bf16.mxu0 0
    %1734 = vmatpush1.bf16.msra.mxu0 0
    %1735 = vmatprep.subr.bf16.mxu0 0
    %1736 = vmatpush1.bf16.msra.mxu0 0
    %1737 = vmatprep.subr.bf16.mxu0 0
    %1738 = vmatpush1.bf16.msra.mxu0 0
    %1739 = vmatprep.subr.bf16.mxu0 0
    %1740 = vmatpush1.bf16.msra.mxu0 0
    %1741 = vmatprep.subr.bf16.mxu0 0
    %1742 = vmatpush1.bf16.msra.mxu0 0
    %1743 = vmatprep.subr.bf16.mxu0 0
    %1744 = vmatpush1.bf16.msra.mxu0 0
    %1745 = vmatprep.subr.bf16.mxu0 0
    %1746 = vmatpush1.bf16.msra.mxu0 0
    %1747 = vmatprep.subr.bf16.mxu0 0
    %1748 = vmatpush1.bf16.msra.mxu0 0
    %1749 = vmatprep.mubr.bf16.mxu0 0
    %1750 = vmatmul.mubr.bf16.gmra.mrb[0].mxu0 %v1715
    %v1751 = vpop.f32.mrb[0].mxu0
    %v1752 = vadd.f32 %v1696, %v1751
    %v1753 = vpop.f32.mrb[0].mxu0
    %v1754 = vpop.f32.mrb[0].mxu0
    %v1755 = vadd.f32 %v1699, %v1754
    %v1756 = vpop.f32.mrb[0].mxu0
    %1757 = vdwg.mxu0
    %v1758 = vpack.c.bf16 %v1290, %v1289
    %v1759 = vld [vmem:[#allocation18] sm:$0xf]
    %v1760 = vld [vmem:[#allocation18 + $0x4] sm:$0xf]
    %v1761 = vld [vmem:[#allocation18 + $0x8] sm:$0xf]
    %v1762 = vld [vmem:[#allocation18 + $0xc] sm:$0xf]
    %1764 = vrot.lane.b32.xlu0 %v1758, 64
    %v1765 = vpop.permute.xlu0 %1764
    %v1770 = vunpack.c.l.b16 %v1759
    %v1771 = vunpack.c.l.b16 %v1760
    %v1772 = vunpack.c.l.b16 %v1761
    %v1773 = vunpack.c.l.b16 %v1762
    %v1774 = vpack.c.b16 %v1771, %v1770
    %v1775 = vpack.c.b16 %v1773, %v1772
    %v1779 = vsel %vm230, %v1765, 0
    %1781 = vmatprep.subr.bf16.mxu0 0
    %1782 = vmatpush1.bf16.msra.mxu0 %v1774
    %1783 = vmatprep.subr.bf16.mxu0 0
    %1784 = vmatpush1.bf16.msra.mxu0 %v1775
    %1785 = vmatprep.subr.bf16.mxu0 0
    %1786 = vmatpush1.bf16.msra.mxu0 0
    %1787 = vmatprep.subr.bf16.mxu0 0
    %1788 = vmatpush1.bf16.msra.mxu0 0
    %1789 = vmatprep.subr.bf16.mxu0 0
    %1790 = vmatpush1.bf16.msra.mxu0 0
    %1791 = vmatprep.subr.bf16.mxu0 0
    %1792 = vmatpush1.bf16.msra.mxu0 0
    %1793 = vmatprep.subr.bf16.mxu0 0
    %1794 = vmatpush1.bf16.msra.mxu0 0
    %1795 = vmatprep.subr.bf16.mxu0 0
    %1796 = vmatpush1.bf16.msra.mxu0 0
    %1797 = vmatprep.subr.bf16.mxu0 0
    %1798 = vmatpush1.bf16.msra.mxu0 0
    %1799 = vmatprep.subr.bf16.mxu0 0
    %1800 = vmatpush1.bf16.msra.mxu0 0
    %1801 = vmatprep.subr.bf16.mxu0 0
    %1802 = vmatpush1.bf16.msra.mxu0 0
    %1803 = vmatprep.subr.bf16.mxu0 0
    %1804 = vmatpush1.bf16.msra.mxu0 0
    %1805 = vmatprep.subr.bf16.mxu0 0
    %1806 = vmatpush1.bf16.msra.mxu0 0
    %1807 = vmatprep.subr.bf16.mxu0 0
    %1808 = vmatpush1.bf16.msra.mxu0 0
    %1809 = vmatprep.subr.bf16.mxu0 0
    %1810 = vmatpush1.bf16.msra.mxu0 0
    %1811 = vmatprep.subr.bf16.mxu0 0
    %1812 = vmatpush1.bf16.msra.mxu0 0
    %1813 = vmatprep.mubr.bf16.mxu0 0
    %1814 = vmatmul.mubr.bf16.gmra.mrb[0].mxu0 %v1779
    %v1815 = vpop.f32.mrb[0].mxu0
    %v1816 = vadd.f32 0.0, %v1815
    %v1817 = vpop.f32.mrb[0].mxu0
    %v1818 = vpop.f32.mrb[0].mxu0
    %v1819 = vadd.f32 0.0, %v1818
    %v1820 = vpop.f32.mrb[0].mxu0
    %1821 = vdwg.mxu0
    %v1822 = vadd.f32 %v1752, %v1816
    %v1823 = vadd.f32 %v1755, %v1819
    %v1824 = vld [vmem:[%s20] sm:$0x1]
    %v1826 = vlaneseq
    %v1827 = vshrl.u32 %v1826, 7
    %v1828 = vsub.s32 0, %v1827
    %v1829 = vrot.slane %v1824, %v1828
    %v1831 = vadd.f32 %v1822, %v1829
    %v1832 = vadd.f32 %v1823, %v1829
    %v1833 = vmax.f32 %v1831, 0.0
    %v1834 = vmax.f32 %v1832, 0.0
    %v1835 = vpack.c.bf16 %v1214, %v1214
    %v1836 = vld [vmem:[%s5] sm:$0xf]
    %v1837 = vld [vmem:[%s5 + $0x4] sm:$0xf]
    %v1838 = vld [vmem:[%s5 + $0x8] sm:$0xf]
    %v1839 = vld [vmem:[%s5 + $0xc] sm:$0xf]
    %v1840 = vld [vmem:[#allocation6] sm:$0x1]
    %v1842 = vlaneseq
    %v1843 = vshrl.u32 %v1842, 7
    %v1844 = vsub.s32 0, %v1843
    %v1845 = vrot.slane %v1840, %v1844
    %v1851 = vunpack.c.l.b16 %v1836
    %v1852 = vunpack.c.l.b16 %v1837
    %v1853 = vunpack.c.l.b16 %v1838
    %v1854 = vunpack.c.l.b16 %v1839
    %v1855 = vpack.c.b16 %v1852, %v1851
    %v1856 = vpack.c.b16 %v1854, %v1853
    %v1860 = vsel %vm230, %v1835, 0
    %1862 = vmatprep.subr.bf16.mxu0 0
    %1863 = vmatpush1.bf16.msra.mxu0 %v1855
    %1864 = vmatprep.subr.bf16.mxu0 0
    %1865 = vmatpush1.bf16.msra.mxu0 %v1856
    %1866 = vmatprep.subr.bf16.mxu0 0
    %1867 = vmatpush1.bf16.msra.mxu0 0
    %1868 = vmatprep.subr.bf16.mxu0 0
    %1869 = vmatpush1.bf16.msra.mxu0 0
    %1870 = vmatprep.subr.bf16.mxu0 0
    %1871 = vmatpush1.bf16.msra.mxu0 0
    %1872 = vmatprep.subr.bf16.mxu0 0
    %1873 = vmatpush1.bf16.msra.mxu0 0
    %1874 = vmatprep.subr.bf16.mxu0 0
    %1875 = vmatpush1.bf16.msra.mxu0 0
    %1876 = vmatprep.subr.bf16.mxu0 0
    %1877 = vmatpush1.bf16.msra.mxu0 0
    %1878 = vmatprep.subr.bf16.mxu0 0
    %1879 = vmatpush1.bf16.msra.mxu0 0
    %1880 = vmatprep.subr.bf16.mxu0 0
    %1881 = vmatpush1.bf16.msra.mxu0 0
    %1882 = vmatprep.subr.bf16.mxu0 0
    %1883 = vmatpush1.bf16.msra.mxu0 0
    %1884 = vmatprep.subr.bf16.mxu0 0
    %1885 = vmatpush1.bf16.msra.mxu0 0
    %1886 = vmatprep.subr.bf16.mxu0 0
    %1887 = vmatpush1.bf16.msra.mxu0 0
    %1888 = vmatprep.subr.bf16.mxu0 0
    %1889 = vmatpush1.bf16.msra.mxu0 0
    %1890 = vmatprep.subr.bf16.mxu0 0
    %1891 = vmatpush1.bf16.msra.mxu0 0
    %1892 = vmatprep.subr.bf16.mxu0 0
    %1893 = vmatpush1.bf16.msra.mxu0 0
    %1894 = vmatprep.mubr.bf16.mxu0 0
    %1895 = vmatmul.mubr.bf16.gmra.mrb[0].mxu0 %v1860
    %v1896 = vpop.f32.mrb[0].mxu0
    %v1897 = vadd.f32 %v1845, %v1896
    %v1898 = vpop.f32.mrb[0].mxu0
    %v1899 = vpop.f32.mrb[0].mxu0
    %v1900 = vpop.f32.mrb[0].mxu0
    %1901 = vdwg.mxu0
    %v1902 = vmax.f32 %v1897, 0.0
    %v1903 = vpack.c.bf16 %v1902, %v1902
    %v1904 = vld [vmem:[%s7] sm:$0xf]
    %v1905 = vld [vmem:[%s7 + $0x4] sm:$0xf]
    %v1906 = vld [vmem:[#allocation2] sm:$0x1]
    %v1908 = vlaneseq
    %v1909 = vshrl.u32 %v1908, 7
    %v1910 = vsub.s32 0, %v1909
    %v1911 = vrot.slane %v1906, %v1910
    %v1915 = vunpack.c.l.b16 %v1904
    %v1916 = vunpack.c.l.b16 %v1905
    %v1917 = vpack.c.b16 %v1916, %v1915
    %v1920 = vsel %vm734, %v1903, 0
    %1922 = vmatprep.subr.bf16.mxu0 0
    %1923 = vmatpush1.bf16.msra.mxu0 %v1917
    %1924 = vmatprep.subr.bf16.mxu0 0
    %1925 = vmatpush1.bf16.msra.mxu0 0
    %1926 = vmatprep.subr.bf16.mxu0 0
    %1927 = vmatpush1.bf16.msra.mxu0 0
    %1928 = vmatprep.subr.bf16.mxu0 0
    %1929 = vmatpush1.bf16.msra.mxu0 0
    %1930 = vmatprep.subr.bf16.mxu0 0
    %1931 = vmatpush1.bf16.msra.mxu0 0
    %1932 = vmatprep.subr.bf16.mxu0 0
    %1933 = vmatpush1.bf16.msra.mxu0 0
    %1934 = vmatprep.subr.bf16.mxu0 0
    %1935 = vmatpush1.bf16.msra.mxu0 0
    %1936 = vmatprep.subr.bf16.mxu0 0
    %1937 = vmatpush1.bf16.msra.mxu0 0
    %1938 = vmatprep.subr.bf16.mxu0 0
    %1939 = vmatpush1.bf16.msra.mxu0 0
    %1940 = vmatprep.subr.bf16.mxu0 0
    %1941 = vmatpush1.bf16.msra.mxu0 0
    %1942 = vmatprep.subr.bf16.mxu0 0
    %1943 = vmatpush1.bf16.msra.mxu0 0
    %1944 = vmatprep.subr.bf16.mxu0 0
    %1945 = vmatpush1.bf16.msra.mxu0 0
    %1946 = vmatprep.subr.bf16.mxu0 0
    %1947 = vmatpush1.bf16.msra.mxu0 0
    %1948 = vmatprep.subr.bf16.mxu0 0
    %1949 = vmatpush1.bf16.msra.mxu0 0
    %1950 = vmatprep.subr.bf16.mxu0 0
    %1951 = vmatpush1.bf16.msra.mxu0 0
    %1952 = vmatprep.subr.bf16.mxu0 0
    %1953 = vmatpush1.bf16.msra.mxu0 0
    %1954 = vmatprep.mubr.bf16.mxu0 0
    %1955 = vmatmul.mubr.bf16.gmra.mrb[0].mxu0 %v1920
    %v1956 = vpop.f32.mrb[0].mxu0
    %v1957 = vadd.f32 %v1911, %v1956
    %v1958 = vpop.f32.mrb[0].mxu0
    %v1959 = vpop.f32.mrb[0].mxu0
    %v1960 = vpop.f32.mrb[0].mxu0
    %1961 = vdwg.mxu0
    %v1962 = vxor.u32 %v1957, 2147483648
    %v1963 = vmul.f32 %v1962, 1.442695
    %v1964 = vpow.pop %v1963
    %v1965 = vadd.f32 %v1964, 1.0
    %v1966 = vrcp.pop %v1965
    %v1967 = vmul.f32 1.0, %v1966
    %v1968 = vlaneseq
    %v1969 = vshrl.u32 %v1968, 7
    %v1970 = vsub.s32 0, %v1969
    %v1971 = vrot.slane %v1967, %v1970
    %v1972 = vlaneseq
    %v1973 = vshrl.u32 %v1972, 7
    %v1974 = vsub.s32 1, %v1973
    %v1975 = vrot.slane %v1967, %v1974
    %1977 = vset.pattern.permute.xlu0 0
    %1978 = vperm.xlu0 %1977, %v1971
    %v1979 = vpop.permute.xlu0 %1978
    %1982 = vset.pattern.permute.xlu0 0
    %1983 = vperm.xlu0 %1982, %v1975
    %v1984 = vpop.permute.xlu0 %1983
    %v1986 = vmul.f32 %v1979, %v1833
    %v1987 = vmul.f32 %v1984, %v1834
    %v1988 = vsub.f32 1.0, %v1971
    %v1989 = vsub.f32 1.0, %v1975
    %1991 = vset.pattern.permute.xlu0 0
    %1992 = vperm.xlu0 %1991, %v1988
    %v1993 = vpop.permute.xlu0 %1992
    %1996 = vset.pattern.permute.xlu0 0
    %1997 = vperm.xlu0 %1996, %v1989
    %v1998 = vpop.permute.xlu0 %1997
    %v2000 = vmul.f32 %v1993, %v737
    %v2001 = vmul.f32 %v1998, %v1204
    %v2002 = vadd.f32 %v1986, %v2000
    %v2003 = vadd.f32 %v1987, %v2001
    %v2004 = vpack.c.bf16 %v2003, %v2002
    %v2005 = vld [vmem:[%s3] sm:$0xf]
    %v2006 = vld [vmem:[%s3 + $0x4] sm:$0xf]
    %v2007 = vld [vmem:[%s3 + $0x8] sm:$0xf]
    %v2008 = vld [vmem:[%s3 + $0xc] sm:$0xf]
    %v2009 = vld [vmem:[%s4] sm:$0x1]
    %v2011 = vlaneseq
    %v2012 = vshrl.u32 %v2011, 7
    %v2013 = vsub.s32 0, %v2012
    %v2014 = vrot.slane %v2009, %v2013
    %v2020 = vunpack.c.l.b16 %v2005
    %v2021 = vunpack.c.l.b16 %v2006
    %v2022 = vunpack.c.l.b16 %v2007
    %v2023 = vunpack.c.l.b16 %v2008
    %v2024 = vpack.c.b16 %v2021, %v2020
    %v2025 = vpack.c.b16 %v2023, %v2022
    %v2029 = vsel %vm230, %v2004, 0
    %2031 = vmatprep.subr.bf16.mxu0 0
    %2032 = vmatpush1.bf16.msra.mxu0 %v2024
    %2033 = vmatprep.subr.bf16.mxu0 0
    %2034 = vmatpush1.bf16.msra.mxu0 %v2025
    %2035 = vmatprep.subr.bf16.mxu0 0
    %2036 = vmatpush1.bf16.msra.mxu0 0
    %2037 = vmatprep.subr.bf16.mxu0 0
    %2038 = vmatpush1.bf16.msra.mxu0 0
    %2039 = vmatprep.subr.bf16.mxu0 0
    %2040 = vmatpush1.bf16.msra.mxu0 0
    %2041 = vmatprep.subr.bf16.mxu0 0
    %2042 = vmatpush1.bf16.msra.mxu0 0
    %2043 = vmatprep.subr.bf16.mxu0 0
    %2044 = vmatpush1.bf16.msra.mxu0 0
    %2045 = vmatprep.subr.bf16.mxu0 0
    %2046 = vmatpush1.bf16.msra.mxu0 0
    %2047 = vmatprep.subr.bf16.mxu0 0
    %2048 = vmatpush1.bf16.msra.mxu0 0
    %2049 = vmatprep.subr.bf16.mxu0 0
    %2050 = vmatpush1.bf16.msra.mxu0 0
    %2051 = vmatprep.subr.bf16.mxu0 0
    %2052 = vmatpush1.bf16.msra.mxu0 0
    %2053 = vmatprep.subr.bf16.mxu0 0
    %2054 = vmatpush1.bf16.msra.mxu0 0
    %2055 = vmatprep.subr.bf16.mxu0 0
    %2056 = vmatpush1.bf16.msra.mxu0 0
    %2057 = vmatprep.subr.bf16.mxu0 0
    %2058 = vmatpush1.bf16.msra.mxu0 0
    %2059 = vmatprep.subr.bf16.mxu0 0
    %2060 = vmatpush1.bf16.msra.mxu0 0
    %2061 = vmatprep.subr.bf16.mxu0 0
    %2062 = vmatpush1.bf16.msra.mxu0 0
    %2063 = vmatprep.mubr.bf16.mxu0 0
    %2064 = vmatmul.mubr.bf16.gmra.mrb[0].mxu0 %v2029
    %v2065 = vpop.f32.mrb[0].mxu0
    %v2066 = vadd.f32 %v2014, %v2065
    %v2067 = vpop.f32.mrb[0].mxu0
    %v2068 = vpop.f32.mrb[0].mxu0
    %v2069 = vadd.f32 %v2014, %v2068
    %v2070 = vpop.f32.mrb[0].mxu0
    %2071 = vdwg.mxu0
    %v2072 = vadd.f32 %v204, %v2066
    %v2073 = vadd.f32 %v205, %v2069
    %v2074 = vsel %vm230, %v2072, 0.0
    %2075 = vadd.xlane.f32.xlu0 %v2074
    %v2076 = vpop.xlane.xlu0 %2075
    %v2077 = vsel %vm230, %v2073, 0.0
    %2078 = vadd.xlane.f32.xlu0 %v2077
    %v2079 = vpop.xlane.xlu0 %2078
    %v2080 = vrcp.pop 32.0
    %v2081 = vmul.f32 %v2076, %v2080
    %v2082 = vmul.f32 %v2079, %v2080
    %v2083 = vsub.f32 %v2072, %v2081
    %v2084 = vsub.f32 %v2073, %v2082
    %v2085 = vmul.f32 %v2083, %v2083
    %v2086 = vmul.f32 %v2084, %v2084
    %v2087 = vsel %vm230, %v2085, 0.0
    %2088 = vadd.xlane.f32.xlu0 %v2087
    %v2089 = vpop.xlane.xlu0 %2088
    %v2090 = vsel %vm230, %v2086, 0.0
    %2091 = vadd.xlane.f32.xlu0 %v2090
    %v2092 = vpop.xlane.xlu0 %2091
    %v2093 = vmul.f32 %v2089, %v2080
    %v2094 = vmul.f32 %v2092, %v2080
    %v2095 = vadd.f32 %v2093, 1e-05
    %v2096 = vadd.f32 %v2094, 1e-05
    %v2097 = vrsqrt.pop %v2095
    %v2098 = vrsqrt.pop %v2096
    %v2099 = vmul.f32 %v2083, %v2097
    %v2100 = vmul.f32 %v2084, %v2098
    %v2101 = vld [vmem:[%s21] sm:$0x1]
    %v2103 = vlaneseq
    %v2104 = vshrl.u32 %v2103, 7
    %v2105 = vsub.s32 0, %v2104
    %v2106 = vrot.slane %v2101, %v2105
    %v2108 = vmul.f32 %v2099, %v2106
    %v2109 = vmul.f32 %v2100, %v2106
    %v2110 = vld [vmem:[%s22] sm:$0x1]
    %v2112 = vlaneseq
    %v2113 = vshrl.u32 %v2112, 7
    %v2114 = vsub.s32 0, %v2113
    %v2115 = vrot.slane %v2110, %v2114
    %v2117 = vadd.f32 %v2108, %v2115
    %v2118 = vadd.f32 %v2109, %v2115
    %v2119 = vadd.f32 %v2117, %v204
    %v2120 = vadd.f32 %v2118, %v205
    %2121 = vst.msk [vmem:[#allocation20] sm:$0xff] %vm230, %v2119
    %2122 = vst.msk [vmem:[#allocation20 + $0x8] sm:$0xff] %vm230, %v2120
    // Predicated region
    $region134: #{tpu_custom_call.1} parent=1 // pred_check
      _
    $region135: #{tpu_custom_call.1} parent=1 // pred_check_branch
      %2124 = sbr.rel (0) target = $region137
    $region136: #{tpu_custom_call.1} parent=1 // pred_region
      %s2126 = ssub.s32 256, 256
      %2127 = vsyncadd [#allocation5], %s2126
      %s2128 = sshll.u32 [#allocation20], 4
      %s2129 = int_to_ptr.vmem [resolvable:$true] %s2128
      %2134 = dma.vmem_to_hbm [thread:$0]  %s2129, 256, %s23, [#allocation5], 128, 128, 8
    $region137: #{tpu_custom_call.1} parent=1 // pred_fallthru
      _
    // Predicated region
    $region138: #{tpu_custom_call.1} parent=1 // pred_check
      _
    $region139: #{tpu_custom_call.1} parent=1 // pred_check_branch
      %2136 = sbr.rel (0) target = $region141
    $region140: #{tpu_custom_call.1} parent=1 // pred_region
      %2137 = dma.done [#allocation5], 256
    $region141: #{tpu_custom_call.1} parent=1 // pred_fallthru
      _
    %2138 = vsyncpa [#allocation4], 1
    %2139 = vsyncpa [#allocation7], 1
    %2140 = vsyncpa [#allocation10], 1
    %2141 = vsyncpa [#allocation13], 1
    %2142 = vsyncpa [#allocation16], 1
    %2143 = vsyncpa [#allocation19], 1
    %2144 = vsyncpa [#allocation5], 1

// kernel: tpu_custom_call.1
$region0: #{tpu_custom_call.1}
  #allocation0 [shape = 'u32[]', space=smem, size = 0x4, offset = 0x4, fixed_abs, tag = 'smem constant byte address 0x4 - core index']
  #allocation1 [shape = 'u32[144,128]{1,0:T(1,128)}', space=vmem, size = 0x12000, scoped, tag = 'internal scratch']
  #allocation2 [shape = 'f32[1,1]{1,0:T(1,128)S(1)}', space=vmem, size = 0x200, scoped, tag = 'scoped memory for tpu_custom_call.1']
  %s0 = inlined_call_operand.vmem [shape: f32[16,32], index: 0, kind: input, shape index: {}]
  %s1 = inlined_call_operand.vmem [shape: bf16[32,96], index: 1, kind: input, shape index: {}]
  %s2 = inlined_call_operand.hbm [shape: f32[1,96], index: 2, kind: input, shape index: {}]
  %s3 = inlined_call_operand.vmem [shape: bf16[32,32], index: 3, kind: input, shape index: {}]
  %s4 = inlined_call_operand.vmem [shape: f32[1,32], index: 4, kind: input, shape index: {}]
  %s5 = inlined_call_operand.vmem [shape: bf16[32,16], index: 5, kind: input, shape index: {}]
  %s6 = inlined_call_operand.hbm [shape: f32[1,16], index: 6, kind: input, shape index: {}]
  %s7 = inlined_call_operand.vmem [shape: bf16[16,1], index: 7, kind: input, shape index: {}]
  %s8 = inlined_call_operand.<no memory space> [shape: f32[1,1], index: 8, kind: input, shape index: {}]
  %s9 = inlined_call_operand.vmem [shape: bf16[32,96], index: 9, kind: input, shape index: {}]
  %s10 = inlined_call_operand.hbm [shape: bf16[32,64], index: 10, kind: input, shape index: {}]
  %s11 = inlined_call_operand.hbm [shape: bf16[32,64], index: 11, kind: input, shape index: {}]
  %s12 = inlined_call_operand.hbm [shape: bf16[32,32], index: 12, kind: input, shape index: {}]
  %s13 = inlined_call_operand.vmem [shape: bf16[32,32], index: 13, kind: input, shape index: {}]
  %s14 = inlined_call_operand.hbm [shape: f32[1,32], index: 14, kind: input, shape index: {}]
  %s15 = inlined_call_operand.hbm [shape: f32[1,32], index: 15, kind: input, shape index: {}]
  %s16 = inlined_call_operand.hbm [shape: f32[1,32], index: 16, kind: input, shape index: {}]
  %s17 = inlined_call_operand.vmem [shape: bf16[32,32], index: 17, kind: input, shape index: {}]
  %s18 = inlined_call_operand.hbm [shape: bf16[32,32], index: 18, kind: input, shape index: {}]
  %s19 = inlined_call_operand.hbm [shape: bf16[32,32], index: 19, kind: input, shape index: {}]
  %s20 = inlined_call_operand.vmem [shape: f32[1,32], index: 20, kind: input, shape index: {}]
  %s21 = inlined_call_operand.vmem [shape: f32[1,32], index: 21, kind: input, shape index: {}]
  %s22 = inlined_call_operand.vmem [shape: f32[1,32], index: 22, kind: input, shape index: {}]
  %s23 = inlined_call_operand.hbm [shape: f32[16,32], index: 23, kind: output, shape index: {}]
  %s24 = sld [smem:[#allocation0]]
  $region142: #{tpu_custom_call.1} parent=0
    _
  %s26 = ssub.s32 1, %s24
  %s27 = scalar_select 0, %s26, %s24
  %v28 = vstv %s8
  %29 = vst [vmem:[#allocation2] sm:$0x1] %v28
  $region1: #{tpu_custom_call.1} parent=0
    #allocation3 [shape = 'u8[512]{0}', space=vmem, size = 0x400, scoped, tag = 'input window, operand 2, single buffered']
    #allocation4 [shape = 's32[1]{0}', space=sflag, size = 0x4, scoped, tag = 'scoped memory for tpu_custom_call.1']
    #allocation5 [shape = 's32[1]{0}', space=sflag, size = 0x4, scoped, tag = 'scoped memory for tpu_custom_call.1']
    #allocation6 [shape = 'u8[512]{0}', space=vmem, size = 0x400, scoped, tag = 'input window, operand 6, single buffered']
    #allocation7 [shape = 's32[1]{0}', space=sflag, size = 0x4, scoped, tag = 'scoped memory for tpu_custom_call.1']
    #allocation8 [shape = 'u8[8192]{0}', space=vmem, size = 0x2000, scoped, tag = 'input window, operand 10, single buffered']
    #allocation9 [shape = 'u8[8192]{0}', space=vmem, size = 0x2000, scoped, tag = 'input window, operand 11, single buffered']
    #allocation10 [shape = 's32[1]{0}', space=sflag, size = 0x4, scoped, tag = 'scoped memory for tpu_custom_call.1']
    #allocation11 [shape = 'u8[8192]{0}', space=vmem, size = 0x2000, scoped, tag = 'input window, operand 12, single buffered']
    #allocation12 [shape = 'u8[512]{0}', space=vmem, size = 0x400, scoped, tag = 'input window, operand 14, single buffered']
    #allocation13 [shape = 's32[1]{0}', space=sflag, size = 0x4, scoped, tag = 'scoped memory for tpu_custom_call.1']
    #allocation14 [shape = 'u8[512]{0}', space=vmem, size = 0x400, scoped, tag = 'input window, operand 15, single buffered']
    #allocation15 [shape = 'u8[512]{0}', space=vmem, size = 0x400, scoped, tag = 'input window, operand 16, single buffered']
    #allocation16 [shape = 's32[1]{0}', space=sflag, size = 0x4, scoped, tag = 'scoped memory for tpu_custom_call.1']
    #allocation17 [shape = 'u8[8192]{0}', space=vmem, size = 0x2000, scoped, tag = 'input window, operand 18, single buffered']
    #allocation18 [shape = 'u8[8192]{0}', space=vmem, size = 0x2000, scoped, tag = 'input window, operand 19, single buffered']
    #allocation19 [shape = 's32[1]{0}', space=sflag, size = 0x4, scoped, tag = 'scoped memory for tpu_custom_call.1']
    #allocation20 [shape = 'u8[8192]{0}', space=vmem, size = 0x2000, scoped, tag = 'output window, operand 0, single buffered']
    %30 = vsyncpa [#allocation4], 0
    %31 = vsyncpa [#allocation7], 0
    %32 = vsyncpa [#allocation10], 0
    %33 = vsyncpa [#allocation13], 0
    %34 = vsyncpa [#allocation16], 0
    %35 = vsyncpa [#allocation19], 0
    %36 = vsyncpa [#allocation5], 0
    // Predicated region
    $region2: #{tpu_custom_call.1} parent=1 // pred_check
      _
    $region3: #{tpu_custom_call.1} parent=1 // pred_check_branch
      %38 = sbr.rel (0) target = $region5
    $region4: #{tpu_custom_call.1} parent=1 // pred_region
      _
    $region5: #{tpu_custom_call.1} parent=1 // pred_fallthru
      _
    // Predicated region
    $region6: #{tpu_custom_call.1} parent=1 // pred_check
      _
    $region7: #{tpu_custom_call.1} parent=1 // pred_check_branch
      %40 = sbr.rel (0) target = $region9
    $region8: #{tpu_custom_call.1} parent=1 // pred_region
      _
    $region9: #{tpu_custom_call.1} parent=1 // pred_fallthru
      _
    // Predicated region
    $region10: #{tpu_custom_call.1} parent=1 // pred_check
      _
    $region11: #{tpu_custom_call.1} parent=1 // pred_check_branch
      %42 = sbr.rel (0) target = $region13
    $region12: #{tpu_custom_call.1} parent=1 // pred_region
      %s44 = ssub.s32 16, 16
      %45 = vsyncadd [#allocation4], %s44
      %s47 = sshll.u32 [#allocation3], 4
      %s48 = int_to_ptr.vmem [resolvable:$true] %s47
      %50 = dma.hbm_to_vmem [thread:$0]  %s2, 16, %s48, [#allocation4]
    $region13: #{tpu_custom_call.1} parent=1 // pred_fallthru
      _
    // Predicated region
    $region14: #{tpu_custom_call.1} parent=1 // pred_check
      _
    $region15: #{tpu_custom_call.1} parent=1 // pred_check_branch
      %52 = sbr.rel (0) target = $region17
    $region16: #{tpu_custom_call.1} parent=1 // pred_region
      _
    $region17: #{tpu_custom_call.1} parent=1 // pred_fallthru
      _
    // Predicated region
    $region18: #{tpu_custom_call.1} parent=1 // pred_check
      _
    $region19: #{tpu_custom_call.1} parent=1 // pred_check_branch
      %54 = sbr.rel (0) target = $region21
    $region20: #{tpu_custom_call.1} parent=1 // pred_region
      _
    $region21: #{tpu_custom_call.1} parent=1 // pred_fallthru
      _
    // Predicated region
    $region22: #{tpu_custom_call.1} parent=1 // pred_check
      _
    $region23: #{tpu_custom_call.1} parent=1 // pred_check_branch
      %56 = sbr.rel (0) target = $region25
    $region24: #{tpu_custom_call.1} parent=1 // pred_region
      _
    $region25: #{tpu_custom_call.1} parent=1 // pred_fallthru
      _
    // Predicated region
    $region26: #{tpu_custom_call.1} parent=1 // pred_check
      _
    $region27: #{tpu_custom_call.1} parent=1 // pred_check_branch
      %58 = sbr.rel (0) target = $region29
    $region28: #{tpu_custom_call.1} parent=1 // pred_region
      %s60 = ssub.s32 16, 16
      %61 = vsyncadd [#allocation7], %s60
      %s63 = sshll.u32 [#allocation6], 4
      %s64 = int_to_ptr.vmem [resolvable:$true] %s63
      %66 = dma.hbm_to_vmem [thread:$0]  %s6, 16, %s64, [#allocation7]
    $region29: #{tpu_custom_call.1} parent=1 // pred_fallthru
      _
    // Predicated region
    $region30: #{tpu_custom_call.1} parent=1 // pred_check
      _
    $region31: #{tpu_custom_call.1} parent=1 // pred_check_branch
      %68 = sbr.rel (0) target = $region33
    $region32: #{tpu_custom_call.1} parent=1 // pred_region
      _
    $region33: #{tpu_custom_call.1} parent=1 // pred_fallthru
      _
    // Predicated region
    $region34: #{tpu_custom_call.1} parent=1 // pred_check
      _
    $region35: #{tpu_custom_call.1} parent=1 // pred_check_branch
      %70 = sbr.rel (0) target = $region37
    $region36: #{tpu_custom_call.1} parent=1 // pred_region
      _
    $region37: #{tpu_custom_call.1} parent=1 // pred_fallthru
      _
    // Predicated region
    $region38: #{tpu_custom_call.1} parent=1 // pred_check
      _
    $region39: #{tpu_custom_call.1} parent=1 // pred_check_branch
      %72 = sbr.rel (0) target = $region41
    $region40: #{tpu_custom_call.1} parent=1 // pred_region
      _
    $region41: #{tpu_custom_call.1} parent=1 // pred_fallthru
      _
    // Predicated region
    $region42: #{tpu_custom_call.1} parent=1 // pred_check
      _
    $region43: #{tpu_custom_call.1} parent=1 // pred_check_branch
      %74 = sbr.rel (0) target = $region45
    $region44: #{tpu_custom_call.1} parent=1 // pred_region
      %s76 = ssub.s32 256, 256
      %77 = vsyncadd [#allocation7], %s76
      %s78 = sshll.u32 [#allocation8], 4
      %s79 = int_to_ptr.vmem [resolvable:$true] %s78
      %84 = dma.hbm_to_vmem [thread:$0]  %s10, 256, %s79, [#allocation7], 64, 64, 4
    $region45: #{tpu_custom_call.1} parent=1 // pred_fallthru
      _
    // Predicated region
    $region46: #{tpu_custom_call.1} parent=1 // pred_check
      _
    $region47: #{tpu_custom_call.1} parent=1 // pred_check_branch
      %86 = sbr.rel (0) target = $region49
    $region48: #{tpu_custom_call.1} parent=1 // pred_region
      %s88 = ssub.s32 256, 256
      %89 = vsyncadd [#allocation10], %s88
      %s90 = sshll.u32 [#allocation9], 4
      %s91 = int_to_ptr.vmem [resolvable:$true] %s90
      %96 = dma.hbm_to_vmem [thread:$0]  %s11, 256, %s91, [#allocation10], 64, 64, 4
    $region49: #{tpu_custom_call.1} parent=1 // pred_fallthru
      _
    // Predicated region
    $region50: #{tpu_custom_call.1} parent=1 // pred_check
      _
    $region51: #{tpu_custom_call.1} parent=1 // pred_check_branch
      %98 = sbr.rel (0) target = $region53
    $region52: #{tpu_custom_call.1} parent=1 // pred_region
      %s100 = ssub.s32 256, 256
      %101 = vsyncadd [#allocation10], %s100
      %s102 = sshll.u32 [#allocation11], 4
      %s103 = int_to_ptr.vmem [resolvable:$true] %s102
      %108 = dma.hbm_to_vmem [thread:$0]  %s12, 256, %s103, [#allocation10], 64, 64, 4
    $region53: #{tpu_custom_call.1} parent=1 // pred_fallthru
      _
    // Predicated region
    $region54: #{tpu_custom_call.1} parent=1 // pred_check
      _
    $region55: #{tpu_custom_call.1} parent=1 // pred_check_branch
      %110 = sbr.rel (0) target = $region57
    $region56: #{tpu_custom_call.1} parent=1 // pred_region
      _
    $region57: #{tpu_custom_call.1} parent=1 // pred_fallthru
      _
    // Predicated region
    $region58: #{tpu_custom_call.1} parent=1 // pred_check
      _
    $region59: #{tpu_custom_call.1} parent=1 // pred_check_branch
      %112 = sbr.rel (0) target = $region61
    $region60: #{tpu_custom_call.1} parent=1 // pred_region
      %s114 = ssub.s32 16, 16
      %115 = vsyncadd [#allocation13], %s114
      %s117 = sshll.u32 [#allocation12], 4
      %s118 = int_to_ptr.vmem [resolvable:$true] %s117
      %120 = dma.hbm_to_vmem [thread:$0]  %s14, 16, %s118, [#allocation13]
    $region61: #{tpu_custom_call.1} parent=1 // pred_fallthru
      _
    // Predicated region
    $region62: #{tpu_custom_call.1} parent=1 // pred_check
      _
    $region63: #{tpu_custom_call.1} parent=1 // pred_check_branch
      %122 = sbr.rel (0) target = $region65
    $region64: #{tpu_custom_call.1} parent=1 // pred_region
      %s124 = ssub.s32 16, 16
      %125 = vsyncadd [#allocation13], %s124
      %s127 = sshll.u32 [#allocation14], 4
      %s128 = int_to_ptr.vmem [resolvable:$true] %s127
      %130 = dma.hbm_to_vmem [thread:$0]  %s15, 16, %s128, [#allocation13]
    $region65: #{tpu_custom_call.1} parent=1 // pred_fallthru
      _
    // Predicated region
    $region66: #{tpu_custom_call.1} parent=1 // pred_check
      _
    $region67: #{tpu_custom_call.1} parent=1 // pred_check_branch
      %132 = sbr.rel (0) target = $region69
    $region68: #{tpu_custom_call.1} parent=1 // pred_region
      %s134 = ssub.s32 16, 16
      %135 = vsyncadd [#allocation16], %s134
      %s137 = sshll.u32 [#allocation15], 4
      %s138 = int_to_ptr.vmem [resolvable:$true] %s137
      %140 = dma.hbm_to_vmem [thread:$0]  %s16, 16, %s138, [#allocation16]
    $region69: #{tpu_custom_call.1} parent=1 // pred_fallthru
      _
    // Predicated region
    $region70: #{tpu_custom_call.1} parent=1 // pred_check
      _
    $region71: #{tpu_custom_call.1} parent=1 // pred_check_branch
      %142 = sbr.rel (0) target = $region73
    $region72: #{tpu_custom_call.1} parent=1 // pred_region
      _
    $region73: #{tpu_custom_call.1} parent=1 // pred_fallthru
      _
    // Predicated region
    $region74: #{tpu_custom_call.1} parent=1 // pred_check
      _
    $region75: #{tpu_custom_call.1} parent=1 // pred_check_branch
      %144 = sbr.rel (0) target = $region77
    $region76: #{tpu_custom_call.1} parent=1 // pred_region
      %s146 = ssub.s32 256, 256
      %147 = vsyncadd [#allocation16], %s146
      %s148 = sshll.u32 [#allocation17], 4
      %s149 = int_to_ptr.vmem [resolvable:$true] %s148
      %154 = dma.hbm_to_vmem [thread:$0]  %s18, 256, %s149, [#allocation16], 64, 64, 4
    $region77: #{tpu_custom_call.1} parent=1 // pred_fallthru
      _
    // Predicated region
    $region78: #{tpu_custom_call.1} parent=1 // pred_check
      _
    $region79: #{tpu_custom_call.1} parent=1 // pred_check_branch
      %156 = sbr.rel (0) target = $region81
    $region80: #{tpu_custom_call.1} parent=1 // pred_region
      %s158 = ssub.s32 256, 256
      %159 = vsyncadd [#allocation19], %s158
      %s160 = sshll.u32 [#allocation18], 4
      %s161 = int_to_ptr.vmem [resolvable:$true] %s160
      %166 = dma.hbm_to_vmem [thread:$0]  %s19, 256, %s161, [#allocation19], 64, 64, 4
    $region81: #{tpu_custom_call.1} parent=1 // pred_fallthru
      _
    // Predicated region
    $region82: #{tpu_custom_call.1} parent=1 // pred_check
      _
    $region83: #{tpu_custom_call.1} parent=1 // pred_check_branch
      %168 = sbr.rel (0) target = $region85
    $region84: #{tpu_custom_call.1} parent=1 // pred_region
      _
    $region85: #{tpu_custom_call.1} parent=1 // pred_fallthru
      _
    // Predicated region
    $region86: #{tpu_custom_call.1} parent=1 // pred_check
      _
    $region87: #{tpu_custom_call.1} parent=1 // pred_check_branch
      %170 = sbr.rel (0) target = $region89
    $region88: #{tpu_custom_call.1} parent=1 // pred_region
      _
    $region89: #{tpu_custom_call.1} parent=1 // pred_fallthru
      _
    // Predicated region
    $region90: #{tpu_custom_call.1} parent=1 // pred_check
      _
    $region91: #{tpu_custom_call.1} parent=1 // pred_check_branch
      %172 = sbr.rel (0) target = $region93
    $region92: #{tpu_custom_call.1} parent=1 // pred_region
      _
    $region93: #{tpu_custom_call.1} parent=1 // pred_fallthru
      _
    // Predicated region
    $region94: #{tpu_custom_call.1} parent=1 // pred_check
      _
    $region95: #{tpu_custom_call.1} parent=1 // pred_check_branch
      %174 = sbr.rel (0) target = $region97
    $region96: #{tpu_custom_call.1} parent=1 // pred_region
      %175 = dma.done [#allocation4], 16
    $region97: #{tpu_custom_call.1} parent=1 // pred_fallthru
      _
    // Predicated region
    $region98: #{tpu_custom_call.1} parent=1 // pred_check
      _
    $region99: #{tpu_custom_call.1} parent=1 // pred_check_branch
      %177 = sbr.rel (0) target = $region101
    $region100: #{tpu_custom_call.1} parent=1 // pred_region
      %178 = dma.done [#allocation7], 16
    $region101: #{tpu_custom_call.1} parent=1 // pred_fallthru
      _
    // Predicated region
    $region102: #{tpu_custom_call.1} parent=1 // pred_check
      _
    $region103: #{tpu_custom_call.1} parent=1 // pred_check_branch
      %180 = sbr.rel (0) target = $region105
    $region104: #{tpu_custom_call.1} parent=1 // pred_region
      %181 = dma.done [#allocation7], 256
    $region105: #{tpu_custom_call.1} parent=1 // pred_fallthru
      _
    // Predicated region
    $region106: #{tpu_custom_call.1} parent=1 // pred_check
      _
    $region107: #{tpu_custom_call.1} parent=1 // pred_check_branch
      %183 = sbr.rel (0) target = $region109
    $region108: #{tpu_custom_call.1} parent=1 // pred_region
      %184 = dma.done [#allocation10], 256
    $region109: #{tpu_custom_call.1} parent=1 // pred_fallthru
      _
    // Predicated region
    $region110: #{tpu_custom_call.1} parent=1 // pred_check
      _
    $region111: #{tpu_custom_call.1} parent=1 // pred_check_branch
      %186 = sbr.rel (0) target = $region113
    $region112: #{tpu_custom_call.1} parent=1 // pred_region
      %187 = dma.done [#allocation10], 256
    $region113: #{tpu_custom_call.1} parent=1 // pred_fallthru
      _
    // Predicated region
    $region114: #{tpu_custom_call.1} parent=1 // pred_check
      _
    $region115: #{tpu_custom_call.1} parent=1 // pred_check_branch
      %189 = sbr.rel (0) target = $region117
    $region116: #{tpu_custom_call.1} parent=1 // pred_region
      %190 = dma.done [#allocation13], 16
    $region117: #{tpu_custom_call.1} parent=1 // pred_fallthru
      _
    // Predicated region
    $region118: #{tpu_custom_call.1} parent=1 // pred_check
      _
    $region119: #{tpu_custom_call.1} parent=1 // pred_check_branch
      %192 = sbr.rel (0) target = $region121
    $region120: #{tpu_custom_call.1} parent=1 // pred_region
      %193 = dma.done [#allocation13], 16
    $region121: #{tpu_custom_call.1} parent=1 // pred_fallthru
      _
    // Predicated region
    $region122: #{tpu_custom_call.1} parent=1 // pred_check
      _
    $region123: #{tpu_custom_call.1} parent=1 // pred_check_branch
      %195 = sbr.rel (0) target = $region125
    $region124: #{tpu_custom_call.1} parent=1 // pred_region
      %196 = dma.done [#allocation16], 16
    $region125: #{tpu_custom_call.1} parent=1 // pred_fallthru
      _
    // Predicated region
    $region126: #{tpu_custom_call.1} parent=1 // pred_check
      _
    $region127: #{tpu_custom_call.1} parent=1 // pred_check_branch
      %198 = sbr.rel (0) target = $region129
    $region128: #{tpu_custom_call.1} parent=1 // pred_region
      %199 = dma.done [#allocation16], 256
    $region129: #{tpu_custom_call.1} parent=1 // pred_fallthru
      _
    // Predicated region
    $region130: #{tpu_custom_call.1} parent=1 // pred_check
      _
    $region131: #{tpu_custom_call.1} parent=1 // pred_check_branch
      %201 = sbr.rel (0) target = $region133
    $region132: #{tpu_custom_call.1} parent=1 // pred_region
      %202 = dma.done [#allocation19], 256
    $region133: #{tpu_custom_call.1} parent=1 // pred_fallthru
      _
    %v204 = vld [vmem:[%s0] sm:$0xff]
    %v205 = vld [vmem:[%s0 + $0x8] sm:$0xff]
    %v206 = vpack.c.bf16 %v205, %v204
    %v207 = vld [vmem:[%s1] sm:$0xf]
    %v208 = vld [vmem:[%s1 + $0x4] sm:$0xf]
    %v209 = vld [vmem:[%s1 + $0x8] sm:$0xf]
    %v210 = vld [vmem:[%s1 + $0xc] sm:$0xf]
    %v211 = vld [vmem:[#allocation3] sm:$0x1]
    %v213 = vlaneseq
    %v214 = vshrl.u32 %v213, 7
    %v215 = vsub.s32 0, %v214
    %v216 = vrot.slane %v211, %v215
    %v222 = vunpack.c.l.b16 %v207
    %v223 = vunpack.c.l.b16 %v208
    %v224 = vunpack.c.l.b16 %v209
    %v225 = vunpack.c.l.b16 %v210
    %v226 = vpack.c.b16 %v223, %v222
    %v227 = vpack.c.b16 %v225, %v224
    %vm230 = vcmask 261120
    %v232 = vsel %vm230, %v206, 0
    %234 = vmatprep.subr.bf16.mxu0 0
    %235 = vmatpush1.bf16.msra.mxu0 %v226
    %236 = vmatprep.subr.bf16.mxu0 0
    %237 = vmatpush1.bf16.msra.mxu0 %v227
    %238 = vmatprep.subr.bf16.mxu0 0
    %239 = vmatpush1.bf16.msra.mxu0 0
    %240 = vmatprep.subr.bf16.mxu0 0
    %241 = vmatpush1.bf16.msra.mxu0 0
    %242 = vmatprep.subr.bf16.mxu0 0
    %243 = vmatpush1.bf16.msra.mxu0 0
    %244 = vmatprep.subr.bf16.mxu0 0
    %245 = vmatpush1.bf16.msra.mxu0 0
    %246 = vmatprep.subr.bf16.mxu0 0
    %247 = vmatpush1.bf16.msra.mxu0 0
    %248 = vmatprep.subr.bf16.mxu0 0
    %249 = vmatpush1.bf16.msra.mxu0 0
    %250 = vmatprep.subr.bf16.mxu0 0
    %251 = vmatpush1.bf16.msra.mxu0 0
    %252 = vmatprep.subr.bf16.mxu0 0
    %253 = vmatpush1.bf16.msra.mxu0 0
    %254 = vmatprep.subr.bf16.mxu0 0
    %255 = vmatpush1.bf16.msra.mxu0 0
    %256 = vmatprep.subr.bf16.mxu0 0
    %257 = vmatpush1.bf16.msra.mxu0 0
    %258 = vmatprep.subr.bf16.mxu0 0
    %259 = vmatpush1.bf16.msra.mxu0 0
    %260 = vmatprep.subr.bf16.mxu0 0
    %261 = vmatpush1.bf16.msra.mxu0 0
    %262 = vmatprep.subr.bf16.mxu0 0
    %263 = vmatpush1.bf16.msra.mxu0 0
    %264 = vmatprep.subr.bf16.mxu0 0
    %265 = vmatpush1.bf16.msra.mxu0 0
    %266 = vmatprep.mubr.bf16.mxu0 0
    %267 = vmatmul.mubr.bf16.gmra.mrb[0].mxu0 %v232
    %v268 = vpop.f32.mrb[0].mxu0
    %v269 = vadd.f32 %v216, %v268
    %v270 = vpop.f32.mrb[0].mxu0
    %v271 = vpop.f32.mrb[0].mxu0
    %v272 = vadd.f32 %v216, %v271
    %v273 = vpop.f32.mrb[0].mxu0
    %274 = vdwg.mxu0
    %v275 = vpack.c.bf16 %v272, %v269
    %277 = vrot.lane.b32.xlu0 %v275, 96
    %v278 = vpop.permute.xlu0 %277
    %vm279 = vcmask 64512
    %v281 = vsel %vm279, %v275, 0
    %v284 = vsel %vm279, %v278, 0
    %286 = vmatprep.subr.bf16.mxu0 0
    %287 = vmatpush1.bf16.xpose.msra.mxu0 %v284
    %288 = vmatprep.subr.bf16.mxu0 0
    %289 = vmatpush1.bf16.xpose.msra.mxu0 0
    %290 = vmatprep.subr.bf16.mxu0 0
    %291 = vmatpush1.bf16.xpose.msra.mxu0 0
    %292 = vmatprep.subr.bf16.mxu0 0
    %293 = vmatpush1.bf16.xpose.msra.mxu0 0
    %294 = vmatprep.subr.bf16.mxu0 0
    %295 = vmatpush1.bf16.xpose.msra.mxu0 0
    %296 = vmatprep.subr.bf16.mxu0 0
    %297 = vmatpush1.bf16.xpose.msra.mxu0 0
    %298 = vmatprep.subr.bf16.mxu0 0
    %299 = vmatpush1.bf16.xpose.msra.mxu0 0
    %300 = vmatprep.subr.bf16.mxu0 0
    %301 = vmatpush1.bf16.xpose.msra.mxu0 0
    %302 = vmatprep.subr.bf16.mxu0 0
    %303 = vmatpush1.bf16.xpose.msra.mxu0 0
    %304 = vmatprep.subr.bf16.mxu0 0
    %305 = vmatpush1.bf16.xpose.msra.mxu0 0
    %306 = vmatprep.subr.bf16.mxu0 0
    %307 = vmatpush1.bf16.xpose.msra.mxu0 0
    %308 = vmatprep.subr.bf16.mxu0 0
    %309 = vmatpush1.bf16.xpose.msra.mxu0 0
    %310 = vmatprep.subr.bf16.mxu0 0
    %311 = vmatpush1.bf16.xpose.msra.mxu0 0
    %312 = vmatprep.subr.bf16.mxu0 0
    %313 = vmatpush1.bf16.xpose.msra.mxu0 0
    %314 = vmatprep.subr.bf16.mxu0 0
    %315 = vmatpush1.bf16.xpose.msra.mxu0 0
    %316 = vmatprep.subr.bf16.mxu0 0
    %317 = vmatpush1.bf16.xpose.msra.mxu0 0
    %318 = vmatprep.mubr.bf16.mxu0 0
    %319 = vmatmul.mubr.bf16.gmra.mrb[0].mxu0 %v281
    %v320 = vpop.f32.mrb[0].mxu0
    %v321 = vadd.f32 0.0, %v320
    %v322 = vpop.f32.mrb[0].mxu0
    %v323 = vpop.f32.mrb[0].mxu0
    %v324 = vpop.f32.mrb[0].mxu0
    %325 = vdwg.mxu0
    %v326 = vmul.f32 %v321, 0.35355338
    %v327 = vsel %vm279, %v326, -inf
    %328 = vmax.xlane.f32.xlu0 %v327
    %v329 = vpop.xlane.xlu0 %328
    %v330 = vsub.f32 %v326, %v329
    %v331 = vmul.f32 %v330, 1.442695
    %v332 = vpow.pop %v331
    %v333 = vsel %vm279, %v332, 0.0
    %334 = vadd.xlane.f32.xlu0 %v333
    %v335 = vpop.xlane.xlu0 %334
    %v336 = vrcp.pop %v335
    %v337 = vmul.f32 %v332, %v336
    %v338 = vpack.c.bf16 %v337, %v337
    %339 = vrot.lane.b32.xlu0 %v275, 64
    %v340 = vpop.permute.xlu0 %339
    %v342 = vsel %vm279, %v338, 0
    %vm344 = vcmask 1043456
    %v346 = vsel %vm344, %v340, 0
    %348 = vmatprep.subr.bf16.mxu0 0
    %349 = vmatpush1.bf16.msra.mxu0 %v346
    %350 = vmatprep.subr.bf16.mxu0 0
    %351 = vmatpush1.bf16.msra.mxu0 0
    %352 = vmatprep.subr.bf16.mxu0 0
    %353 = vmatpush1.bf16.msra.mxu0 0
    %354 = vmatprep.subr.bf16.mxu0 0
    %355 = vmatpush1.bf16.msra.mxu0 0
    %356 = vmatprep.subr.bf16.mxu0 0
    %357 = vmatpush1.bf16.msra.mxu0 0
    %358 = vmatprep.subr.bf16.mxu0 0
    %359 = vmatpush1.bf16.msra.mxu0 0
    %360 = vmatprep.subr.bf16.mxu0 0
    %361 = vmatpush1.bf16.msra.mxu0 0
    %362 = vmatprep.subr.bf16.mxu0 0
    %363 = vmatpush1.bf16.msra.mxu0 0
    %364 = vmatprep.subr.bf16.mxu0 0
    %365 = vmatpush1.bf16.msra.mxu0 0
    %366 = vmatprep.subr.bf16.mxu0 0
    %367 = vmatpush1.bf16.msra.mxu0 0
    %368 = vmatprep.subr.bf16.mxu0 0
    %369 = vmatpush1.bf16.msra.mxu0 0
    %370 = vmatprep.subr.bf16.mxu0 0
    %371 = vmatpush1.bf16.msra.mxu0 0
    %372 = vmatprep.subr.bf16.mxu0 0
    %373 = vmatpush1.bf16.msra.mxu0 0
    %374 = vmatprep.subr.bf16.mxu0 0
    %375 = vmatpush1.bf16.msra.mxu0 0
    %376 = vmatprep.subr.bf16.mxu0 0
    %377 = vmatpush1.bf16.msra.mxu0 0
    %378 = vmatprep.subr.bf16.mxu0 0
    %379 = vmatpush1.bf16.msra.mxu0 0
    %380 = vmatprep.mubr.bf16.mxu0 0
    %381 = vmatmul.mubr.bf16.gmra.mrb[0].mxu0 %v342
    %v382 = vpop.f32.mrb[0].mxu0
    %v383 = vadd.f32 0.0, %v382
    %v384 = vpop.f32.mrb[0].mxu0
    %v385 = vpop.f32.mrb[0].mxu0
    %v386 = vpop.f32.mrb[0].mxu0
    %387 = vdwg.mxu0
    %388 = vrot.lane.b32.xlu0 %v275, 120
    %v389 = vpop.permute.xlu0 %388
    %390 = vrot.lane.b32.xlu0 %v275, 88
    %v391 = vpop.permute.xlu0 %390
    %v393 = vsel %vm279, %v389, 0
    %v396 = vsel %vm279, %v391, 0
    %398 = vmatprep.subr.bf16.mxu0 0
    %399 = vmatpush1.bf16.xpose.msra.mxu0 %v396
    %400 = vmatprep.subr.bf16.mxu0 0
    %401 = vmatpush1.bf16.xpose.msra.mxu0 0
    %402 = vmatprep.subr.bf16.mxu0 0
    %403 = vmatpush1.bf16.xpose.msra.mxu0 0
    %404 = vmatprep.subr.bf16.mxu0 0
    %405 = vmatpush1.bf16.xpose.msra.mxu0 0
    %406 = vmatprep.subr.bf16.mxu0 0
    %407 = vmatpush1.bf16.xpose.msra.mxu0 0
    %408 = vmatprep.subr.bf16.mxu0 0
    %409 = vmatpush1.bf16.xpose.msra.mxu0 0
    %410 = vmatprep.subr.bf16.mxu0 0
    %411 = vmatpush1.bf16.xpose.msra.mxu0 0
    %412 = vmatprep.subr.bf16.mxu0 0
    %413 = vmatpush1.bf16.xpose.msra.mxu0 0
    %414 = vmatprep.subr.bf16.mxu0 0
    %415 = vmatpush1.bf16.xpose.msra.mxu0 0
    %416 = vmatprep.subr.bf16.mxu0 0
    %417 = vmatpush1.bf16.xpose.msra.mxu0 0
    %418 = vmatprep.subr.bf16.mxu0 0
    %419 = vmatpush1.bf16.xpose.msra.mxu0 0
    %420 = vmatprep.subr.bf16.mxu0 0
    %421 = vmatpush1.bf16.xpose.msra.mxu0 0
    %422 = vmatprep.subr.bf16.mxu0 0
    %423 = vmatpush1.bf16.xpose.msra.mxu0 0
    %424 = vmatprep.subr.bf16.mxu0 0
    %425 = vmatpush1.bf16.xpose.msra.mxu0 0
    %426 = vmatprep.subr.bf16.mxu0 0
    %427 = vmatpush1.bf16.xpose.msra.mxu0 0
    %428 = vmatprep.subr.bf16.mxu0 0
    %429 = vmatpush1.bf16.xpose.msra.mxu0 0
    %430 = vmatprep.mubr.bf16.mxu0 0
    %431 = vmatmul.mubr.bf16.gmra.mrb[0].mxu0 %v393
    %v432 = vpop.f32.mrb[0].mxu0
    %v433 = vadd.f32 0.0, %v432
    %v434 = vpop.f32.mrb[0].mxu0
    %v435 = vpop.f32.mrb[0].mxu0
    %v436 = vpop.f32.mrb[0].mxu0
    %437 = vdwg.mxu0
    %v438 = vmul.f32 %v433, 0.35355338
    %v439 = vsel %vm279, %v438, -inf
    %440 = vmax.xlane.f32.xlu0 %v439
    %v441 = vpop.xlane.xlu0 %440
    %v442 = vsub.f32 %v438, %v441
    %v443 = vmul.f32 %v442, 1.442695
    %v444 = vpow.pop %v443
    %v445 = vsel %vm279, %v444, 0.0
    %446 = vadd.xlane.f32.xlu0 %v445
    %v447 = vpop.xlane.xlu0 %446
    %v448 = vrcp.pop %v447
    %v449 = vmul.f32 %v444, %v448
    %v450 = vpack.c.bf16 %v449, %v449
    %451 = vrot.lane.b32.xlu0 %v275, 56
    %v452 = vpop.permute.xlu0 %451
    %v454 = vsel %vm279, %v450, 0
    %v457 = vsel %vm344, %v452, 0
    %459 = vmatprep.subr.bf16.mxu0 0
    %460 = vmatpush1.bf16.msra.mxu0 %v457
    %461 = vmatprep.subr.bf16.mxu0 0
    %462 = vmatpush1.bf16.msra.mxu0 0
    %463 = vmatprep.subr.bf16.mxu0 0
    %464 = vmatpush1.bf16.msra.mxu0 0
    %465 = vmatprep.subr.bf16.mxu0 0
    %466 = vmatpush1.bf16.msra.mxu0 0
    %467 = vmatprep.subr.bf16.mxu0 0
    %468 = vmatpush1.bf16.msra.mxu0 0
    %469 = vmatprep.subr.bf16.mxu0 0
    %470 = vmatpush1.bf16.msra.mxu0 0
    %471 = vmatprep.subr.bf16.mxu0 0
    %472 = vmatpush1.bf16.msra.mxu0 0
    %473 = vmatprep.subr.bf16.mxu0 0
    %474 = vmatpush1.bf16.msra.mxu0 0
    %475 = vmatprep.subr.bf16.mxu0 0
    %476 = vmatpush1.bf16.msra.mxu0 0
    %477 = vmatprep.subr.bf16.mxu0 0
    %478 = vmatpush1.bf16.msra.mxu0 0
    %479 = vmatprep.subr.bf16.mxu0 0
    %480 = vmatpush1.bf16.msra.mxu0 0
    %481 = vmatprep.subr.bf16.mxu0 0
    %482 = vmatpush1.bf16.msra.mxu0 0
    %483 = vmatprep.subr.bf16.mxu0 0
    %484 = vmatpush1.bf16.msra.mxu0 0
    %485 = vmatprep.subr.bf16.mxu0 0
    %486 = vmatpush1.bf16.msra.mxu0 0
    %487 = vmatprep.subr.bf16.mxu0 0
    %488 = vmatpush1.bf16.msra.mxu0 0
    %489 = vmatprep.subr.bf16.mxu0 0
    %490 = vmatpush1.bf16.msra.mxu0 0
    %491 = vmatprep.mubr.bf16.mxu0 0
    %492 = vmatmul.mubr.bf16.gmra.mrb[0].mxu0 %v454
    %v493 = vpop.f32.mrb[0].mxu0
    %v494 = vadd.f32 0.0, %v493
    %v495 = vpop.f32.mrb[0].mxu0
    %v496 = vpop.f32.mrb[0].mxu0
    %v497 = vpop.f32.mrb[0].mxu0
    %498 = vdwg.mxu0
    %499 = vrot.lane.b32.xlu0 %v275, 112
    %v500 = vpop.permute.xlu0 %499
    %501 = vrot.lane.b32.xlu0 %v275, 80
    %v502 = vpop.permute.xlu0 %501
    %v504 = vsel %vm279, %v500, 0
    %v507 = vsel %vm279, %v502, 0
    %509 = vmatprep.subr.bf16.mxu0 0
    %510 = vmatpush1.bf16.xpose.msra.mxu0 %v507
    %511 = vmatprep.subr.bf16.mxu0 0
    %512 = vmatpush1.bf16.xpose.msra.mxu0 0
    %513 = vmatprep.subr.bf16.mxu0 0
    %514 = vmatpush1.bf16.xpose.msra.mxu0 0
    %515 = vmatprep.subr.bf16.mxu0 0
    %516 = vmatpush1.bf16.xpose.msra.mxu0 0
    %517 = vmatprep.subr.bf16.mxu0 0
    %518 = vmatpush1.bf16.xpose.msra.mxu0 0
    %519 = vmatprep.subr.bf16.mxu0 0
    %520 = vmatpush1.bf16.xpose.msra.mxu0 0
    %521 = vmatprep.subr.bf16.mxu0 0
    %522 = vmatpush1.bf16.xpose.msra.mxu0 0
    %523 = vmatprep.subr.bf16.mxu0 0
    %524 = vmatpush1.bf16.xpose.msra.mxu0 0
    %525 = vmatprep.subr.bf16.mxu0 0
    %526 = vmatpush1.bf16.xpose.msra.mxu0 0
    %527 = vmatprep.subr.bf16.mxu0 0
    %528 = vmatpush1.bf16.xpose.msra.mxu0 0
    %529 = vmatprep.subr.bf16.mxu0 0
    %530 = vmatpush1.bf16.xpose.msra.mxu0 0
    %531 = vmatprep.subr.bf16.mxu0 0
    %532 = vmatpush1.bf16.xpose.msra.mxu0 0
    %533 = vmatprep.subr.bf16.mxu0 0
    %534 = vmatpush1.bf16.xpose.msra.mxu0 0
    %535 = vmatprep.subr.bf16.mxu0 0
    %536 = vmatpush1.bf16.xpose.msra.mxu0 0
    %537 = vmatprep.subr.bf16.mxu0 0
    %538 = vmatpush1.bf16.xpose.msra.mxu0 0
    %539 = vmatprep.subr.bf16.mxu0 0
    %540 = vmatpush1.bf16.xpose.msra.mxu0 0
    %541 = vmatprep.mubr.bf16.mxu0 0
    %542 = vmatmul.mubr.bf16.gmra.mrb[0].mxu0 %v504
    %v543 = vpop.f32.mrb[0].mxu0
    %v544 = vadd.f32 0.0, %v543
    %v545 = vpop.f32.mrb[0].mxu0
    %v546 = vpop.f32.mrb[0].mxu0
    %v547 = vpop.f32.mrb[0].mxu0
    %548 = vdwg.mxu0
    %v549 = vmul.f32 %v544, 0.35355338
    %v550 = vsel %vm279, %v549, -inf
    %551 = vmax.xlane.f32.xlu0 %v550
    %v552 = vpop.xlane.xlu0 %551
    %v553 = vsub.f32 %v549, %v552
    %v554 = vmul.f32 %v553, 1.442695
    %v555 = vpow.pop %v554
    %v556 = vsel %vm279, %v555, 0.0
    %557 = vadd.xlane.f32.xlu0 %v556
    %v558 = vpop.xlane.xlu0 %557
    %v559 = vrcp.pop %v558
    %v560 = vmul.f32 %v555, %v559
    %v561 = vpack.c.bf16 %v560, %v560
    %562 = vrot.lane.b32.xlu0 %v275, 48
    %v563 = vpop.permute.xlu0 %562
    %v565 = vsel %vm279, %v561, 0
    %v568 = vsel %vm344, %v563, 0
    %570 = vmatprep.subr.bf16.mxu0 0
    %571 = vmatpush1.bf16.msra.mxu0 %v568
    %572 = vmatprep.subr.bf16.mxu0 0
    %573 = vmatpush1.bf16.msra.mxu0 0
    %574 = vmatprep.subr.bf16.mxu0 0
    %575 = vmatpush1.bf16.msra.mxu0 0
    %576 = vmatprep.subr.bf16.mxu0 0
    %577 = vmatpush1.bf16.msra.mxu0 0
    %578 = vmatprep.subr.bf16.mxu0 0
    %579 = vmatpush1.bf16.msra.mxu0 0
    %580 = vmatprep.subr.bf16.mxu0 0
    %581 = vmatpush1.bf16.msra.mxu0 0
    %582 = vmatprep.subr.bf16.mxu0 0
    %583 = vmatpush1.bf16.msra.mxu0 0
    %584 = vmatprep.subr.bf16.mxu0 0
    %585 = vmatpush1.bf16.msra.mxu0 0
    %586 = vmatprep.subr.bf16.mxu0 0
    %587 = vmatpush1.bf16.msra.mxu0 0
    %588 = vmatprep.subr.bf16.mxu0 0
    %589 = vmatpush1.bf16.msra.mxu0 0
    %590 = vmatprep.subr.bf16.mxu0 0
    %591 = vmatpush1.bf16.msra.mxu0 0
    %592 = vmatprep.subr.bf16.mxu0 0
    %593 = vmatpush1.bf16.msra.mxu0 0
    %594 = vmatprep.subr.bf16.mxu0 0
    %595 = vmatpush1.bf16.msra.mxu0 0
    %596 = vmatprep.subr.bf16.mxu0 0
    %597 = vmatpush1.bf16.msra.mxu0 0
    %598 = vmatprep.subr.bf16.mxu0 0
    %599 = vmatpush1.bf16.msra.mxu0 0
    %600 = vmatprep.subr.bf16.mxu0 0
    %601 = vmatpush1.bf16.msra.mxu0 0
    %602 = vmatprep.mubr.bf16.mxu0 0
    %603 = vmatmul.mubr.bf16.gmra.mrb[0].mxu0 %v565
    %v604 = vpop.f32.mrb[0].mxu0
    %v605 = vadd.f32 0.0, %v604
    %v606 = vpop.f32.mrb[0].mxu0
    %v607 = vpop.f32.mrb[0].mxu0
    %v608 = vpop.f32.mrb[0].mxu0
    %609 = vdwg.mxu0
    %610 = vrot.lane.b32.xlu0 %v275, 104
    %v611 = vpop.permute.xlu0 %610
    %612 = vrot.lane.b32.xlu0 %v275, 72
    %v613 = vpop.permute.xlu0 %612
    %v615 = vsel %vm279, %v611, 0
    %v618 = vsel %vm279, %v613, 0
    %620 = vmatprep.subr.bf16.mxu0 0
    %621 = vmatpush1.bf16.xpose.msra.mxu0 %v618
    %622 = vmatprep.subr.bf16.mxu0 0
    %623 = vmatpush1.bf16.xpose.msra.mxu0 0
    %624 = vmatprep.subr.bf16.mxu0 0
    %625 = vmatpush1.bf16.xpose.msra.mxu0 0
    %626 = vmatprep.subr.bf16.mxu0 0
    %627 = vmatpush1.bf16.xpose.msra.mxu0 0
    %628 = vmatprep.subr.bf16.mxu0 0
    %629 = vmatpush1.bf16.xpose.msra.mxu0 0
    %630 = vmatprep.subr.bf16.mxu0 0
    %631 = vmatpush1.bf16.xpose.msra.mxu0 0
    %632 = vmatprep.subr.bf16.mxu0 0
    %633 = vmatpush1.bf16.xpose.msra.mxu0 0
    %634 = vmatprep.subr.bf16.mxu0 0
    %635 = vmatpush1.bf16.xpose.msra.mxu0 0
    %636 = vmatprep.subr.bf16.mxu0 0
    %637 = vmatpush1.bf16.xpose.msra.mxu0 0
    %638 = vmatprep.subr.bf16.mxu0 0
    %639 = vmatpush1.bf16.xpose.msra.mxu0 0
    %640 = vmatprep.subr.bf16.mxu0 0
    %641 = vmatpush1.bf16.xpose.msra.mxu0 0
    %642 = vmatprep.subr.bf16.mxu0 0
    %643 = vmatpush1.bf16.xpose.msra.mxu0 0
    %644 = vmatprep.subr.bf16.mxu0 0
    %645 = vmatpush1.bf16.xpose.msra.mxu0 0
    %646 = vmatprep.subr.bf16.mxu0 0
    %647 = vmatpush1.bf16.xpose.msra.mxu0 0
    %648 = vmatprep.subr.bf16.mxu0 0
    %649 = vmatpush1.bf16.xpose.msra.mxu0 0
    %650 = vmatprep.subr.bf16.mxu0 0
    %651 = vmatpush1.bf16.xpose.msra.mxu0 0
    %652 = vmatprep.mubr.bf16.mxu0 0
    %653 = vmatmul.mubr.bf16.gmra.mrb[0].mxu0 %v615
    %v654 = vpop.f32.mrb[0].mxu0
    %v655 = vadd.f32 0.0, %v654
    %v656 = vpop.f32.mrb[0].mxu0
    %v657 = vpop.f32.mrb[0].mxu0
    %v658 = vpop.f32.mrb[0].mxu0
    %659 = vdwg.mxu0
    %v660 = vmul.f32 %v655, 0.35355338
    %v661 = vsel %vm279, %v660, -inf
    %662 = vmax.xlane.f32.xlu0 %v661
    %v663 = vpop.xlane.xlu0 %662
    %v664 = vsub.f32 %v660, %v663
    %v665 = vmul.f32 %v664, 1.442695
    %v666 = vpow.pop %v665
    %v667 = vsel %vm279, %v666, 0.0
    %668 = vadd.xlane.f32.xlu0 %v667
    %v669 = vpop.xlane.xlu0 %668
    %v670 = vrcp.pop %v669
    %v671 = vmul.f32 %v666, %v670
    %v672 = vpack.c.bf16 %v671, %v671
    %673 = vrot.lane.b32.xlu0 %v275, 40
    %v674 = vpop.permute.xlu0 %673
    %v676 = vsel %vm279, %v672, 0
    %v679 = vsel %vm344, %v674, 0
    %681 = vmatprep.subr.bf16.mxu0 0
    %682 = vmatpush1.bf16.msra.mxu0 %v679
    %683 = vmatprep.subr.bf16.mxu0 0
    %684 = vmatpush1.bf16.msra.mxu0 0
    %685 = vmatprep.subr.bf16.mxu0 0
    %686 = vmatpush1.bf16.msra.mxu0 0
    %687 = vmatprep.subr.bf16.mxu0 0
    %688 = vmatpush1.bf16.msra.mxu0 0
    %689 = vmatprep.subr.bf16.mxu0 0
    %690 = vmatpush1.bf16.msra.mxu0 0
    %691 = vmatprep.subr.bf16.mxu0 0
    %692 = vmatpush1.bf16.msra.mxu0 0
    %693 = vmatprep.subr.bf16.mxu0 0
    %694 = vmatpush1.bf16.msra.mxu0 0
    %695 = vmatprep.subr.bf16.mxu0 0
    %696 = vmatpush1.bf16.msra.mxu0 0
    %697 = vmatprep.subr.bf16.mxu0 0
    %698 = vmatpush1.bf16.msra.mxu0 0
    %699 = vmatprep.subr.bf16.mxu0 0
    %700 = vmatpush1.bf16.msra.mxu0 0
    %701 = vmatprep.subr.bf16.mxu0 0
    %702 = vmatpush1.bf16.msra.mxu0 0
    %703 = vmatprep.subr.bf16.mxu0 0
    %704 = vmatpush1.bf16.msra.mxu0 0
    %705 = vmatprep.subr.bf16.mxu0 0
    %706 = vmatpush1.bf16.msra.mxu0 0
    %707 = vmatprep.subr.bf16.mxu0 0
    %708 = vmatpush1.bf16.msra.mxu0 0
    %709 = vmatprep.subr.bf16.mxu0 0
    %710 = vmatpush1.bf16.msra.mxu0 0
    %711 = vmatprep.subr.bf16.mxu0 0
    %712 = vmatpush1.bf16.msra.mxu0 0
    %713 = vmatprep.mubr.bf16.mxu0 0
    %714 = vmatmul.mubr.bf16.gmra.mrb[0].mxu0 %v676
    %v715 = vpop.f32.mrb[0].mxu0
    %v716 = vadd.f32 0.0, %v715
    %v717 = vpop.f32.mrb[0].mxu0
    %v718 = vpop.f32.mrb[0].mxu0
    %v719 = vpop.f32.mrb[0].mxu0
    %720 = vdwg.mxu0
    %722 = vrot.lane.b32.xlu0 %v494, 8
    %v723 = vpop.permute.xlu0 %722
    %726 = vrot.lane.b32.xlu0 %v605, 16
    %v727 = vpop.permute.xlu0 %726
    %730 = vrot.lane.b32.xlu0 %v716, 24
    %v731 = vpop.permute.xlu0 %730
    %v733 = vsel %vm279, %v383, %v723
    %vm734 = vcmask 130048
    %v735 = vsel %vm734, %v733, %v727
    %vm736 = vcmask 195584
    %v737 = vsel %vm736, %v735, %v731
    %v738 = vsel %vm230, %v737, 0.0
    %v739 = vrot.slane %v738, 4
    %v740 = vadd.f32 %v738, %v739
    %v741 = vrot.slane %v740, 2
    %v742 = vadd.f32 %v740, %v741
    %v743 = vrot.slane %v742, 1
    %v744 = vadd.f32 %v742, %v743
    %v745 = vrcp.pop 8.0
    %v746 = vmul.f32 %v744, %v745
    %v747 = vrot.slane %v275, 4
    %748 = vrot.lane.b32.xlu0 %v747, 96
    %v749 = vpop.permute.xlu0 %748
    %v751 = vsel %vm279, %v747, 0
    %v754 = vsel %vm279, %v749, 0
    %756 = vmatprep.subr.bf16.mxu0 0
    %757 = vmatpush1.bf16.xpose.msra.mxu0 %v754
    %758 = vmatprep.subr.bf16.mxu0 0
    %759 = vmatpush1.bf16.xpose.msra.mxu0 0
    %760 = vmatprep.subr.bf16.mxu0 0
    %761 = vmatpush1.bf16.xpose.msra.mxu0 0
    %762 = vmatprep.subr.bf16.mxu0 0
    %763 = vmatpush1.bf16.xpose.msra.mxu0 0
    %764 = vmatprep.subr.bf16.mxu0 0
    %765 = vmatpush1.bf16.xpose.msra.mxu0 0
    %766 = vmatprep.subr.bf16.mxu0 0
    %767 = vmatpush1.bf16.xpose.msra.mxu0 0
    %768 = vmatprep.subr.bf16.mxu0 0
    %769 = vmatpush1.bf16.xpose.msra.mxu0 0
    %770 = vmatprep.subr.bf16.mxu0 0
    %771 = vmatpush1.bf16.xpose.msra.mxu0 0
    %772 = vmatprep.subr.bf16.mxu0 0
    %773 = vmatpush1.bf16.xpose.msra.mxu0 0
    %774 = vmatprep.subr.bf16.mxu0 0
    %775 = vmatpush1.bf16.xpose.msra.mxu0 0
    %776 = vmatprep.subr.bf16.mxu0 0
    %777 = vmatpush1.bf16.xpose.msra.mxu0 0
    %778 = vmatprep.subr.bf16.mxu0 0
    %779 = vmatpush1.bf16.xpose.msra.mxu0 0
    %780 = vmatprep.subr.bf16.mxu0 0
    %781 = vmatpush1.bf16.xpose.msra.mxu0 0
    %782 = vmatprep.subr.bf16.mxu0 0
    %783 = vmatpush1.bf16.xpose.msra.mxu0 0
    %784 = vmatprep.subr.bf16.mxu0 0
    %785 = vmatpush1.bf16.xpose.msra.mxu0 0
    %786 = vmatprep.subr.bf16.mxu0 0
    %787 = vmatpush1.bf16.xpose.msra.mxu0 0
    %788 = vmatprep.mubr.bf16.mxu0 0
    %789 = vmatmul.mubr.bf16.gmra.mrb[0].mxu0 %v751
    %v790 = vpop.f32.mrb[0].mxu0
    %v791 = vadd.f32 0.0, %v790
    %v792 = vpop.f32.mrb[0].mxu0
    %v793 = vpop.f32.mrb[0].mxu0
    %v794 = vpop.f32.mrb[0].mxu0
    %795 = vdwg.mxu0
    %v796 = vmul.f32 %v791, 0.35355338
    %v797 = vsel %vm279, %v796, -inf
    %798 = vmax.xlane.f32.xlu0 %v797
    %v799 = vpop.xlane.xlu0 %798
    %v800 = vsub.f32 %v796, %v799
    %v801 = vmul.f32 %v800, 1.442695
    %v802 = vpow.pop %v801
    %v803 = vsel %vm279, %v802, 0.0
    %804 = vadd.xlane.f32.xlu0 %v803
    %v805 = vpop.xlane.xlu0 %804
    %v806 = vrcp.pop %v805
    %v807 = vmul.f32 %v802, %v806
    %v808 = vpack.c.bf16 %v807, %v807
    %809 = vrot.lane.b32.xlu0 %v747, 64
    %v810 = vpop.permute.xlu0 %809
    %v812 = vsel %vm279, %v808, 0
    %v815 = vsel %vm344, %v810, 0
    %817 = vmatprep.subr.bf16.mxu0 0
    %818 = vmatpush1.bf16.msra.mxu0 %v815
    %819 = vmatprep.subr.bf16.mxu0 0
    %820 = vmatpush1.bf16.msra.mxu0 0
    %821 = vmatprep.subr.bf16.mxu0 0
    %822 = vmatpush1.bf16.msra.mxu0 0
    %823 = vmatprep.subr.bf16.mxu0 0
    %824 = vmatpush1.bf16.msra.mxu0 0
    %825 = vmatprep.subr.bf16.mxu0 0
    %826 = vmatpush1.bf16.msra.mxu0 0
    %827 = vmatprep.subr.bf16.mxu0 0
    %828 = vmatpush1.bf16.msra.mxu0 0
    %829 = vmatprep.subr.bf16.mxu0 0
    %830 = vmatpush1.bf16.msra.mxu0 0
    %831 = vmatprep.subr.bf16.mxu0 0
    %832 = vmatpush1.bf16.msra.mxu0 0
    %833 = vmatprep.subr.bf16.mxu0 0
    %834 = vmatpush1.bf16.msra.mxu0 0
    %835 = vmatprep.subr.bf16.mxu0 0
    %836 = vmatpush1.bf16.msra.mxu0 0
    %837 = vmatprep.subr.bf16.mxu0 0
    %838 = vmatpush1.bf16.msra.mxu0 0
    %839 = vmatprep.subr.bf16.mxu0 0
    %840 = vmatpush1.bf16.msra.mxu0 0
    %841 = vmatprep.subr.bf16.mxu0 0
    %842 = vmatpush1.bf16.msra.mxu0 0
    %843 = vmatprep.subr.bf16.mxu0 0
    %844 = vmatpush1.bf16.msra.mxu0 0
    %845 = vmatprep.subr.bf16.mxu0 0
    %846 = vmatpush1.bf16.msra.mxu0 0
    %847 = vmatprep.subr.bf16.mxu0 0
    %848 = vmatpush1.bf16.msra.mxu0 0
    %849 = vmatprep.mubr.bf16.mxu0 0
    %850 = vmatmul.mubr.bf16.gmra.mrb[0].mxu0 %v812
    %v851 = vpop.f32.mrb[0].mxu0
    %v852 = vadd.f32 0.0, %v851
    %v853 = vpop.f32.mrb[0].mxu0
    %v854 = vpop.f32.mrb[0].mxu0
    %v855 = vpop.f32.mrb[0].mxu0
    %856 = vdwg.mxu0
    %857 = vrot.lane.b32.xlu0 %v747, 120
    %v858 = vpop.permute.xlu0 %857
    %859 = vrot.lane.b32.xlu0 %v747, 88
    %v860 = vpop.permute.xlu0 %859
    %v862 = vsel %vm279, %v858, 0
    %v865 = vsel %vm279, %v860, 0
    %867 = vmatprep.subr.bf16.mxu0 0
    %868 = vmatpush1.bf16.xpose.msra.mxu0 %v865
    %869 = vmatprep.subr.bf16.mxu0 0
    %870 = vmatpush1.bf16.xpose.msra.mxu0 0
    %871 = vmatprep.subr.bf16.mxu0 0
    %872 = vmatpush1.bf16.xpose.msra.mxu0 0
    %873 = vmatprep.subr.bf16.mxu0 0
    %874 = vmatpush1.bf16.xpose.msra.mxu0 0
    %875 = vmatprep.subr.bf16.mxu0 0
    %876 = vmatpush1.bf16.xpose.msra.mxu0 0
    %877 = vmatprep.subr.bf16.mxu0 0
    %878 = vmatpush1.bf16.xpose.msra.mxu0 0
    %879 = vmatprep.subr.bf16.mxu0 0
    %880 = vmatpush1.bf16.xpose.msra.mxu0 0
    %881 = vmatprep.subr.bf16.mxu0 0
    %882 = vmatpush1.bf16.xpose.msra.mxu0 0
    %883 = vmatprep.subr.bf16.mxu0 0
    %884 = vmatpush1.bf16.xpose.msra.mxu0 0
    %885 = vmatprep.subr.bf16.mxu0 0
    %886 = vmatpush1.bf16.xpose.msra.mxu0 0
    %887 = vmatprep.subr.bf16.mxu0 0
    %888 = vmatpush1.bf16.xpose.msra.mxu0 0
    %889 = vmatprep.subr.bf16.mxu0 0
    %890 = vmatpush1.bf16.xpose.msra.mxu0 0
    %891 = vmatprep.subr.bf16.mxu0 0
    %892 = vmatpush1.bf16.xpose.msra.mxu0 0
    %893 = vmatprep.subr.bf16.mxu0 0
    %894 = vmatpush1.bf16.xpose.msra.mxu0 0
    %895 = vmatprep.subr.bf16.mxu0 0
    %896 = vmatpush1.bf16.xpose.msra.mxu0 0
    %897 = vmatprep.subr.bf16.mxu0 0
    %898 = vmatpush1.bf16.xpose.msra.mxu0 0
    %899 = vmatprep.mubr.bf16.mxu0 0
    %900 = vmatmul.mubr.bf16.gmra.mrb[0].mxu0 %v862
    %v901 = vpop.f32.mrb[0].mxu0
    %v902 = vadd.f32 0.0, %v901
    %v903 = vpop.f32.mrb[0].mxu0
    %v904 = vpop.f32.mrb[0].mxu0
    %v905 = vpop.f32.mrb[0].mxu0
    %906 = vdwg.mxu0
    %v907 = vmul.f32 %v902, 0.35355338
    %v908 = vsel %vm279, %v907, -inf
    %909 = vmax.xlane.f32.xlu0 %v908
    %v910 = vpop.xlane.xlu0 %909
    %v911 = vsub.f32 %v907, %v910
    %v912 = vmul.f32 %v911, 1.442695
    %v913 = vpow.pop %v912
    %v914 = vsel %vm279, %v913, 0.0
    %915 = vadd.xlane.f32.xlu0 %v914
    %v916 = vpop.xlane.xlu0 %915
    %v917 = vrcp.pop %v916
    %v918 = vmul.f32 %v913, %v917
    %v919 = vpack.c.bf16 %v918, %v918
    %920 = vrot.lane.b32.xlu0 %v747, 56
    %v921 = vpop.permute.xlu0 %920
    %v923 = vsel %vm279, %v919, 0
    %v926 = vsel %vm344, %v921, 0
    %928 = vmatprep.subr.bf16.mxu0 0
    %929 = vmatpush1.bf16.msra.mxu0 %v926
    %930 = vmatprep.subr.bf16.mxu0 0
    %931 = vmatpush1.bf16.msra.mxu0 0
    %932 = vmatprep.subr.bf16.mxu0 0
    %933 = vmatpush1.bf16.msra.mxu0 0
    %934 = vmatprep.subr.bf16.mxu0 0
    %935 = vmatpush1.bf16.msra.mxu0 0
    %936 = vmatprep.subr.bf16.mxu0 0
    %937 = vmatpush1.bf16.msra.mxu0 0
    %938 = vmatprep.subr.bf16.mxu0 0
    %939 = vmatpush1.bf16.msra.mxu0 0
    %940 = vmatprep.subr.bf16.mxu0 0
    %941 = vmatpush1.bf16.msra.mxu0 0
    %942 = vmatprep.subr.bf16.mxu0 0
    %943 = vmatpush1.bf16.msra.mxu0 0
    %944 = vmatprep.subr.bf16.mxu0 0
    %945 = vmatpush1.bf16.msra.mxu0 0
    %946 = vmatprep.subr.bf16.mxu0 0
    %947 = vmatpush1.bf16.msra.mxu0 0
    %948 = vmatprep.subr.bf16.mxu0 0
    %949 = vmatpush1.bf16.msra.mxu0 0
    %950 = vmatprep.subr.bf16.mxu0 0
    %951 = vmatpush1.bf16.msra.mxu0 0
    %952 = vmatprep.subr.bf16.mxu0 0
    %953 = vmatpush1.bf16.msra.mxu0 0
    %954 = vmatprep.subr.bf16.mxu0 0
    %955 = vmatpush1.bf16.msra.mxu0 0
    %956 = vmatprep.subr.bf16.mxu0 0
    %957 = vmatpush1.bf16.msra.mxu0 0
    %958 = vmatprep.subr.bf16.mxu0 0
    %959 = vmatpush1.bf16.msra.mxu0 0
    %960 = vmatprep.mubr.bf16.mxu0 0
    %961 = vmatmul.mubr.bf16.gmra.mrb[0].mxu0 %v923
    %v962 = vpop.f32.mrb[0].mxu0
    %v963 = vadd.f32 0.0, %v962
    %v964 = vpop.f32.mrb[0].mxu0
    %v965 = vpop.f32.mrb[0].mxu0
    %v966 = vpop.f32.mrb[0].mxu0
    %967 = vdwg.mxu0
    %968 = vrot.lane.b32.xlu0 %v747, 112
    %v969 = vpop.permute.xlu0 %968
    %970 = vrot.lane.b32.xlu0 %v747, 80
    %v971 = vpop.permute.xlu0 %970
    %v973 = vsel %vm279, %v969, 0
    %v976 = vsel %vm279, %v971, 0
    %978 = vmatprep.subr.bf16.mxu0 0
    %979 = vmatpush1.bf16.xpose.msra.mxu0 %v976
    %980 = vmatprep.subr.bf16.mxu0 0
    %981 = vmatpush1.bf16.xpose.msra.mxu0 0
    %982 = vmatprep.subr.bf16.mxu0 0
    %983 = vmatpush1.bf16.xpose.msra.mxu0 0
    %984 = vmatprep.subr.bf16.mxu0 0
    %985 = vmatpush1.bf16.xpose.msra.mxu0 0
    %986 = vmatprep.subr.bf16.mxu0 0
    %987 = vmatpush1.bf16.xpose.msra.mxu0 0
    %988 = vmatprep.subr.bf16.mxu0 0
    %989 = vmatpush1.bf16.xpose.msra.mxu0 0
    %990 = vmatprep.subr.bf16.mxu0 0
    %991 = vmatpush1.bf16.xpose.msra.mxu0 0
    %992 = vmatprep.subr.bf16.mxu0 0
    %993 = vmatpush1.bf16.xpose.msra.mxu0 0
    %994 = vmatprep.subr.bf16.mxu0 0
    %995 = vmatpush1.bf16.xpose.msra.mxu0 0
    %996 = vmatprep.subr.bf16.mxu0 0
    %997 = vmatpush1.bf16.xpose.msra.mxu0 0
    %998 = vmatprep.subr.bf16.mxu0 0
    %999 = vmatpush1.bf16.xpose.msra.mxu0 0
    %1000 = vmatprep.subr.bf16.mxu0 0
    %1001 = vmatpush1.bf16.xpose.msra.mxu0 0
    %1002 = vmatprep.subr.bf16.mxu0 0
    %1003 = vmatpush1.bf16.xpose.msra.mxu0 0
    %1004 = vmatprep.subr.bf16.mxu0 0
    %1005 = vmatpush1.bf16.xpose.msra.mxu0 0
    %1006 = vmatprep.subr.bf16.mxu0 0
    %1007 = vmatpush1.bf16.xpose.msra.mxu0 0
    %1008 = vmatprep.subr.bf16.mxu0 0
    %1009 = vmatpush1.bf16.xpose.msra.mxu0 0
    %1010 = vmatprep.mubr.bf16.mxu0 0
    %1011 = vmatmul.mubr.bf16.gmra.mrb[0].mxu0 %v973
    %v1012 = vpop.f32.mrb[0].mxu0
    %v1013 = vadd.f32 0.0, %v1012
    %v1014 = vpop.f32.mrb[0].mxu0
    %v1015 = vpop.f32.mrb[0].mxu0
    %v1016 = vpop.f32.mrb[0].mxu0
    %1017 = vdwg.mxu0
    %v1018 = vmul.f32 %v1013, 0.35355338
    %v1019 = vsel %vm279, %v1018, -inf
    %1020 = vmax.xlane.f32.xlu0 %v1019
    %v1021 = vpop.xlane.xlu0 %1020
    %v1022 = vsub.f32 %v1018, %v1021
    %v1023 = vmul.f32 %v1022, 1.442695
    %v1024 = vpow.pop %v1023
    %v1025 = vsel %vm279, %v1024, 0.0
    %1026 = vadd.xlane.f32.xlu0 %v1025
    %v1027 = vpop.xlane.xlu0 %1026
    %v1028 = vrcp.pop %v1027
    %v1029 = vmul.f32 %v1024, %v1028
    %v1030 = vpack.c.bf16 %v1029, %v1029
    %1031 = vrot.lane.b32.xlu0 %v747, 48
    %v1032 = vpop.permute.xlu0 %1031
    %v1034 = vsel %vm279, %v1030, 0
    %v1037 = vsel %vm344, %v1032, 0
    %1039 = vmatprep.subr.bf16.mxu0 0
    %1040 = vmatpush1.bf16.msra.mxu0 %v1037
    %1041 = vmatprep.subr.bf16.mxu0 0
    %1042 = vmatpush1.bf16.msra.mxu0 0
    %1043 = vmatprep.subr.bf16.mxu0 0
    %1044 = vmatpush1.bf16.msra.mxu0 0
    %1045 = vmatprep.subr.bf16.mxu0 0
    %1046 = vmatpush1.bf16.msra.mxu0 0
    %1047 = vmatprep.subr.bf16.mxu0 0
    %1048 = vmatpush1.bf16.msra.mxu0 0
    %1049 = vmatprep.subr.bf16.mxu0 0
    %1050 = vmatpush1.bf16.msra.mxu0 0
    %1051 = vmatprep.subr.bf16.mxu0 0
    %1052 = vmatpush1.bf16.msra.mxu0 0
    %1053 = vmatprep.subr.bf16.mxu0 0
    %1054 = vmatpush1.bf16.msra.mxu0 0
    %1055 = vmatprep.subr.bf16.mxu0 0
    %1056 = vmatpush1.bf16.msra.mxu0 0
    %1057 = vmatprep.subr.bf16.mxu0 0
    %1058 = vmatpush1.bf16.msra.mxu0 0
    %1059 = vmatprep.subr.bf16.mxu0 0
    %1060 = vmatpush1.bf16.msra.mxu0 0
    %1061 = vmatprep.subr.bf16.mxu0 0
    %1062 = vmatpush1.bf16.msra.mxu0 0
    %1063 = vmatprep.subr.bf16.mxu0 0
    %1064 = vmatpush1.bf16.msra.mxu0 0
    %1065 = vmatprep.subr.bf16.mxu0 0
    %1066 = vmatpush1.bf16.msra.mxu0 0
    %1067 = vmatprep.subr.bf16.mxu0 0
    %1068 = vmatpush1.bf16.msra.mxu0 0
    %1069 = vmatprep.subr.bf16.mxu0 0
    %1070 = vmatpush1.bf16.msra.mxu0 0
    %1071 = vmatprep.mubr.bf16.mxu0 0
    %1072 = vmatmul.mubr.bf16.gmra.mrb[0].mxu0 %v1034
    %v1073 = vpop.f32.mrb[0].mxu0
    %v1074 = vadd.f32 0.0, %v1073
    %v1075 = vpop.f32.mrb[0].mxu0
    %v1076 = vpop.f32.mrb[0].mxu0
    %v1077 = vpop.f32.mrb[0].mxu0
    %1078 = vdwg.mxu0
    %1079 = vrot.lane.b32.xlu0 %v747, 104
    %v1080 = vpop.permute.xlu0 %1079
    %1081 = vrot.lane.b32.xlu0 %v747, 72
    %v1082 = vpop.permute.xlu0 %1081
    %v1084 = vsel %vm279, %v1080, 0
    %v1087 = vsel %vm279, %v1082, 0
    %1089 = vmatprep.subr.bf16.mxu0 0
    %1090 = vmatpush1.bf16.xpose.msra.mxu0 %v1087
    %1091 = vmatprep.subr.bf16.mxu0 0
    %1092 = vmatpush1.bf16.xpose.msra.mxu0 0
    %1093 = vmatprep.subr.bf16.mxu0 0
    %1094 = vmatpush1.bf16.xpose.msra.mxu0 0
    %1095 = vmatprep.subr.bf16.mxu0 0
    %1096 = vmatpush1.bf16.xpose.msra.mxu0 0
    %1097 = vmatprep.subr.bf16.mxu0 0
    %1098 = vmatpush1.bf16.xpose.msra.mxu0 0
    %1099 = vmatprep.subr.bf16.mxu0 0
    %1100 = vmatpush1.bf16.xpose.msra.mxu0 0
    %1101 = vmatprep.subr.bf16.mxu0 0
    %1102 = vmatpush1.bf16.xpose.msra.mxu0 0
    %1103 = vmatprep.subr.bf16.mxu0 0
    %1104 = vmatpush1.bf16.xpose.msra.mxu0 0
    %1105 = vmatprep.subr.bf16.mxu0 0
    %1106 = vmatpush1.bf16.xpose.msra.mxu0 0
    %1107 = vmatprep.subr.bf16.mxu0 0
    %1108 = vmatpush1.bf16.xpose.msra.mxu0 0
    %1109 = vmatprep.subr.bf16.mxu0 0
    %1110 = vmatpush1.bf16.xpose.msra.mxu0 0
    %1111 = vmatprep.subr.bf16.mxu0 0
    %1112 = vmatpush1.bf16.xpose.msra.mxu0 0
    %1113 = vmatprep.subr.bf16.mxu0 0
    %1114 = vmatpush1.bf16.xpose.msra.mxu0 0
    %1115 = vmatprep.subr.bf16.mxu0 0
    %1116 = vmatpush1.bf16.xpose.msra.mxu0 0
    %1117 = vmatprep.subr.bf16.mxu0 0
    %1118 = vmatpush1.bf16.xpose.msra.mxu0 0
    %1119 = vmatprep.subr.bf16.mxu0 0
    %1120 = vmatpush1.bf16.xpose.msra.mxu0 0
    %1121 = vmatprep.mubr.bf16.mxu0 0
    %1122 = vmatmul.mubr.bf16.gmra.mrb[0].mxu0 %v1084
    %v1123 = vpop.f32.mrb[0].mxu0
    %v1124 = vadd.f32 0.0, %v1123
    %v1125 = vpop.f32.mrb[0].mxu0
    %v1126 = vpop.f32.mrb[0].mxu0
    %v1127 = vpop.f32.mrb[0].mxu0
    %1128 = vdwg.mxu0
    %v1129 = vmul.f32 %v1124, 0.35355338
    %v1130 = vsel %vm279, %v1129, -inf
    %1131 = vmax.xlane.f32.xlu0 %v1130
    %v1132 = vpop.xlane.xlu0 %1131
    %v1133 = vsub.f32 %v1129, %v1132
    %v1134 = vmul.f32 %v1133, 1.442695
    %v1135 = vpow.pop %v1134
    %v1136 = vsel %vm279, %v1135, 0.0
    %1137 = vadd.xlane.f32.xlu0 %v1136
    %v1138 = vpop.xlane.xlu0 %1137
    %v1139 = vrcp.pop %v1138
    %v1140 = vmul.f32 %v1135, %v1139
    %v1141 = vpack.c.bf16 %v1140, %v1140
    %1142 = vrot.lane.b32.xlu0 %v747, 40
    %v1143 = vpop.permute.xlu0 %1142
    %v1145 = vsel %vm279, %v1141, 0
    %v1148 = vsel %vm344, %v1143, 0
    %1150 = vmatprep.subr.bf16.mxu0 0
    %1151 = vmatpush1.bf16.msra.mxu0 %v1148
    %1152 = vmatprep.subr.bf16.mxu0 0
    %1153 = vmatpush1.bf16.msra.mxu0 0
    %1154 = vmatprep.subr.bf16.mxu0 0
    %1155 = vmatpush1.bf16.msra.mxu0 0
    %1156 = vmatprep.subr.bf16.mxu0 0
    %1157 = vmatpush1.bf16.msra.mxu0 0
    %1158 = vmatprep.subr.bf16.mxu0 0
    %1159 = vmatpush1.bf16.msra.mxu0 0
    %1160 = vmatprep.subr.bf16.mxu0 0
    %1161 = vmatpush1.bf16.msra.mxu0 0
    %1162 = vmatprep.subr.bf16.mxu0 0
    %1163 = vmatpush1.bf16.msra.mxu0 0
    %1164 = vmatprep.subr.bf16.mxu0 0
    %1165 = vmatpush1.bf16.msra.mxu0 0
    %1166 = vmatprep.subr.bf16.mxu0 0
    %1167 = vmatpush1.bf16.msra.mxu0 0
    %1168 = vmatprep.subr.bf16.mxu0 0
    %1169 = vmatpush1.bf16.msra.mxu0 0
    %1170 = vmatprep.subr.bf16.mxu0 0
    %1171 = vmatpush1.bf16.msra.mxu0 0
    %1172 = vmatprep.subr.bf16.mxu0 0
    %1173 = vmatpush1.bf16.msra.mxu0 0
    %1174 = vmatprep.subr.bf16.mxu0 0
    %1175 = vmatpush1.bf16.msra.mxu0 0
    %1176 = vmatprep.subr.bf16.mxu0 0
    %1177 = vmatpush1.bf16.msra.mxu0 0
    %1178 = vmatprep.subr.bf16.mxu0 0
    %1179 = vmatpush1.bf16.msra.mxu0 0
    %1180 = vmatprep.subr.bf16.mxu0 0
    %1181 = vmatpush1.bf16.msra.mxu0 0
    %1182 = vmatprep.mubr.bf16.mxu0 0
    %1183 = vmatmul.mubr.bf16.gmra.mrb[0].mxu0 %v1145
    %v1184 = vpop.f32.mrb[0].mxu0
    %v1185 = vadd.f32 0.0, %v1184
    %v1186 = vpop.f32.mrb[0].mxu0
    %v1187 = vpop.f32.mrb[0].mxu0
    %v1188 = vpop.f32.mrb[0].mxu0
    %1189 = vdwg.mxu0
    %1191 = vrot.lane.b32.xlu0 %v963, 8
    %v1192 = vpop.permute.xlu0 %1191
    %1195 = vrot.lane.b32.xlu0 %v1074, 16
    %v1196 = vpop.permute.xlu0 %1195
    %1199 = vrot.lane.b32.xlu0 %v1185, 24
    %v1200 = vpop.permute.xlu0 %1199
    %v1202 = vsel %vm279, %v852, %v1192
    %v1203 = vsel %vm734, %v1202, %v1196
    %v1204 = vsel %vm736, %v1203, %v1200
    %v1205 = vsel %vm230, %v1204, 0.0
    %v1206 = vrot.slane %v1205, 4
    %v1207 = vadd.f32 %v1205, %v1206
    %v1208 = vrot.slane %v1207, 2
    %v1209 = vadd.f32 %v1207, %v1208
    %v1210 = vrot.slane %v1209, 1
    %v1211 = vadd.f32 %v1209, %v1210
    %v1212 = vmul.f32 %v1211, %v745
    %vm1213 = vcmask 1040384
    %v1214 = vsel %vm1213, %v746, %v1212
    %v1215 = vpack.c.bf16 %v1204, %v737
    %v1216 = vlaneseq
    %v1217 = vshrl.u32 %v1216, 7
    %v1218 = vld [vmem:[%s9] sm:$0xf]
    %v1219 = vld [vmem:[%s9 + $0x4] sm:$0xf]
    %v1220 = vld [vmem:[%s9 + $0x8] sm:$0xf]
    %v1221 = vld [vmem:[%s9 + $0xc] sm:$0xf]
    %v1226 = vunpack.c.l.b16 %v1218
    %v1227 = vunpack.c.l.b16 %v1219
    %v1228 = vunpack.c.l.b16 %v1220
    %v1229 = vunpack.c.l.b16 %v1221
    %v1230 = vpack.c.b16 %v1227, %v1226
    %v1231 = vpack.c.b16 %v1229, %v1228
    %v1235 = vsel %vm230, %v1215, 0
    %1237 = vmatprep.subr.bf16.mxu0 0
    %1238 = vmatpush1.bf16.msra.mxu0 %v1230
    %1239 = vmatprep.subr.bf16.mxu0 0
    %1240 = vmatpush1.bf16.msra.mxu0 %v1231
    %1241 = vmatprep.subr.bf16.mxu0 0
    %1242 = vmatpush1.bf16.msra.mxu0 0
    %1243 = vmatprep.subr.bf16.mxu0 0
    %1244 = vmatpush1.bf16.msra.mxu0 0
    %1245 = vmatprep.subr.bf16.mxu0 0
    %1246 = vmatpush1.bf16.msra.mxu0 0
    %1247 = vmatprep.subr.bf16.mxu0 0
    %1248 = vmatpush1.bf16.msra.mxu0 0
    %1249 = vmatprep.subr.bf16.mxu0 0
    %1250 = vmatpush1.bf16.msra.mxu0 0
    %1251 = vmatprep.subr.bf16.mxu0 0
    %1252 = vmatpush1.bf16.msra.mxu0 0
    %1253 = vmatprep.subr.bf16.mxu0 0
    %1254 = vmatpush1.bf16.msra.mxu0 0
    %1255 = vmatprep.subr.bf16.mxu0 0
    %1256 = vmatpush1.bf16.msra.mxu0 0
    %1257 = vmatprep.subr.bf16.mxu0 0
    %1258 = vmatpush1.bf16.msra.mxu0 0
    %1259 = vmatprep.subr.bf16.mxu0 0
    %1260 = vmatpush1.bf16.msra.mxu0 0
    %1261 = vmatprep.subr.bf16.mxu0 0
    %1262 = vmatpush1.bf16.msra.mxu0 0
    %1263 = vmatprep.subr.bf16.mxu0 0
    %1264 = vmatpush1.bf16.msra.mxu0 0
    %1265 = vmatprep.subr.bf16.mxu0 0
    %1266 = vmatpush1.bf16.msra.mxu0 0
    %1267 = vmatprep.subr.bf16.mxu0 0
    %1268 = vmatpush1.bf16.msra.mxu0 0
    %1269 = vmatprep.mubr.bf16.mxu0 0
    %1270 = vmatmul.mubr.bf16.gmra.mrb[0].mxu0 %v1235
    %v1271 = vpop.f32.mrb[0].mxu0
    %v1272 = vadd.f32 0.0, %v1271
    %v1273 = vpop.f32.mrb[0].mxu0
    %v1274 = vpop.f32.mrb[0].mxu0
    %v1275 = vadd.f32 0.0, %v1274
    %v1276 = vpop.f32.mrb[0].mxu0
    %1277 = vdwg.mxu0
    %v1278 = vld [vmem:[#allocation12] sm:$0x1]
    %v1280 = vlaneseq
    %v1281 = vshrl.u32 %v1280, 7
    %v1282 = vsub.s32 0, %v1281
    %v1283 = vrot.slane %v1278, %v1282
    %1284 = vrot.lane.b32.xlu0 %v1283, 64
    %v1285 = vpop.permute.xlu0 %1284
    %v1287 = vadd.f32 %v1272, %v1285
    %v1288 = vadd.f32 %v1275, %v1285
    %v1289 = vmax.f32 %v1287, 0.0
    %v1290 = vmax.f32 %v1288, 0.0
    %v1291 = vrot.slane %v737, 7
    %v1292 = vrot.slane %v1204, 7
    %vm1293 = vcmp.lt.s32.totalorder %v1217, 1
    %v1294 = vsel %vm1293, %v1291, %v1292
    %v1295 = vsel %vm1293, %v1292, %v1291
    %vm1296 = vcmp.ge.s32.totalorder %v1217, 1
    %v1297 = vsel %vm1296, 1, 0
    %1298 = vset.pattern.permute.xlu0 0
    %1299 = vperm.xlu0 %1298, %v1297
    %v1300 = vpop.permute.xlu0 %1299
    %vm1301 = vcmp.eq.s32.totalorder %v1300, 1
    %v1302 = vsel %vm1301, %v1295, 0.0
    %v1303 = vsel %vm1301, %v1294, 0.0
    %v1304 = vpack.c.bf16 %v1303, %v1302
    %v1305 = vld [vmem:[#allocation8] sm:$0xf]
    %v1306 = vld [vmem:[#allocation8 + $0x4] sm:$0xf]
    %v1307 = vld [vmem:[#allocation8 + $0x8] sm:$0xf]
    %v1308 = vld [vmem:[#allocation8 + $0xc] sm:$0xf]
    %v1313 = vunpack.c.l.b16 %v1305
    %v1314 = vunpack.c.l.b16 %v1306
    %v1315 = vunpack.c.l.b16 %v1307
    %v1316 = vunpack.c.l.b16 %v1308
    %v1317 = vpack.c.b16 %v1314, %v1313
    %v1318 = vpack.c.b16 %v1316, %v1315
    %v1322 = vsel %vm230, %v1304, 0
    %1324 = vmatprep.subr.bf16.mxu0 0
    %1325 = vmatpush1.bf16.msra.mxu0 %v1317
    %1326 = vmatprep.subr.bf16.mxu0 0
    %1327 = vmatpush1.bf16.msra.mxu0 %v1318
    %1328 = vmatprep.subr.bf16.mxu0 0
    %1329 = vmatpush1.bf16.msra.mxu0 0
    %1330 = vmatprep.subr.bf16.mxu0 0
    %1331 = vmatpush1.bf16.msra.mxu0 0
    %1332 = vmatprep.subr.bf16.mxu0 0
    %1333 = vmatpush1.bf16.msra.mxu0 0
    %1334 = vmatprep.subr.bf16.mxu0 0
    %1335 = vmatpush1.bf16.msra.mxu0 0
    %1336 = vmatprep.subr.bf16.mxu0 0
    %1337 = vmatpush1.bf16.msra.mxu0 0
    %1338 = vmatprep.subr.bf16.mxu0 0
    %1339 = vmatpush1.bf16.msra.mxu0 0
    %1340 = vmatprep.subr.bf16.mxu0 0
    %1341 = vmatpush1.bf16.msra.mxu0 0
    %1342 = vmatprep.subr.bf16.mxu0 0
    %1343 = vmatpush1.bf16.msra.mxu0 0
    %1344 = vmatprep.subr.bf16.mxu0 0
    %1345 = vmatpush1.bf16.msra.mxu0 0
    %1346 = vmatprep.subr.bf16.mxu0 0
    %1347 = vmatpush1.bf16.msra.mxu0 0
    %1348 = vmatprep.subr.bf16.mxu0 0
    %1349 = vmatpush1.bf16.msra.mxu0 0
    %1350 = vmatprep.subr.bf16.mxu0 0
    %1351 = vmatpush1.bf16.msra.mxu0 0
    %1352 = vmatprep.subr.bf16.mxu0 0
    %1353 = vmatpush1.bf16.msra.mxu0 0
    %1354 = vmatprep.subr.bf16.mxu0 0
    %1355 = vmatpush1.bf16.msra.mxu0 0
    %1356 = vmatprep.mubr.bf16.mxu0 0
    %1357 = vmatmul.mubr.bf16.gmra.mrb[0].mxu0 %v1322
    %v1358 = vpop.f32.mrb[0].mxu0
    %v1359 = vadd.f32 0.0, %v1358
    %v1360 = vpop.f32.mrb[0].mxu0
    %v1361 = vpop.f32.mrb[0].mxu0
    %v1362 = vadd.f32 0.0, %v1361
    %v1363 = vpop.f32.mrb[0].mxu0
    %1364 = vdwg.mxu0
    %v1365 = vrot.slane %v737, 1
    %v1366 = vrot.slane %v1204, 1
    %vm1367 = vcmp.lt.s32.totalorder %v1217, 7
    %v1368 = vsel %vm1367, %v1365, %v1366
    %v1369 = vsel %vm1367, %v1366, %v1365
    %v1370 = vsel %vm1367, 1, 0
    %1371 = vset.pattern.permute.xlu0 0
    %1372 = vperm.xlu0 %1371, %v1370
    %v1373 = vpop.permute.xlu0 %1372
    %vm1374 = vcmp.eq.s32.totalorder %v1373, 1
    %v1375 = vsel %vm1374, %v1368, 0.0
    %v1376 = vsel %vm1374, %v1369, 0.0
    %v1377 = vpack.c.bf16 %v1376, %v1375
    %v1378 = vld [vmem:[#allocation9] sm:$0xf]
    %v1379 = vld [vmem:[#allocation9 + $0x4] sm:$0xf]
    %v1380 = vld [vmem:[#allocation9 + $0x8] sm:$0xf]
    %v1381 = vld [vmem:[#allocation9 + $0xc] sm:$0xf]
    %v1386 = vunpack.c.l.b16 %v1378
    %v1387 = vunpack.c.l.b16 %v1379
    %v1388 = vunpack.c.l.b16 %v1380
    %v1389 = vunpack.c.l.b16 %v1381
    %v1390 = vpack.c.b16 %v1387, %v1386
    %v1391 = vpack.c.b16 %v1389, %v1388
    %v1395 = vsel %vm230, %v1377, 0
    %1397 = vmatprep.subr.bf16.mxu0 0
    %1398 = vmatpush1.bf16.msra.mxu0 %v1390
    %1399 = vmatprep.subr.bf16.mxu0 0
    %1400 = vmatpush1.bf16.msra.mxu0 %v1391
    %1401 = vmatprep.subr.bf16.mxu0 0
    %1402 = vmatpush1.bf16.msra.mxu0 0
    %1403 = vmatprep.subr.bf16.mxu0 0
    %1404 = vmatpush1.bf16.msra.mxu0 0
    %1405 = vmatprep.subr.bf16.mxu0 0
    %1406 = vmatpush1.bf16.msra.mxu0 0
    %1407 = vmatprep.subr.bf16.mxu0 0
    %1408 = vmatpush1.bf16.msra.mxu0 0
    %1409 = vmatprep.subr.bf16.mxu0 0
    %1410 = vmatpush1.bf16.msra.mxu0 0
    %1411 = vmatprep.subr.bf16.mxu0 0
    %1412 = vmatpush1.bf16.msra.mxu0 0
    %1413 = vmatprep.subr.bf16.mxu0 0
    %1414 = vmatpush1.bf16.msra.mxu0 0
    %1415 = vmatprep.subr.bf16.mxu0 0
    %1416 = vmatpush1.bf16.msra.mxu0 0
    %1417 = vmatprep.subr.bf16.mxu0 0
    %1418 = vmatpush1.bf16.msra.mxu0 0
    %1419 = vmatprep.subr.bf16.mxu0 0
    %1420 = vmatpush1.bf16.msra.mxu0 0
    %1421 = vmatprep.subr.bf16.mxu0 0
    %1422 = vmatpush1.bf16.msra.mxu0 0
    %1423 = vmatprep.subr.bf16.mxu0 0
    %1424 = vmatpush1.bf16.msra.mxu0 0
    %1425 = vmatprep.subr.bf16.mxu0 0
    %1426 = vmatpush1.bf16.msra.mxu0 0
    %1427 = vmatprep.subr.bf16.mxu0 0
    %1428 = vmatpush1.bf16.msra.mxu0 0
    %1429 = vmatprep.mubr.bf16.mxu0 0
    %1430 = vmatmul.mubr.bf16.gmra.mrb[0].mxu0 %v1395
    %v1431 = vpop.f32.mrb[0].mxu0
    %v1432 = vadd.f32 0.0, %v1431
    %v1433 = vpop.f32.mrb[0].mxu0
    %v1434 = vpop.f32.mrb[0].mxu0
    %v1435 = vadd.f32 0.0, %v1434
    %v1436 = vpop.f32.mrb[0].mxu0
    %1437 = vdwg.mxu0
    %v1438 = vadd.f32 %v1272, %v1359
    %v1439 = vadd.f32 %v1275, %v1362
    %v1440 = vadd.f32 %v1438, %v1432
    %v1441 = vadd.f32 %v1439, %v1435
    %v1442 = vrot.slane %v737, 6
    %v1443 = vrot.slane %v1204, 6
    %vm1444 = vcmp.lt.s32.totalorder %v1217, 2
    %v1445 = vsel %vm1444, %v1442, %v1443
    %v1446 = vsel %vm1444, %v1443, %v1442
    %vm1447 = vcmp.ge.s32.totalorder %v1217, 2
    %v1448 = vsel %vm1447, 1, 0
    %1449 = vset.pattern.permute.xlu0 0
    %1450 = vperm.xlu0 %1449, %v1448
    %v1451 = vpop.permute.xlu0 %1450
    %vm1452 = vcmp.eq.s32.totalorder %v1451, 1
    %v1453 = vsel %vm1452, %v1446, 0.0
    %v1454 = vsel %vm1452, %v1445, 0.0
    %v1455 = vpack.c.bf16 %v1454, %v1453
    %v1456 = vld [vmem:[#allocation11] sm:$0xf]
    %v1457 = vld [vmem:[#allocation11 + $0x4] sm:$0xf]
    %v1458 = vld [vmem:[#allocation11 + $0x8] sm:$0xf]
    %v1459 = vld [vmem:[#allocation11 + $0xc] sm:$0xf]
    %v1464 = vunpack.c.l.b16 %v1456
    %v1465 = vunpack.c.l.b16 %v1457
    %v1466 = vunpack.c.l.b16 %v1458
    %v1467 = vunpack.c.l.b16 %v1459
    %v1468 = vpack.c.b16 %v1465, %v1464
    %v1469 = vpack.c.b16 %v1467, %v1466
    %v1473 = vsel %vm230, %v1455, 0
    %1475 = vmatprep.subr.bf16.mxu0 0
    %1476 = vmatpush1.bf16.msra.mxu0 %v1468
    %1477 = vmatprep.subr.bf16.mxu0 0
    %1478 = vmatpush1.bf16.msra.mxu0 %v1469
    %1479 = vmatprep.subr.bf16.mxu0 0
    %1480 = vmatpush1.bf16.msra.mxu0 0
    %1481 = vmatprep.subr.bf16.mxu0 0
    %1482 = vmatpush1.bf16.msra.mxu0 0
    %1483 = vmatprep.subr.bf16.mxu0 0
    %1484 = vmatpush1.bf16.msra.mxu0 0
    %1485 = vmatprep.subr.bf16.mxu0 0
    %1486 = vmatpush1.bf16.msra.mxu0 0
    %1487 = vmatprep.subr.bf16.mxu0 0
    %1488 = vmatpush1.bf16.msra.mxu0 0
    %1489 = vmatprep.subr.bf16.mxu0 0
    %1490 = vmatpush1.bf16.msra.mxu0 0
    %1491 = vmatprep.subr.bf16.mxu0 0
    %1492 = vmatpush1.bf16.msra.mxu0 0
    %1493 = vmatprep.subr.bf16.mxu0 0
    %1494 = vmatpush1.bf16.msra.mxu0 0
    %1495 = vmatprep.subr.bf16.mxu0 0
    %1496 = vmatpush1.bf16.msra.mxu0 0
    %1497 = vmatprep.subr.bf16.mxu0 0
    %1498 = vmatpush1.bf16.msra.mxu0 0
    %1499 = vmatprep.subr.bf16.mxu0 0
    %1500 = vmatpush1.bf16.msra.mxu0 0
    %1501 = vmatprep.subr.bf16.mxu0 0
    %1502 = vmatpush1.bf16.msra.mxu0 0
    %1503 = vmatprep.subr.bf16.mxu0 0
    %1504 = vmatpush1.bf16.msra.mxu0 0
    %1505 = vmatprep.subr.bf16.mxu0 0
    %1506 = vmatpush1.bf16.msra.mxu0 0
    %1507 = vmatprep.mubr.bf16.mxu0 0
    %1508 = vmatmul.mubr.bf16.gmra.mrb[0].mxu0 %v1473
    %v1509 = vpop.f32.mrb[0].mxu0
    %v1510 = vadd.f32 0.0, %v1509
    %v1511 = vpop.f32.mrb[0].mxu0
    %v1512 = vpop.f32.mrb[0].mxu0
    %v1513 = vadd.f32 0.0, %v1512
    %v1514 = vpop.f32.mrb[0].mxu0
    %1515 = vdwg.mxu0
    %1518 = vrot.lane.b32.xlu0 %v1510, 32
    %v1519 = vpop.permute.xlu0 %1518
    %1520 = vrot.lane.b32.xlu0 %v1513, 32
    %v1521 = vpop.permute.xlu0 %1520
    %v1524 = vadd.f32 %v1440, %v1519
    %v1525 = vadd.f32 %v1441, %v1521
    %v1526 = vrot.slane %v737, 2
    %v1527 = vrot.slane %v1204, 2
    %vm1528 = vcmp.lt.s32.totalorder %v1217, 6
    %v1529 = vsel %vm1528, %v1526, %v1527
    %v1530 = vsel %vm1528, %v1527, %v1526
    %v1531 = vsel %vm1528, 1, 0
    %1532 = vset.pattern.permute.xlu0 0
    %1533 = vperm.xlu0 %1532, %v1531
    %v1534 = vpop.permute.xlu0 %1533
    %vm1535 = vcmp.eq.s32.totalorder %v1534, 1
    %v1536 = vsel %vm1535, %v1529, 0.0
    %v1537 = vsel %vm1535, %v1530, 0.0
    %v1538 = vpack.c.bf16 %v1537, %v1536
    %v1539 = vld [vmem:[%s13] sm:$0xf]
    %v1540 = vld [vmem:[%s13 + $0x4] sm:$0xf]
    %v1541 = vld [vmem:[%s13 + $0x8] sm:$0xf]
    %v1542 = vld [vmem:[%s13 + $0xc] sm:$0xf]
    %v1547 = vunpack.c.l.b16 %v1539
    %v1548 = vunpack.c.l.b16 %v1540
    %v1549 = vunpack.c.l.b16 %v1541
    %v1550 = vunpack.c.l.b16 %v1542
    %v1551 = vpack.c.b16 %v1548, %v1547
    %v1552 = vpack.c.b16 %v1550, %v1549
    %v1556 = vsel %vm230, %v1538, 0
    %1558 = vmatprep.subr.bf16.mxu0 0
    %1559 = vmatpush1.bf16.msra.mxu0 %v1551
    %1560 = vmatprep.subr.bf16.mxu0 0
    %1561 = vmatpush1.bf16.msra.mxu0 %v1552
    %1562 = vmatprep.subr.bf16.mxu0 0
    %1563 = vmatpush1.bf16.msra.mxu0 0
    %1564 = vmatprep.subr.bf16.mxu0 0
    %1565 = vmatpush1.bf16.msra.mxu0 0
    %1566 = vmatprep.subr.bf16.mxu0 0
    %1567 = vmatpush1.bf16.msra.mxu0 0
    %1568 = vmatprep.subr.bf16.mxu0 0
    %1569 = vmatpush1.bf16.msra.mxu0 0
    %1570 = vmatprep.subr.bf16.mxu0 0
    %1571 = vmatpush1.bf16.msra.mxu0 0
    %1572 = vmatprep.subr.bf16.mxu0 0
    %1573 = vmatpush1.bf16.msra.mxu0 0
    %1574 = vmatprep.subr.bf16.mxu0 0
    %1575 = vmatpush1.bf16.msra.mxu0 0
    %1576 = vmatprep.subr.bf16.mxu0 0
    %1577 = vmatpush1.bf16.msra.mxu0 0
    %1578 = vmatprep.subr.bf16.mxu0 0
    %1579 = vmatpush1.bf16.msra.mxu0 0
    %1580 = vmatprep.subr.bf16.mxu0 0
    %1581 = vmatpush1.bf16.msra.mxu0 0
    %1582 = vmatprep.subr.bf16.mxu0 0
    %1583 = vmatpush1.bf16.msra.mxu0 0
    %1584 = vmatprep.subr.bf16.mxu0 0
    %1585 = vmatpush1.bf16.msra.mxu0 0
    %1586 = vmatprep.subr.bf16.mxu0 0
    %1587 = vmatpush1.bf16.msra.mxu0 0
    %1588 = vmatprep.subr.bf16.mxu0 0
    %1589 = vmatpush1.bf16.msra.mxu0 0
    %1590 = vmatprep.mubr.bf16.mxu0 0
    %1591 = vmatmul.mubr.bf16.gmra.mrb[0].mxu0 %v1556
    %v1592 = vpop.f32.mrb[0].mxu0
    %v1593 = vadd.f32 0.0, %v1592
    %v1594 = vpop.f32.mrb[0].mxu0
    %v1595 = vpop.f32.mrb[0].mxu0
    %v1596 = vadd.f32 0.0, %v1595
    %v1597 = vpop.f32.mrb[0].mxu0
    %1598 = vdwg.mxu0
    %1601 = vrot.lane.b32.xlu0 %v1593, 32
    %v1602 = vpop.permute.xlu0 %1601
    %1603 = vrot.lane.b32.xlu0 %v1596, 32
    %v1604 = vpop.permute.xlu0 %1603
    %v1607 = vadd.f32 %v1524, %v1602
    %v1608 = vadd.f32 %v1525, %v1604
    %v1609 = vld [vmem:[#allocation14] sm:$0x1]
    %v1611 = vlaneseq
    %v1612 = vshrl.u32 %v1611, 7
    %v1613 = vsub.s32 0, %v1612
    %v1614 = vrot.slane %v1609, %v1613
    %v1616 = vadd.f32 %v1440, %v1614
    %v1617 = vadd.f32 %v1441, %v1614
    %v1618 = vmax.f32 %v1616, 0.0
    %v1619 = vmax.f32 %v1617, 0.0
    %v1620 = vld [vmem:[#allocation15] sm:$0x1]
    %v1622 = vlaneseq
    %v1623 = vshrl.u32 %v1622, 7
    %v1624 = vsub.s32 0, %v1623
    %v1625 = vrot.slane %v1620, %v1624
    %1626 = vrot.lane.b32.xlu0 %v1625, 32
    %v1627 = vpop.permute.xlu0 %1626
    %v1629 = vadd.f32 %v1607, %v1627
    %v1630 = vadd.f32 %v1608, %v1627
    %v1631 = vmax.f32 %v1629, 0.0
    %v1632 = vmax.f32 %v1630, 0.0
    %v1633 = vpack.c.bf16 %v1619, %v1618
    %v1634 = vld [vmem:[%s17] sm:$0xf]
    %v1635 = vld [vmem:[%s17 + $0x4] sm:$0xf]
    %v1636 = vld [vmem:[%s17 + $0x8] sm:$0xf]
    %v1637 = vld [vmem:[%s17 + $0xc] sm:$0xf]
    %v1638 = vpack.c.bf16 %v1632, %v1631
    %v1639 = vld [vmem:[#allocation17] sm:$0xf]
    %v1640 = vld [vmem:[#allocation17 + $0x4] sm:$0xf]
    %v1641 = vld [vmem:[#allocation17 + $0x8] sm:$0xf]
    %v1642 = vld [vmem:[#allocation17 + $0xc] sm:$0xf]
    %1644 = vrot.lane.b32.xlu0 %v1638, 96
    %v1645 = vpop.permute.xlu0 %1644
    %v1650 = vunpack.c.l.b16 %v1639
    %v1651 = vunpack.c.l.b16 %v1640
    %v1652 = vunpack.c.l.b16 %v1641
    %v1653 = vunpack.c.l.b16 %v1642
    %v1654 = vpack.c.b16 %v1651, %v1650
    %v1655 = vpack.c.b16 %v1653, %v1652
    %v1659 = vsel %vm230, %v1645, 0
    %1661 = vmatprep.subr.bf16.mxu0 0
    %1662 = vmatpush1.bf16.msra.mxu0 %v1654
    %1663 = vmatprep.subr.bf16.mxu0 0
    %1664 = vmatpush1.bf16.msra.mxu0 %v1655
    %1665 = vmatprep.subr.bf16.mxu0 0
    %1666 = vmatpush1.bf16.msra.mxu0 0
    %1667 = vmatprep.subr.bf16.mxu0 0
    %1668 = vmatpush1.bf16.msra.mxu0 0
    %1669 = vmatprep.subr.bf16.mxu0 0
    %1670 = vmatpush1.bf16.msra.mxu0 0
    %1671 = vmatprep.subr.bf16.mxu0 0
    %1672 = vmatpush1.bf16.msra.mxu0 0
    %1673 = vmatprep.subr.bf16.mxu0 0
    %1674 = vmatpush1.bf16.msra.mxu0 0
    %1675 = vmatprep.subr.bf16.mxu0 0
    %1676 = vmatpush1.bf16.msra.mxu0 0
    %1677 = vmatprep.subr.bf16.mxu0 0
    %1678 = vmatpush1.bf16.msra.mxu0 0
    %1679 = vmatprep.subr.bf16.mxu0 0
    %1680 = vmatpush1.bf16.msra.mxu0 0
    %1681 = vmatprep.subr.bf16.mxu0 0
    %1682 = vmatpush1.bf16.msra.mxu0 0
    %1683 = vmatprep.subr.bf16.mxu0 0
    %1684 = vmatpush1.bf16.msra.mxu0 0
    %1685 = vmatprep.subr.bf16.mxu0 0
    %1686 = vmatpush1.bf16.msra.mxu0 0
    %1687 = vmatprep.subr.bf16.mxu0 0
    %1688 = vmatpush1.bf16.msra.mxu0 0
    %1689 = vmatprep.subr.bf16.mxu0 0
    %1690 = vmatpush1.bf16.msra.mxu0 0
    %1691 = vmatprep.subr.bf16.mxu0 0
    %1692 = vmatpush1.bf16.msra.mxu0 0
    %1693 = vmatprep.mubr.bf16.mxu0 0
    %1694 = vmatmul.mubr.bf16.gmra.mrb[0].mxu0 %v1659
    %v1695 = vpop.f32.mrb[0].mxu0
    %v1696 = vadd.f32 0.0, %v1695
    %v1697 = vpop.f32.mrb[0].mxu0
    %v1698 = vpop.f32.mrb[0].mxu0
    %v1699 = vadd.f32 0.0, %v1698
    %v1700 = vpop.f32.mrb[0].mxu0
    %1701 = vdwg.mxu0
    %v1706 = vunpack.c.l.b16 %v1634
    %v1707 = vunpack.c.l.b16 %v1635
    %v1708 = vunpack.c.l.b16 %v1636
    %v1709 = vunpack.c.l.b16 %v1637
    %v1710 = vpack.c.b16 %v1707, %v1706
    %v1711 = vpack.c.b16 %v1709, %v1708
    %v1715 = vsel %vm230, %v1633, 0
    %1717 = vmatprep.subr.bf16.mxu0 0
    %1718 = vmatpush1.bf16.msra.mxu0 %v1710
    %1719 = vmatprep.subr.bf16.mxu0 0
    %1720 = vmatpush1.bf16.msra.mxu0 %v1711
    %1721 = vmatprep.subr.bf16.mxu0 0
    %1722 = vmatpush1.bf16.msra.mxu0 0
    %1723 = vmatprep.subr.bf16.mxu0 0
    %1724 = vmatpush1.bf16.msra.mxu0 0
    %1725 = vmatprep.subr.bf16.mxu0 0
    %1726 = vmatpush1.bf16.msra.mxu0 0
    %1727 = vmatprep.subr.bf16.mxu0 0
    %1728 = vmatpush1.bf16.msra.mxu0 0
    %1729 = vmatprep.subr.bf16.mxu0 0
    %1730 = vmatpush1.bf16.msra.mxu0 0
    %1731 = vmatprep.subr.bf16.mxu0 0
    %1732 = vmatpush1.bf16.msra.mxu0 0
    %1733 = vmatprep.subr.bf16.mxu0 0
    %1734 = vmatpush1.bf16.msra.mxu0 0
    %1735 = vmatprep.subr.bf16.mxu0 0
    %1736 = vmatpush1.bf16.msra.mxu0 0
    %1737 = vmatprep.subr.bf16.mxu0 0
    %1738 = vmatpush1.bf16.msra.mxu0 0
    %1739 = vmatprep.subr.bf16.mxu0 0
    %1740 = vmatpush1.bf16.msra.mxu0 0
    %1741 = vmatprep.subr.bf16.mxu0 0
    %1742 = vmatpush1.bf16.msra.mxu0 0
    %1743 = vmatprep.subr.bf16.mxu0 0
    %1744 = vmatpush1.bf16.msra.mxu0 0
    %1745 = vmatprep.subr.bf16.mxu0 0
    %1746 = vmatpush1.bf16.msra.mxu0 0
    %1747 = vmatprep.subr.bf16.mxu0 0
    %1748 = vmatpush1.bf16.msra.mxu0 0
    %1749 = vmatprep.mubr.bf16.mxu0 0
    %1750 = vmatmul.mubr.bf16.gmra.mrb[0].mxu0 %v1715
    %v1751 = vpop.f32.mrb[0].mxu0
    %v1752 = vadd.f32 %v1696, %v1751
    %v1753 = vpop.f32.mrb[0].mxu0
    %v1754 = vpop.f32.mrb[0].mxu0
    %v1755 = vadd.f32 %v1699, %v1754
    %v1756 = vpop.f32.mrb[0].mxu0
    %1757 = vdwg.mxu0
    %v1758 = vpack.c.bf16 %v1290, %v1289
    %v1759 = vld [vmem:[#allocation18] sm:$0xf]
    %v1760 = vld [vmem:[#allocation18 + $0x4] sm:$0xf]
    %v1761 = vld [vmem:[#allocation18 + $0x8] sm:$0xf]
    %v1762 = vld [vmem:[#allocation18 + $0xc] sm:$0xf]
    %1764 = vrot.lane.b32.xlu0 %v1758, 64
    %v1765 = vpop.permute.xlu0 %1764
    %v1770 = vunpack.c.l.b16 %v1759
    %v1771 = vunpack.c.l.b16 %v1760
    %v1772 = vunpack.c.l.b16 %v1761
    %v1773 = vunpack.c.l.b16 %v1762
    %v1774 = vpack.c.b16 %v1771, %v1770
    %v1775 = vpack.c.b16 %v1773, %v1772
    %v1779 = vsel %vm230, %v1765, 0
    %1781 = vmatprep.subr.bf16.mxu0 0
    %1782 = vmatpush1.bf16.msra.mxu0 %v1774
    %1783 = vmatprep.subr.bf16.mxu0 0
    %1784 = vmatpush1.bf16.msra.mxu0 %v1775
    %1785 = vmatprep.subr.bf16.mxu0 0
    %1786 = vmatpush1.bf16.msra.mxu0 0
    %1787 = vmatprep.subr.bf16.mxu0 0
    %1788 = vmatpush1.bf16.msra.mxu0 0
    %1789 = vmatprep.subr.bf16.mxu0 0
    %1790 = vmatpush1.bf16.msra.mxu0 0
    %1791 = vmatprep.subr.bf16.mxu0 0
    %1792 = vmatpush1.bf16.msra.mxu0 0
    %1793 = vmatprep.subr.bf16.mxu0 0
    %1794 = vmatpush1.bf16.msra.mxu0 0
    %1795 = vmatprep.subr.bf16.mxu0 0
    %1796 = vmatpush1.bf16.msra.mxu0 0
    %1797 = vmatprep.subr.bf16.mxu0 0
    %1798 = vmatpush1.bf16.msra.mxu0 0
    %1799 = vmatprep.subr.bf16.mxu0 0
    %1800 = vmatpush1.bf16.msra.mxu0 0
    %1801 = vmatprep.subr.bf16.mxu0 0
    %1802 = vmatpush1.bf16.msra.mxu0 0
    %1803 = vmatprep.subr.bf16.mxu0 0
    %1804 = vmatpush1.bf16.msra.mxu0 0
    %1805 = vmatprep.subr.bf16.mxu0 0
    %1806 = vmatpush1.bf16.msra.mxu0 0
    %1807 = vmatprep.subr.bf16.mxu0 0
    %1808 = vmatpush1.bf16.msra.mxu0 0
    %1809 = vmatprep.subr.bf16.mxu0 0
    %1810 = vmatpush1.bf16.msra.mxu0 0
    %1811 = vmatprep.subr.bf16.mxu0 0
    %1812 = vmatpush1.bf16.msra.mxu0 0
    %1813 = vmatprep.mubr.bf16.mxu0 0
    %1814 = vmatmul.mubr.bf16.gmra.mrb[0].mxu0 %v1779
    %v1815 = vpop.f32.mrb[0].mxu0
    %v1816 = vadd.f32 0.0, %v1815
    %v1817 = vpop.f32.mrb[0].mxu0
    %v1818 = vpop.f32.mrb[0].mxu0
    %v1819 = vadd.f32 0.0, %v1818
    %v1820 = vpop.f32.mrb[0].mxu0
    %1821 = vdwg.mxu0
    %v1822 = vadd.f32 %v1752, %v1816
    %v1823 = vadd.f32 %v1755, %v1819
    %v1824 = vld [vmem:[%s20] sm:$0x1]
    %v1826 = vlaneseq
    %v1827 = vshrl.u32 %v1826, 7
    %v1828 = vsub.s32 0, %v1827
    %v1829 = vrot.slane %v1824, %v1828
    %v1831 = vadd.f32 %v1822, %v1829
    %v1832 = vadd.f32 %v1823, %v1829
    %v1833 = vmax.f32 %v1831, 0.0
    %v1834 = vmax.f32 %v1832, 0.0
    %v1835 = vpack.c.bf16 %v1214, %v1214
    %v1836 = vld [vmem:[%s5] sm:$0xf]
    %v1837 = vld [vmem:[%s5 + $0x4] sm:$0xf]
    %v1838 = vld [vmem:[%s5 + $0x8] sm:$0xf]
    %v1839 = vld [vmem:[%s5 + $0xc] sm:$0xf]
    %v1840 = vld [vmem:[#allocation6] sm:$0x1]
    %v1842 = vlaneseq
    %v1843 = vshrl.u32 %v1842, 7
    %v1844 = vsub.s32 0, %v1843
    %v1845 = vrot.slane %v1840, %v1844
    %v1851 = vunpack.c.l.b16 %v1836
    %v1852 = vunpack.c.l.b16 %v1837
    %v1853 = vunpack.c.l.b16 %v1838
    %v1854 = vunpack.c.l.b16 %v1839
    %v1855 = vpack.c.b16 %v1852, %v1851
    %v1856 = vpack.c.b16 %v1854, %v1853
    %v1860 = vsel %vm230, %v1835, 0
    %1862 = vmatprep.subr.bf16.mxu0 0
    %1863 = vmatpush1.bf16.msra.mxu0 %v1855
    %1864 = vmatprep.subr.bf16.mxu0 0
    %1865 = vmatpush1.bf16.msra.mxu0 %v1856
    %1866 = vmatprep.subr.bf16.mxu0 0
    %1867 = vmatpush1.bf16.msra.mxu0 0
    %1868 = vmatprep.subr.bf16.mxu0 0
    %1869 = vmatpush1.bf16.msra.mxu0 0
    %1870 = vmatprep.subr.bf16.mxu0 0
    %1871 = vmatpush1.bf16.msra.mxu0 0
    %1872 = vmatprep.subr.bf16.mxu0 0
    %1873 = vmatpush1.bf16.msra.mxu0 0
    %1874 = vmatprep.subr.bf16.mxu0 0
    %1875 = vmatpush1.bf16.msra.mxu0 0
    %1876 = vmatprep.subr.bf16.mxu0 0
    %1877 = vmatpush1.bf16.msra.mxu0 0
    %1878 = vmatprep.subr.bf16.mxu0 0
    %1879 = vmatpush1.bf16.msra.mxu0 0
    %1880 = vmatprep.subr.bf16.mxu0 0
    %1881 = vmatpush1.bf16.msra.mxu0 0
    %1882 = vmatprep.subr.bf16.mxu0 0
    %1883 = vmatpush1.bf16.msra.mxu0 0
    %1884 = vmatprep.subr.bf16.mxu0 0
    %1885 = vmatpush1.bf16.msra.mxu0 0
    %1886 = vmatprep.subr.bf16.mxu0 0
    %1887 = vmatpush1.bf16.msra.mxu0 0
    %1888 = vmatprep.subr.bf16.mxu0 0
    %1889 = vmatpush1.bf16.msra.mxu0 0
    %1890 = vmatprep.subr.bf16.mxu0 0
    %1891 = vmatpush1.bf16.msra.mxu0 0
    %1892 = vmatprep.subr.bf16.mxu0 0
    %1893 = vmatpush1.bf16.msra.mxu0 0
    %1894 = vmatprep.mubr.bf16.mxu0 0
    %1895 = vmatmul.mubr.bf16.gmra.mrb[0].mxu0 %v1860
    %v1896 = vpop.f32.mrb[0].mxu0
    %v1897 = vadd.f32 %v1845, %v1896
    %v1898 = vpop.f32.mrb[0].mxu0
    %v1899 = vpop.f32.mrb[0].mxu0
    %v1900 = vpop.f32.mrb[0].mxu0
    %1901 = vdwg.mxu0
    %v1902 = vmax.f32 %v1897, 0.0
    %v1903 = vpack.c.bf16 %v1902, %v1902
    %v1904 = vld [vmem:[%s7] sm:$0xf]
    %v1905 = vld [vmem:[%s7 + $0x4] sm:$0xf]
    %v1906 = vld [vmem:[#allocation2] sm:$0x1]
    %v1908 = vlaneseq
    %v1909 = vshrl.u32 %v1908, 7
    %v1910 = vsub.s32 0, %v1909
    %v1911 = vrot.slane %v1906, %v1910
    %v1915 = vunpack.c.l.b16 %v1904
    %v1916 = vunpack.c.l.b16 %v1905
    %v1917 = vpack.c.b16 %v1916, %v1915
    %v1920 = vsel %vm734, %v1903, 0
    %1922 = vmatprep.subr.bf16.mxu0 0
    %1923 = vmatpush1.bf16.msra.mxu0 %v1917
    %1924 = vmatprep.subr.bf16.mxu0 0
    %1925 = vmatpush1.bf16.msra.mxu0 0
    %1926 = vmatprep.subr.bf16.mxu0 0
    %1927 = vmatpush1.bf16.msra.mxu0 0
    %1928 = vmatprep.subr.bf16.mxu0 0
    %1929 = vmatpush1.bf16.msra.mxu0 0
    %1930 = vmatprep.subr.bf16.mxu0 0
    %1931 = vmatpush1.bf16.msra.mxu0 0
    %1932 = vmatprep.subr.bf16.mxu0 0
    %1933 = vmatpush1.bf16.msra.mxu0 0
    %1934 = vmatprep.subr.bf16.mxu0 0
    %1935 = vmatpush1.bf16.msra.mxu0 0
    %1936 = vmatprep.subr.bf16.mxu0 0
    %1937 = vmatpush1.bf16.msra.mxu0 0
    %1938 = vmatprep.subr.bf16.mxu0 0
    %1939 = vmatpush1.bf16.msra.mxu0 0
    %1940 = vmatprep.subr.bf16.mxu0 0
    %1941 = vmatpush1.bf16.msra.mxu0 0
    %1942 = vmatprep.subr.bf16.mxu0 0
    %1943 = vmatpush1.bf16.msra.mxu0 0
    %1944 = vmatprep.subr.bf16.mxu0 0
    %1945 = vmatpush1.bf16.msra.mxu0 0
    %1946 = vmatprep.subr.bf16.mxu0 0
    %1947 = vmatpush1.bf16.msra.mxu0 0
    %1948 = vmatprep.subr.bf16.mxu0 0
    %1949 = vmatpush1.bf16.msra.mxu0 0
    %1950 = vmatprep.subr.bf16.mxu0 0
    %1951 = vmatpush1.bf16.msra.mxu0 0
    %1952 = vmatprep.subr.bf16.mxu0 0
    %1953 = vmatpush1.bf16.msra.mxu0 0
    %1954 = vmatprep.mubr.bf16.mxu0 0
    %1955 = vmatmul.mubr.bf16.gmra.mrb[0].mxu0 %v1920
    %v1956 = vpop.f32.mrb[0].mxu0
    %v1957 = vadd.f32 %v1911, %v1956
    %v1958 = vpop.f32.mrb[0].mxu0
    %v1959 = vpop.f32.mrb[0].mxu0
    %v1960 = vpop.f32.mrb[0].mxu0
    %1961 = vdwg.mxu0
    %v1962 = vxor.u32 %v1957, 2147483648
    %v1963 = vmul.f32 %v1962, 1.442695
    %v1964 = vpow.pop %v1963
    %v1965 = vadd.f32 %v1964, 1.0
    %v1966 = vrcp.pop %v1965
    %v1967 = vmul.f32 1.0, %v1966
    %v1968 = vlaneseq
    %v1969 = vshrl.u32 %v1968, 7
    %v1970 = vsub.s32 0, %v1969
    %v1971 = vrot.slane %v1967, %v1970
    %v1972 = vlaneseq
    %v1973 = vshrl.u32 %v1972, 7
    %v1974 = vsub.s32 1, %v1973
    %v1975 = vrot.slane %v1967, %v1974
    %1977 = vset.pattern.permute.xlu0 0
    %1978 = vperm.xlu0 %1977, %v1971
    %v1979 = vpop.permute.xlu0 %1978
    %1982 = vset.pattern.permute.xlu0 0
    %1983 = vperm.xlu0 %1982, %v1975
    %v1984 = vpop.permute.xlu0 %1983
    %v1986 = vmul.f32 %v1979, %v1833
    %v1987 = vmul.f32 %v1984, %v1834
    %v1988 = vsub.f32 1.0, %v1971
    %v1989 = vsub.f32 1.0, %v1975
    %1991 = vset.pattern.permute.xlu0 0
    %1992 = vperm.xlu0 %1991, %v1988
    %v1993 = vpop.permute.xlu0 %1992
    %1996 = vset.pattern.permute.xlu0 0
    %1997 = vperm.xlu0 %1996, %v1989
    %v1998 = vpop.permute.xlu0 %1997
    %v2000 = vmul.f32 %v1993, %v737
    %v2001 = vmul.f32 %v1998, %v1204
    %v2002 = vadd.f32 %v1986, %v2000
    %v2003 = vadd.f32 %v1987, %v2001
    %v2004 = vpack.c.bf16 %v2003, %v2002
    %v2005 = vld [vmem:[%s3] sm:$0xf]
    %v2006 = vld [vmem:[%s3 + $0x4] sm:$0xf]
    %v2007 = vld [vmem:[%s3 + $0x8] sm:$0xf]
    %v2008 = vld [vmem:[%s3 + $0xc] sm:$0xf]
    %v2009 = vld [vmem:[%s4] sm:$0x1]
    %v2011 = vlaneseq
    %v2012 = vshrl.u32 %v2011, 7
    %v2013 = vsub.s32 0, %v2012
    %v2014 = vrot.slane %v2009, %v2013
    %v2020 = vunpack.c.l.b16 %v2005
    %v2021 = vunpack.c.l.b16 %v2006
    %v2022 = vunpack.c.l.b16 %v2007
    %v2023 = vunpack.c.l.b16 %v2008
    %v2024 = vpack.c.b16 %v2021, %v2020
    %v2025 = vpack.c.b16 %v2023, %v2022
    %v2029 = vsel %vm230, %v2004, 0
    %2031 = vmatprep.subr.bf16.mxu0 0
    %2032 = vmatpush1.bf16.msra.mxu0 %v2024
    %2033 = vmatprep.subr.bf16.mxu0 0
    %2034 = vmatpush1.bf16.msra.mxu0 %v2025
    %2035 = vmatprep.subr.bf16.mxu0 0
    %2036 = vmatpush1.bf16.msra.mxu0 0
    %2037 = vmatprep.subr.bf16.mxu0 0
    %2038 = vmatpush1.bf16.msra.mxu0 0
    %2039 = vmatprep.subr.bf16.mxu0 0
    %2040 = vmatpush1.bf16.msra.mxu0 0
    %2041 = vmatprep.subr.bf16.mxu0 0
    %2042 = vmatpush1.bf16.msra.mxu0 0
    %2043 = vmatprep.subr.bf16.mxu0 0
    %2044 = vmatpush1.bf16.msra.mxu0 0
    %2045 = vmatprep.subr.bf16.mxu0 0
    %2046 = vmatpush1.bf16.msra.mxu0 0
    %2047 = vmatprep.subr.bf16.mxu0 0
    %2048 = vmatpush1.bf16.msra.mxu0 0
    %2049 = vmatprep.subr.bf16.mxu0 0
    %2050 = vmatpush1.bf16.msra.mxu0 0
    %2051 = vmatprep.subr.bf16.mxu0 0
    %2052 = vmatpush1.bf16.msra.mxu0 0
    %2053 = vmatprep.subr.bf16.mxu0 0
    %2054 = vmatpush1.bf16.msra.mxu0 0
    %2055 = vmatprep.subr.bf16.mxu0 0
    %2056 = vmatpush1.bf16.msra.mxu0 0
    %2057 = vmatprep.subr.bf16.mxu0 0
    %2058 = vmatpush1.bf16.msra.mxu0 0
    %2059 = vmatprep.subr.bf16.mxu0 0
    %2060 = vmatpush1.bf16.msra.mxu0 0
    %2061 = vmatprep.subr.bf16.mxu0 0
    %2062 = vmatpush1.bf16.msra.mxu0 0
    %2063 = vmatprep.mubr.bf16.mxu0 0
    %2064 = vmatmul.mubr.bf16.gmra.mrb[0].mxu0 %v2029
    %v2065 = vpop.f32.mrb[0].mxu0
    %v2066 = vadd.f32 %v2014, %v2065
    %v2067 = vpop.f32.mrb[0].mxu0
    %v2068 = vpop.f32.mrb[0].mxu0
    %v2069 = vadd.f32 %v2014, %v2068
    %v2070 = vpop.f32.mrb[0].mxu0
    %2071 = vdwg.mxu0
    %v2072 = vadd.f32 %v204, %v2066
    %v2073 = vadd.f32 %v205, %v2069
    %v2074 = vsel %vm230, %v2072, 0.0
    %2075 = vadd.xlane.f32.xlu0 %v2074
    %v2076 = vpop.xlane.xlu0 %2075
    %v2077 = vsel %vm230, %v2073, 0.0
    %2078 = vadd.xlane.f32.xlu0 %v2077
    %v2079 = vpop.xlane.xlu0 %2078
    %v2080 = vrcp.pop 32.0
    %v2081 = vmul.f32 %v2076, %v2080
    %v2082 = vmul.f32 %v2079, %v2080
    %v2083 = vsub.f32 %v2072, %v2081
    %v2084 = vsub.f32 %v2073, %v2082
    %v2085 = vmul.f32 %v2083, %v2083
    %v2086 = vmul.f32 %v2084, %v2084
    %v2087 = vsel %vm230, %v2085, 0.0
    %2088 = vadd.xlane.f32.xlu0 %v2087
    %v2089 = vpop.xlane.xlu0 %2088
    %v2090 = vsel %vm230, %v2086, 0.0
    %2091 = vadd.xlane.f32.xlu0 %v2090
    %v2092 = vpop.xlane.xlu0 %2091
    %v2093 = vmul.f32 %v2089, %v2080
    %v2094 = vmul.f32 %v2092, %v2080
    %v2095 = vadd.f32 %v2093, 1e-05
    %v2096 = vadd.f32 %v2094, 1e-05
    %v2097 = vrsqrt.pop %v2095
    %v2098 = vrsqrt.pop %v2096
    %v2099 = vmul.f32 %v2083, %v2097
    %v2100 = vmul.f32 %v2084, %v2098
    %v2101 = vld [vmem:[%s21] sm:$0x1]
    %v2103 = vlaneseq
    %v2104 = vshrl.u32 %v2103, 7
    %v2105 = vsub.s32 0, %v2104
    %v2106 = vrot.slane %v2101, %v2105
    %v2108 = vmul.f32 %v2099, %v2106
    %v2109 = vmul.f32 %v2100, %v2106
    %v2110 = vld [vmem:[%s22] sm:$0x1]
    %v2112 = vlaneseq
    %v2113 = vshrl.u32 %v2112, 7
    %v2114 = vsub.s32 0, %v2113
    %v2115 = vrot.slane %v2110, %v2114
    %v2117 = vadd.f32 %v2108, %v2115
    %v2118 = vadd.f32 %v2109, %v2115
    %v2119 = vadd.f32 %v2117, %v204
    %v2120 = vadd.f32 %v2118, %v205
    %2121 = vst.msk [vmem:[#allocation20] sm:$0xff] %vm230, %v2119
    %2122 = vst.msk [vmem:[#allocation20 + $0x8] sm:$0xff] %vm230, %v2120
    // Predicated region
    $region134: #{tpu_custom_call.1} parent=1 // pred_check
      _
    $region135: #{tpu_custom_call.1} parent=1 // pred_check_branch
      %2124 = sbr.rel (0) target = $region137
    $region136: #{tpu_custom_call.1} parent=1 // pred_region
      %s2126 = ssub.s32 256, 256
      %2127 = vsyncadd [#allocation5], %s2126
      %s2128 = sshll.u32 [#allocation20], 4
      %s2129 = int_to_ptr.vmem [resolvable:$true] %s2128
      %2134 = dma.vmem_to_hbm [thread:$0]  %s2129, 256, %s23, [#allocation5], 128, 128, 8
    $region137: #{tpu_custom_call.1} parent=1 // pred_fallthru
      _
    // Predicated region
    $region138: #{tpu_custom_call.1} parent=1 // pred_check
      _
    $region139: #{tpu_custom_call.1} parent=1 // pred_check_branch
      %2136 = sbr.rel (0) target = $region141
    $region140: #{tpu_custom_call.1} parent=1 // pred_region
      %2137 = dma.done [#allocation5], 256
    $region141: #{tpu_custom_call.1} parent=1 // pred_fallthru
      _
    %2138 = vsyncpa [#allocation4], 1
    %2139 = vsyncpa [#allocation7], 1
    %2140 = vsyncpa [#allocation10], 1
    %2141 = vsyncpa [#allocation13], 1
    %2142 = vsyncpa [#allocation16], 1
    %2143 = vsyncpa [#allocation19], 1
    %2144 = vsyncpa [#allocation5], 1

</llo_original>
